<compile_context>
chip_gen: v7x
topology: tpu7x:2x2x1
jax: 0.10.0
libtpu: 0.0.40
codegen_flags: <defaults>
</compile_context>

<pallas_src>
import functools

import jax
import jax.numpy as jnp
from jax import lax
from jax.experimental import pallas as pl
from jax.experimental.pallas import tpu as pltpu


def _middle_block_kernel(dw_ref, pw_ref, scale_ref, bias_ref, x_ref, o_ref,
                         act_ref, pad_ref, *, reps, dilation):
    """Fused MiddleBlock. grid = (batch, num_blocks); one ExceptionBlock per step.

    dw_ref    : (1, reps*9, C)  f32   depthwise 3x3 weights, row = r*9 + ki*3 + kj
    pw_ref    : (1, reps, C, C) bf16  pointwise (1x1) weights, applied as x @ W
    scale_ref : (1, reps, C)    f32   folded BN scale
    bias_ref  : (1, reps, C)    f32   folded BN bias
    x_ref     : (1, H, W, C)          chain input  (read only at block 0)
    o_ref     : (1, H, W, C)          chain output (written only at the last block)
    act_ref   : VMEM scratch (1, H, W, C) f32            resident activation
    pad_ref   : VMEM scratch (1, H+2d, W+2d, C) f32      zero-padded depthwise buffer
    """
    blk = pl.program_id(1)
    _, H, W, C = act_ref.shape
    d = dilation

    @pl.when(blk == 0)
    def _init():
        # Load this batch element's activation into the resident VMEM buffer and
        # zero the padded depthwise scratch ONCE per batch element (amortized over
        # all 16 blocks x 3 reps).  Only the interior is rewritten each rep, so the
        # d-wide halo stays zero == PyTorch zero padding of size `dilation`.
        act_ref[...] = x_ref[...].astype(jnp.float32)
        pad_ref[...] = jnp.zeros_like(pad_ref)

    dw = dw_ref[0]        # (reps*9, C)
    scale = scale_ref[0]  # (reps, C)
    bias = bias_ref[0]    # (reps, C)

    x = act_ref[...]      # (1, H, W, C) f32
    residual = x

    for r in range(reps):
        # ReLU (VPU).
        x = jnp.maximum(x, 0.0)

        # Depthwise 3x3 conv, dilation d, zero padding d, stride 1: write the
        # interior of the padded scratch, then accumulate the 9 shifted taps,
        # slicing the scratch ref directly (no full materialized copy).
        pad_ref[:, d:d + H, d:d + W, :] = x
        acc = pad_ref[:, 0:H, 0:W, :] * dw[r * 9].reshape(1, 1, 1, C)
        for ki in range(3):
            for kj in range(3):
                if ki == 0 and kj == 0:
                    continue
                w = dw[r * 9 + ki * 3 + kj].reshape(1, 1, 1, C)
                acc = acc + pad_ref[:, ki * d:ki * d + H, kj * d:kj * d + W, :] * w

        # Pointwise 1x1 conv == channel matmul on the MXU.
        # bf16 operands (weights already bf16 in HBM), f32 accumulation.
        y = jnp.dot(acc.reshape(H * W, C).astype(jnp.bfloat16),
                    pw_ref[0, r],
                    preferred_element_type=jnp.float32)

        # Folded eval-mode BatchNorm (per-channel affine).
        y = y * scale[r][None, :] + bias[r][None, :]
        x = y.reshape(1, H, W, C)

    # Identity residual; keep the result resident in VMEM for the next block.
    act_ref[...] = x + residual

    @pl.when(blk == pl.num_programs(1) - 1)
    def _finalize():
        o_ref[...] = act_ref[...].astype(o_ref.dtype)


def _vmem_limit_bytes(H, W, C, d, reps):
    f32 = 4
    act = H * W * C * f32
    pad = (H + 2 * d) * (W + 2 * d) * C * f32
    io = 4 * H * W * C * f32                         # in/out blocks (double-buffered)
    wts = 2 * (reps * 9 * C * f32 + reps * C * C * 2 + 2 * reps * C * f32)
    tmp = 6 * act                                    # live temporaries headroom
    est = act + pad + io + wts + tmp
    # Above v5e's 16 MiB default scoped limit, at or below v7x's 64 MiB physical VMEM.
    return int(min(64 * 1024 * 1024, max(32 * 1024 * 1024, 2 * est)))


def middle_block(x_nchw, params, *, dilation):
    """MiddleBlock forward: 16 ExceptionBlocks fused into one kernel. NCHW in/out."""
    dw, pw, scale, bias = params["dw"], params["pw"], params["scale"], params["bias"]
    num_blocks, r9, C = dw.shape
    reps = r9 // 9

    x = jnp.transpose(x_nchw, (0, 2, 3, 1))          # NCHW -> NHWC
    B, H, W, _ = x.shape

    # Pad channels to a multiple of 128 so every vreg row / MXU tile is full
    # (728 -> 768 at the real size).  Padded channels stay exactly zero through the
    # whole chain (dw/pw/bias padded with 0), so the math is unchanged.
    Cp = ((C + 127) // 128) * 128
    if Cp != C:
        pc = Cp - C
        x = jnp.pad(x, ((0, 0), (0, 0), (0, 0), (0, pc)))
        dw = jnp.pad(dw, ((0, 0), (0, 0), (0, pc)))
        pw = jnp.pad(pw, ((0, 0), (0, 0), (0, pc), (0, pc)))
        scale = jnp.pad(scale, ((0, 0), (0, 0), (0, pc)), constant_values=1.0)
        bias = jnp.pad(bias, ((0, 0), (0, 0), (0, pc)))

    # bf16 pointwise weights: half the HBM/VMEM weight traffic, MXU-native operands.
    pw = pw.astype(jnp.bfloat16)

    # TODO(synk): for real shapes with W not a multiple of 8 (e.g. 33x33), add
    # spatial row-tiling with a halo instead of relying on a free reshape collapse.

    kernel = functools.partial(_middle_block_kernel, reps=reps, dilation=dilation)

    flops = num_blocks * reps * B * H * W * Cp * (2 * Cp + 2 * 9)
    bytes_accessed = (2 * B * H * W * Cp * x.dtype.itemsize
                      + dw.size * 4 + pw.size * 2 + scale.size * 4 + bias.size * 4)

    out = pl.pallas_call(
        kernel,
        out_shape=jax.ShapeDtypeStruct((B, H, W, Cp), x.dtype),
        grid=(B, num_blocks),
        in_specs=[
            pl.BlockSpec((1, reps * 9, Cp), lambda b, k: (k, 0, 0)),
            pl.BlockSpec((1, reps, Cp, Cp), lambda b, k: (k, 0, 0, 0)),
            pl.BlockSpec((1, reps, Cp), lambda b, k: (k, 0, 0)),
            pl.BlockSpec((1, reps, Cp), lambda b, k: (k, 0, 0)),
            pl.BlockSpec((1, H, W, Cp), lambda b, k: (b, 0, 0, 0)),
        ],
        out_specs=pl.BlockSpec((1, H, W, Cp), lambda b, k: (b, 0, 0, 0)),
        scratch_shapes=[
            pltpu.VMEM((1, H, W, Cp), jnp.float32),
            pltpu.VMEM((1, H + 2 * dilation, W + 2 * dilation, Cp), jnp.float32),
        ],
        compiler_params=pltpu.CompilerParams(
            dimension_semantics=("parallel", "arbitrary"),
            vmem_limit_bytes=_vmem_limit_bytes(H, W, Cp, dilation, reps)),
        cost_estimate=pl.CostEstimate(flops=flops, transcendentals=0,
                                      bytes_accessed=bytes_accessed),
    )(dw, pw, scale, bias, x)

    if Cp != C:
        out = out[..., :C]
    return jnp.transpose(out, (0, 3, 1, 2))          # NHWC -> NCHW


# ---------------------------------------------------------------------------
# Deterministic parameter init (synthetic weights; no checkpoint loading).
# ---------------------------------------------------------------------------
def init_params(key, num_blocks, reps, channels):
    k1, k2, k3, k4, k5, k6 = jax.random.split(key, 6)
    dw = 0.1 * jax.random.normal(k1, (num_blocks, reps * 9, channels), jnp.float32)
    pw = (0.3 / jnp.sqrt(channels)) * jax.random.normal(
        k2, (num_blocks, reps, channels, channels), jnp.float32)
    gamma = 1.0 + 0.1 * jax.random.normal(k3, (num_blocks, reps, channels), jnp.float32)
    beta = 0.1 * jax.random.normal(k4, (num_blocks, reps, channels), jnp.float32)
    mean = 0.1 * jax.random.normal(k5, (num_blocks, reps, channels), jnp.float32)
    var = jax.random.uniform(k6, (num_blocks, reps, channels), jnp.float32, 0.5, 1.5)
    scale = gamma / jnp.sqrt(var + 1e-5)
    bias = beta - mean * scale
    return dict(dw=dw, pw=pw, scale=scale, bias=bias)


# ---------------------------------------------------------------------------
# Pure-JAX reference for validation.
# ---------------------------------------------------------------------------
def _block_ref(x, dw, pw, scale, bias, dilation, matmul_dtype):
    reps = scale.shape[0]
    C = x.shape[-1]
    res = x
    for r in range(reps):
        x = jnp.maximum(x, 0.0)
        dwk = dw[r * 9:(r + 1) * 9].reshape(3, 3, 1, C)   # HWIO, groups=C
        x = lax.conv_general_dilated(
            x, dwk, window_strides=(1, 1),
            padding=[(dilation, dilation), (dilation, dilation)],
            rhs_dilation=(dilation, dilation),
            dimension_numbers=("NHWC", "HWIO", "NHWC"),
            feature_group_count=C,
            precision=lax.Precision.HIGHEST)
        x = jnp.einsum("bhwc,cd->bhwd",
                       x.astype(matmul_dtype), pw[r].astype(matmul_dtype),
                       preferred_element_type=jnp.float32)
        x = x * scale[r] + bias[r]
    return x + res


def middle_block_ref(x_nchw, params, dilation, matmul_dtype=jnp.float32):
    x = jnp.transpose(x_nchw, (0, 2, 3, 1))
    for b in range(params["dw"].shape[0]):
        x = _block_ref(x, params["dw"][b], params["pw"][b],
                       params["scale"][b], params["bias"][b],
                       dilation, matmul_dtype)
    return jnp.transpose(x, (0, 3, 1, 2))


if __name__ == "__main__":
    # Real module: C=728, 16 blocks, repeat=3.  Demo uses a small, lane-aligned
    # size so the test runs quickly; the kernel itself is shape-generic.
    B, C, H, W = 2, 128, 16, 16
    dilation = 1
    num_blocks, reps = 16, 3

    key = jax.random.PRNGKey(0)
    kx, kp = jax.random.split(key)
    x = jax.random.normal(kx, (B, C, H, W), jnp.float32)   # NCHW, like PyTorch
    params = init_params(kp, num_blocks, reps, C)

    fwd = jax.jit(functools.partial(middle_block, dilation=dilation))
    out = fwd(x, params)
    jax.block_until_ready(out)

    assert out.shape == x.shape and out.dtype == x.dtype

    # Tight check against a reference matching the kernel's bf16-operand /
    # f32-accumulate matmul semantics.
    ref_bf16 = middle_block_ref(x, params, dilation, matmul_dtype=jnp.bfloat16)
    err = float(jnp.max(jnp.abs(out - ref_bf16)))
    assert err < 5e-3, f"max abs error vs bf16-matmul reference: {err}"

    # Looser sanity check against the full-f32 reference (bounds the bf16
    # quantization of the 48 pointwise matmuls over the whole chain).
    ref_f32 = middle_block_ref(x, params, dilation, matmul_dtype=jnp.float32)
    err_f32 = float(jnp.max(jnp.abs(out - ref_f32)))
    assert err_f32 < 5e-2, f"max abs error vs f32 reference: {err_f32}"

    print("KERNEL_OK")
</pallas_src>

<mosaic_0001>
module attributes {stable_mosaic.version = 11 : i64} {
  func.func @_middle_block_kernel(%arg0: i32, %arg1: i32, %arg2: memref<1x27x128xf32, #tpu.memory_space<vmem>>, %arg3: memref<1x3x128x128xbf16, #tpu.memory_space<vmem>>, %arg4: memref<1x3x128xf32, #tpu.memory_space<vmem>>, %arg5: memref<1x3x128xf32, #tpu.memory_space<vmem>>, %arg6: memref<1x16x16x128xf32, #tpu.memory_space<vmem>>, %arg7: memref<1x16x16x128xf32, #tpu.memory_space<vmem>>, %arg8: memref<1x16x16x128xf32, #tpu.memory_space<vmem>>, %arg9: memref<1x18x18x128xf32, #tpu.memory_space<vmem>>) attributes {dimension_semantics = [#tpu.dimension_semantics<parallel>, #tpu.dimension_semantics<arbitrary>], iteration_bounds = array<i64: 2, 16>, scalar_prefetch = 0 : i64, scratch_operands = 2 : i64, tpu.core_type = #tpu.core_type<tc>, window_params = [{transform_indices = @transform_0, window_bounds = array<i64: 1, 27, 128>}, {transform_indices = @transform_1, window_bounds = array<i64: 1, 3, 128, 128>}, {transform_indices = @transform_2, window_bounds = array<i64: 1, 3, 128>}, {transform_indices = @transform_3, window_bounds = array<i64: 1, 3, 128>}, {transform_indices = @transform_4, window_bounds = array<i64: 1, 16, 16, 128>}, {transform_indices = @transform_5, window_bounds = array<i64: 1, 16, 16, 128>}]} {
    %c0_i32 = arith.constant 0 : i32
    %0 = arith.cmpi eq, %arg1, %c0_i32 : i32
    %1 = arith.extui %0 : i1 to i32
    %c0_i32_0 = arith.constant 0 : i32
    %2 = arith.cmpi ne, %1, %c0_i32_0 : i32
    scf.if %2 {
      %c0_153 = arith.constant 0 : index
      %c0_154 = arith.constant 0 : index
      %c0_155 = arith.constant 0 : index
      %c0_156 = arith.constant 0 : index
      %258 = vector.load %arg6[%c0_153, %c0_154, %c0_155, %c0_156] : memref<1x16x16x128xf32, #tpu.memory_space<vmem>>, vector<1x16x16x128xf32>
      %c0_157 = arith.constant 0 : index
      %c0_158 = arith.constant 0 : index
      %c0_159 = arith.constant 0 : index
      %c0_160 = arith.constant 0 : index
      %259 = vector.load %arg8[%c0_157, %c0_158, %c0_159, %c0_160] : memref<1x16x16x128xf32, #tpu.memory_space<vmem>>, vector<1x16x16x128xf32>
      tpu.vector_store %arg8[%c0_157, %c0_158, %c0_159, %c0_160], %258 {strides = array<i32>} : memref<1x16x16x128xf32, #tpu.memory_space<vmem>>, vector<1x16x16x128xf32>,
      %cst_161 = arith.constant 0.000000e+00 : f32
      %260 = vector.broadcast %cst_161 : f32 to vector<1x18x18x128xf32>
      %c0_162 = arith.constant 0 : index
      %c0_163 = arith.constant 0 : index
      %c0_164 = arith.constant 0 : index
      %c0_165 = arith.constant 0 : index
      %261 = vector.load %arg9[%c0_162, %c0_163, %c0_164, %c0_165] : memref<1x18x18x128xf32, #tpu.memory_space<vmem>>, vector<1x18x18x128xf32>
      tpu.vector_store %arg9[%c0_162, %c0_163, %c0_164, %c0_165], %260 {strides = array<i32>} : memref<1x18x18x128xf32, #tpu.memory_space<vmem>>, vector<1x18x18x128xf32>,
    } else {
    }
    %c0 = arith.constant 0 : index
    %c0_1 = arith.constant 0 : index
    %c0_2 = arith.constant 0 : index
    %3 = vector.load %arg2[%c0, %c0_1, %c0_2] : memref<1x27x128xf32, #tpu.memory_space<vmem>>, vector<1x27x128xf32>
    %4 = vector.shape_cast %3 : vector<1x27x128xf32> to vector<27x128xf32>
    %c0_3 = arith.constant 0 : index
    %c0_4 = arith.constant 0 : index
    %c0_5 = arith.constant 0 : index
    %5 = vector.load %arg4[%c0_3, %c0_4, %c0_5] : memref<1x3x128xf32, #tpu.memory_space<vmem>>, vector<1x3x128xf32>
    %6 = vector.shape_cast %5 : vector<1x3x128xf32> to vector<3x128xf32>
    %c0_6 = arith.constant 0 : index
    %c0_7 = arith.constant 0 : index
    %c0_8 = arith.constant 0 : index
    %7 = vector.load %arg5[%c0_6, %c0_7, %c0_8] : memref<1x3x128xf32, #tpu.memory_space<vmem>>, vector<1x3x128xf32>
    %8 = vector.shape_cast %7 : vector<1x3x128xf32> to vector<3x128xf32>
    %c0_9 = arith.constant 0 : index
    %c0_10 = arith.constant 0 : index
    %c0_11 = arith.constant 0 : index
    %c0_12 = arith.constant 0 : index
    %9 = vector.load %arg8[%c0_9, %c0_10, %c0_11, %c0_12] : memref<1x16x16x128xf32, #tpu.memory_space<vmem>>, vector<1x16x16x128xf32>
    %cst = arith.constant 0.000000e+00 : f32
    %10 = vector.broadcast %cst : f32 to vector<1x16x16x128xf32>
    %11 = arith.maximumf %9, %10 : vector<1x16x16x128xf32>
    %c0_13 = arith.constant 0 : index
    %c1 = arith.constant 1 : index
    %c1_14 = arith.constant 1 : index
    %c0_15 = arith.constant 0 : index
    %12 = vector.load %arg9[%c0_13, %c1, %c1_14, %c0_15] : memref<1x18x18x128xf32, #tpu.memory_space<vmem>>, vector<1x16x16x128xf32>
    tpu.vector_store %arg9[%c0_13, %c1, %c1_14, %c0_15], %11 {strides = array<i32>} : memref<1x18x18x128xf32, #tpu.memory_space<vmem>>, vector<1x16x16x128xf32>,
    %c0_16 = arith.constant 0 : index
    %c0_17 = arith.constant 0 : index
    %c0_18 = arith.constant 0 : index
    %c0_19 = arith.constant 0 : index
    %13 = vector.load %arg9[%c0_16, %c0_17, %c0_18, %c0_19] : memref<1x18x18x128xf32, #tpu.memory_space<vmem>>, vector<1x16x16x128xf32>
    %14 = vector.extract_strided_slice %4 {offsets = [0, 0], sizes = [1, 128], strides = [1, 1]} : vector<27x128xf32> to vector<1x128xf32>
    %15 = vector.shape_cast %14 : vector<1x128xf32> to vector<128xf32>
    %16 = vector.shape_cast %15 : vector<128xf32> to vector<1x1x1x128xf32>
    %17 = vector.broadcast %16 : vector<1x1x1x128xf32> to vector<1x16x16x128xf32>
    %18 = arith.mulf %13, %17 : vector<1x16x16x128xf32>
    %19 = vector.extract_strided_slice %4 {offsets = [1, 0], sizes = [1, 128], strides = [1, 1]} : vector<27x128xf32> to vector<1x128xf32>
    %20 = vector.shape_cast %19 : vector<1x128xf32> to vector<128xf32>
    %21 = vector.shape_cast %20 : vector<128xf32> to vector<1x1x1x128xf32>
    %c0_20 = arith.constant 0 : index
    %c0_21 = arith.constant 0 : index
    %c1_22 = arith.constant 1 : index
    %c0_23 = arith.constant 0 : index
    %22 = vector.load %arg9[%c0_20, %c0_21, %c1_22, %c0_23] : memref<1x18x18x128xf32, #tpu.memory_space<vmem>>, vector<1x16x16x128xf32>
    %23 = vector.broadcast %21 : vector<1x1x1x128xf32> to vector<1x16x16x128xf32>
    %24 = arith.mulf %22, %23 : vector<1x16x16x128xf32>
    %25 = arith.addf %18, %24 : vector<1x16x16x128xf32>
    %26 = vector.extract_strided_slice %4 {offsets = [2, 0], sizes = [1, 128], strides = [1, 1]} : vector<27x128xf32> to vector<1x128xf32>
    %27 = vector.shape_cast %26 : vector<1x128xf32> to vector<128xf32>
    %28 = vector.shape_cast %27 : vector<128xf32> to vector<1x1x1x128xf32>
    %c0_24 = arith.constant 0 : index
    %c0_25 = arith.constant 0 : index
    %c2 = arith.constant 2 : index
    %c0_26 = arith.constant 0 : index
    %29 = vector.load %arg9[%c0_24, %c0_25, %c2, %c0_26] : memref<1x18x18x128xf32, #tpu.memory_space<vmem>>, vector<1x16x16x128xf32>
    %30 = vector.broadcast %28 : vector<1x1x1x128xf32> to vector<1x16x16x128xf32>
    %31 = arith.mulf %29, %30 : vector<1x16x16x128xf32>
    %32 = arith.addf %25, %31 : vector<1x16x16x128xf32>
    %33 = vector.extract_strided_slice %4 {offsets = [3, 0], sizes = [1, 128], strides = [1, 1]} : vector<27x128xf32> to vector<1x128xf32>
    %34 = vector.shape_cast %33 : vector<1x128xf32> to vector<128xf32>
    %35 = vector.shape_cast %34 : vector<128xf32> to vector<1x1x1x128xf32>
    %c0_27 = arith.constant 0 : index
    %c1_28 = arith.constant 1 : index
    %c0_29 = arith.constant 0 : index
    %c0_30 = arith.constant 0 : index
    %36 = vector.load %arg9[%c0_27, %c1_28, %c0_29, %c0_30] : memref<1x18x18x128xf32, #tpu.memory_space<vmem>>, vector<1x16x16x128xf32>
    %37 = vector.broadcast %35 : vector<1x1x1x128xf32> to vector<1x16x16x128xf32>
    %38 = arith.mulf %36, %37 : vector<1x16x16x128xf32>
    %39 = arith.addf %32, %38 : vector<1x16x16x128xf32>
    %40 = vector.extract_strided_slice %4 {offsets = [4, 0], sizes = [1, 128], strides = [1, 1]} : vector<27x128xf32> to vector<1x128xf32>
    %41 = vector.shape_cast %40 : vector<1x128xf32> to vector<128xf32>
    %42 = vector.shape_cast %41 : vector<128xf32> to vector<1x1x1x128xf32>
    %c0_31 = arith.constant 0 : index
    %c1_32 = arith.constant 1 : index
    %c1_33 = arith.constant 1 : index
    %c0_34 = arith.constant 0 : index
    %43 = vector.load %arg9[%c0_31, %c1_32, %c1_33, %c0_34] : memref<1x18x18x128xf32, #tpu.memory_space<vmem>>, vector<1x16x16x128xf32>
    %44 = vector.broadcast %42 : vector<1x1x1x128xf32> to vector<1x16x16x128xf32>
    %45 = arith.mulf %43, %44 : vector<1x16x16x128xf32>
    %46 = arith.addf %39, %45 : vector<1x16x16x128xf32>
    %47 = vector.extract_strided_slice %4 {offsets = [5, 0], sizes = [1, 128], strides = [1, 1]} : vector<27x128xf32> to vector<1x128xf32>
    %48 = vector.shape_cast %47 : vector<1x128xf32> to vector<128xf32>
    %49 = vector.shape_cast %48 : vector<128xf32> to vector<1x1x1x128xf32>
    %c0_35 = arith.constant 0 : index
    %c1_36 = arith.constant 1 : index
    %c2_37 = arith.constant 2 : index
    %c0_38 = arith.constant 0 : index
    %50 = vector.load %arg9[%c0_35, %c1_36, %c2_37, %c0_38] : memref<1x18x18x128xf32, #tpu.memory_space<vmem>>, vector<1x16x16x128xf32>
    %51 = vector.broadcast %49 : vector<1x1x1x128xf32> to vector<1x16x16x128xf32>
    %52 = arith.mulf %50, %51 : vector<1x16x16x128xf32>
    %53 = arith.addf %46, %52 : vector<1x16x16x128xf32>
    %54 = vector.extract_strided_slice %4 {offsets = [6, 0], sizes = [1, 128], strides = [1, 1]} : vector<27x128xf32> to vector<1x128xf32>
    %55 = vector.shape_cast %54 : vector<1x128xf32> to vector<128xf32>
    %56 = vector.shape_cast %55 : vector<128xf32> to vector<1x1x1x128xf32>
    %c0_39 = arith.constant 0 : index
    %c2_40 = arith.constant 2 : index
    %c0_41 = arith.constant 0 : index
    %c0_42 = arith.constant 0 : index
    %57 = vector.load %arg9[%c0_39, %c2_40, %c0_41, %c0_42] : memref<1x18x18x128xf32, #tpu.memory_space<vmem>>, vector<1x16x16x128xf32>
    %58 = vector.broadcast %56 : vector<1x1x1x128xf32> to vector<1x16x16x128xf32>
    %59 = arith.mulf %57, %58 : vector<1x16x16x128xf32>
    %60 = arith.addf %53, %59 : vector<1x16x16x128xf32>
    %61 = vector.extract_strided_slice %4 {offsets = [7, 0], sizes = [1, 128], strides = [1, 1]} : vector<27x128xf32> to vector<1x128xf32>
    %62 = vector.shape_cast %61 : vector<1x128xf32> to vector<128xf32>
    %63 = vector.shape_cast %62 : vector<128xf32> to vector<1x1x1x128xf32>
    %c0_43 = arith.constant 0 : index
    %c2_44 = arith.constant 2 : index
    %c1_45 = arith.constant 1 : index
    %c0_46 = arith.constant 0 : index
    %64 = vector.load %arg9[%c0_43, %c2_44, %c1_45, %c0_46] : memref<1x18x18x128xf32, #tpu.memory_space<vmem>>, vector<1x16x16x128xf32>
    %65 = vector.broadcast %63 : vector<1x1x1x128xf32> to vector<1x16x16x128xf32>
    %66 = arith.mulf %64, %65 : vector<1x16x16x128xf32>
    %67 = arith.addf %60, %66 : vector<1x16x16x128xf32>
    %68 = vector.extract_strided_slice %4 {offsets = [8, 0], sizes = [1, 128], strides = [1, 1]} : vector<27x128xf32> to vector<1x128xf32>
    %69 = vector.shape_cast %68 : vector<1x128xf32> to vector<128xf32>
    %70 = vector.shape_cast %69 : vector<128xf32> to vector<1x1x1x128xf32>
    %c0_47 = arith.constant 0 : index
    %c2_48 = arith.constant 2 : index
    %c2_49 = arith.constant 2 : index
    %c0_50 = arith.constant 0 : index
    %71 = vector.load %arg9[%c0_47, %c2_48, %c2_49, %c0_50] : memref<1x18x18x128xf32, #tpu.memory_space<vmem>>, vector<1x16x16x128xf32>
    %72 = vector.broadcast %70 : vector<1x1x1x128xf32> to vector<1x16x16x128xf32>
    %73 = arith.mulf %71, %72 : vector<1x16x16x128xf32>
    %74 = arith.addf %67, %73 : vector<1x16x16x128xf32>
    %75 = vector.shape_cast %74 : vector<1x16x16x128xf32> to vector<256x128xf32>
    %76 = arith.truncf %75 : vector<256x128xf32> to vector<256x128xbf16>
    %c0_51 = arith.constant 0 : index
    %c0_52 = arith.constant 0 : index
    %c0_53 = arith.constant 0 : index
    %c0_54 = arith.constant 0 : index
    %77 = vector.load %arg3[%c0_51, %c0_52, %c0_53, %c0_54] : memref<1x3x128x128xbf16, #tpu.memory_space<vmem>>, vector<1x1x128x128xbf16>
    %78 = vector.shape_cast %77 : vector<1x1x128x128xbf16> to vector<128x128xbf16>
    %cst_55 = arith.constant dense<0.000000e+00> : vector<256x128xf32>
    %79 = tpu.matmul %76, %78, %cst_55 {dimension_numbers = #tpu.dot_dimension_numbers<[1], [0], [0], [1], [0, 0, 1, 1], [], []>} : vector<256x128xbf16>, vector<128x128xbf16>, vector<256x128xf32> -> vector<256x128xf32>
    %80 = vector.extract_strided_slice %6 {offsets = [0, 0], sizes = [1, 128], strides = [1, 1]} : vector<3x128xf32> to vector<1x128xf32>
    %81 = vector.shape_cast %80 : vector<1x128xf32> to vector<128xf32>
    %82 = vector.shape_cast %81 : vector<128xf32> to vector<1x128xf32>
    %83 = vector.broadcast %82 : vector<1x128xf32> to vector<256x128xf32>
    %84 = arith.mulf %79, %83 : vector<256x128xf32>
    %85 = vector.extract_strided_slice %8 {offsets = [0, 0], sizes = [1, 128], strides = [1, 1]} : vector<3x128xf32> to vector<1x128xf32>
    %86 = vector.shape_cast %85 : vector<1x128xf32> to vector<128xf32>
    %87 = vector.shape_cast %86 : vector<128xf32> to vector<1x128xf32>
    %88 = vector.broadcast %87 : vector<1x128xf32> to vector<256x128xf32>
    %89 = arith.addf %84, %88 : vector<256x128xf32>
    %90 = vector.shape_cast %89 : vector<256x128xf32> to vector<1x16x16x128xf32>
    %cst_56 = arith.constant 0.000000e+00 : f32
    %91 = vector.broadcast %cst_56 : f32 to vector<1x16x16x128xf32>
    %92 = arith.maximumf %90, %91 : vector<1x16x16x128xf32>
    %c0_57 = arith.constant 0 : index
    %c1_58 = arith.constant 1 : index
    %c1_59 = arith.constant 1 : index
    %c0_60 = arith.constant 0 : index
    %93 = vector.load %arg9[%c0_57, %c1_58, %c1_59, %c0_60] : memref<1x18x18x128xf32, #tpu.memory_space<vmem>>, vector<1x16x16x128xf32>
    tpu.vector_store %arg9[%c0_57, %c1_58, %c1_59, %c0_60], %92 {strides = array<i32>} : memref<1x18x18x128xf32, #tpu.memory_space<vmem>>, vector<1x16x16x128xf32>,
    %c0_61 = arith.constant 0 : index
    %c0_62 = arith.constant 0 : index
    %c0_63 = arith.constant 0 : index
    %c0_64 = arith.constant 0 : index
    %94 = vector.load %arg9[%c0_61, %c0_62, %c0_63, %c0_64] : memref<1x18x18x128xf32, #tpu.memory_space<vmem>>, vector<1x16x16x128xf32>
    %95 = vector.extract_strided_slice %4 {offsets = [9, 0], sizes = [1, 128], strides = [1, 1]} : vector<27x128xf32> to vector<1x128xf32>
    %96 = vector.shape_cast %95 : vector<1x128xf32> to vector<128xf32>
    %97 = vector.shape_cast %96 : vector<128xf32> to vector<1x1x1x128xf32>
    %98 = vector.broadcast %97 : vector<1x1x1x128xf32> to vector<1x16x16x128xf32>
    %99 = arith.mulf %94, %98 : vector<1x16x16x128xf32>
    %100 = vector.extract_strided_slice %4 {offsets = [10, 0], sizes = [1, 128], strides = [1, 1]} : vector<27x128xf32> to vector<1x128xf32>
    %101 = vector.shape_cast %100 : vector<1x128xf32> to vector<128xf32>
    %102 = vector.shape_cast %101 : vector<128xf32> to vector<1x1x1x128xf32>
    %c0_65 = arith.constant 0 : index
    %c0_66 = arith.constant 0 : index
    %c1_67 = arith.constant 1 : index
    %c0_68 = arith.constant 0 : index
    %103 = vector.load %arg9[%c0_65, %c0_66, %c1_67, %c0_68] : memref<1x18x18x128xf32, #tpu.memory_space<vmem>>, vector<1x16x16x128xf32>
    %104 = vector.broadcast %102 : vector<1x1x1x128xf32> to vector<1x16x16x128xf32>
    %105 = arith.mulf %103, %104 : vector<1x16x16x128xf32>
    %106 = arith.addf %99, %105 : vector<1x16x16x128xf32>
    %107 = vector.extract_strided_slice %4 {offsets = [11, 0], sizes = [1, 128], strides = [1, 1]} : vector<27x128xf32> to vector<1x128xf32>
    %108 = vector.shape_cast %107 : vector<1x128xf32> to vector<128xf32>
    %109 = vector.shape_cast %108 : vector<128xf32> to vector<1x1x1x128xf32>
    %c0_69 = arith.constant 0 : index
    %c0_70 = arith.constant 0 : index
    %c2_71 = arith.constant 2 : index
    %c0_72 = arith.constant 0 : index
    %110 = vector.load %arg9[%c0_69, %c0_70, %c2_71, %c0_72] : memref<1x18x18x128xf32, #tpu.memory_space<vmem>>, vector<1x16x16x128xf32>
    %111 = vector.broadcast %109 : vector<1x1x1x128xf32> to vector<1x16x16x128xf32>
    %112 = arith.mulf %110, %111 : vector<1x16x16x128xf32>
    %113 = arith.addf %106, %112 : vector<1x16x16x128xf32>
    %114 = vector.extract_strided_slice %4 {offsets = [12, 0], sizes = [1, 128], strides = [1, 1]} : vector<27x128xf32> to vector<1x128xf32>
    %115 = vector.shape_cast %114 : vector<1x128xf32> to vector<128xf32>
    %116 = vector.shape_cast %115 : vector<128xf32> to vector<1x1x1x128xf32>
    %c0_73 = arith.constant 0 : index
    %c1_74 = arith.constant 1 : index
    %c0_75 = arith.constant 0 : index
    %c0_76 = arith.constant 0 : index
    %117 = vector.load %arg9[%c0_73, %c1_74, %c0_75, %c0_76] : memref<1x18x18x128xf32, #tpu.memory_space<vmem>>, vector<1x16x16x128xf32>
    %118 = vector.broadcast %116 : vector<1x1x1x128xf32> to vector<1x16x16x128xf32>
    %119 = arith.mulf %117, %118 : vector<1x16x16x128xf32>
    %120 = arith.addf %113, %119 : vector<1x16x16x128xf32>
    %121 = vector.extract_strided_slice %4 {offsets = [13, 0], sizes = [1, 128], strides = [1, 1]} : vector<27x128xf32> to vector<1x128xf32>
    %122 = vector.shape_cast %121 : vector<1x128xf32> to vector<128xf32>
    %123 = vector.shape_cast %122 : vector<128xf32> to vector<1x1x1x128xf32>
    %c0_77 = arith.constant 0 : index
    %c1_78 = arith.constant 1 : index
    %c1_79 = arith.constant 1 : index
    %c0_80 = arith.constant 0 : index
    %124 = vector.load %arg9[%c0_77, %c1_78, %c1_79, %c0_80] : memref<1x18x18x128xf32, #tpu.memory_space<vmem>>, vector<1x16x16x128xf32>
    %125 = vector.broadcast %123 : vector<1x1x1x128xf32> to vector<1x16x16x128xf32>
    %126 = arith.mulf %124, %125 : vector<1x16x16x128xf32>
    %127 = arith.addf %120, %126 : vector<1x16x16x128xf32>
    %128 = vector.extract_strided_slice %4 {offsets = [14, 0], sizes = [1, 128], strides = [1, 1]} : vector<27x128xf32> to vector<1x128xf32>
    %129 = vector.shape_cast %128 : vector<1x128xf32> to vector<128xf32>
    %130 = vector.shape_cast %129 : vector<128xf32> to vector<1x1x1x128xf32>
    %c0_81 = arith.constant 0 : index
    %c1_82 = arith.constant 1 : index
    %c2_83 = arith.constant 2 : index
    %c0_84 = arith.constant 0 : index
    %131 = vector.load %arg9[%c0_81, %c1_82, %c2_83, %c0_84] : memref<1x18x18x128xf32, #tpu.memory_space<vmem>>, vector<1x16x16x128xf32>
    %132 = vector.broadcast %130 : vector<1x1x1x128xf32> to vector<1x16x16x128xf32>
    %133 = arith.mulf %131, %132 : vector<1x16x16x128xf32>
    %134 = arith.addf %127, %133 : vector<1x16x16x128xf32>
    %135 = vector.extract_strided_slice %4 {offsets = [15, 0], sizes = [1, 128], strides = [1, 1]} : vector<27x128xf32> to vector<1x128xf32>
    %136 = vector.shape_cast %135 : vector<1x128xf32> to vector<128xf32>
    %137 = vector.shape_cast %136 : vector<128xf32> to vector<1x1x1x128xf32>
    %c0_85 = arith.constant 0 : index
    %c2_86 = arith.constant 2 : index
    %c0_87 = arith.constant 0 : index
    %c0_88 = arith.constant 0 : index
    %138 = vector.load %arg9[%c0_85, %c2_86, %c0_87, %c0_88] : memref<1x18x18x128xf32, #tpu.memory_space<vmem>>, vector<1x16x16x128xf32>
    %139 = vector.broadcast %137 : vector<1x1x1x128xf32> to vector<1x16x16x128xf32>
    %140 = arith.mulf %138, %139 : vector<1x16x16x128xf32>
    %141 = arith.addf %134, %140 : vector<1x16x16x128xf32>
    %142 = vector.extract_strided_slice %4 {offsets = [16, 0], sizes = [1, 128], strides = [1, 1]} : vector<27x128xf32> to vector<1x128xf32>
    %143 = vector.shape_cast %142 : vector<1x128xf32> to vector<128xf32>
    %144 = vector.shape_cast %143 : vector<128xf32> to vector<1x1x1x128xf32>
    %c0_89 = arith.constant 0 : index
    %c2_90 = arith.constant 2 : index
    %c1_91 = arith.constant 1 : index
    %c0_92 = arith.constant 0 : index
    %145 = vector.load %arg9[%c0_89, %c2_90, %c1_91, %c0_92] : memref<1x18x18x128xf32, #tpu.memory_space<vmem>>, vector<1x16x16x128xf32>
    %146 = vector.broadcast %144 : vector<1x1x1x128xf32> to vector<1x16x16x128xf32>
    %147 = arith.mulf %145, %146 : vector<1x16x16x128xf32>
    %148 = arith.addf %141, %147 : vector<1x16x16x128xf32>
    %149 = vector.extract_strided_slice %4 {offsets = [17, 0], sizes = [1, 128], strides = [1, 1]} : vector<27x128xf32> to vector<1x128xf32>
    %150 = vector.shape_cast %149 : vector<1x128xf32> to vector<128xf32>
    %151 = vector.shape_cast %150 : vector<128xf32> to vector<1x1x1x128xf32>
    %c0_93 = arith.constant 0 : index
    %c2_94 = arith.constant 2 : index
    %c2_95 = arith.constant 2 : index
    %c0_96 = arith.constant 0 : index
    %152 = vector.load %arg9[%c0_93, %c2_94, %c2_95, %c0_96] : memref<1x18x18x128xf32, #tpu.memory_space<vmem>>, vector<1x16x16x128xf32>
    %153 = vector.broadcast %151 : vector<1x1x1x128xf32> to vector<1x16x16x128xf32>
    %154 = arith.mulf %152, %153 : vector<1x16x16x128xf32>
    %155 = arith.addf %148, %154 : vector<1x16x16x128xf32>
    %156 = vector.shape_cast %155 : vector<1x16x16x128xf32> to vector<256x128xf32>
    %157 = arith.truncf %156 : vector<256x128xf32> to vector<256x128xbf16>
    %c0_97 = arith.constant 0 : index
    %c1_98 = arith.constant 1 : index
    %c0_99 = arith.constant 0 : index
    %c0_100 = arith.constant 0 : index
    %158 = vector.load %arg3[%c0_97, %c1_98, %c0_99, %c0_100] : memref<1x3x128x128xbf16, #tpu.memory_space<vmem>>, vector<1x1x128x128xbf16>
    %159 = vector.shape_cast %158 : vector<1x1x128x128xbf16> to vector<128x128xbf16>
    %cst_101 = arith.constant dense<0.000000e+00> : vector<256x128xf32>
    %160 = tpu.matmul %157, %159, %cst_101 {dimension_numbers = #tpu.dot_dimension_numbers<[1], [0], [0], [1], [0, 0, 1, 1], [], []>} : vector<256x128xbf16>, vector<128x128xbf16>, vector<256x128xf32> -> vector<256x128xf32>
    %161 = vector.extract_strided_slice %6 {offsets = [1, 0], sizes = [1, 128], strides = [1, 1]} : vector<3x128xf32> to vector<1x128xf32>
    %162 = vector.shape_cast %161 : vector<1x128xf32> to vector<128xf32>
    %163 = vector.shape_cast %162 : vector<128xf32> to vector<1x128xf32>
    %164 = vector.broadcast %163 : vector<1x128xf32> to vector<256x128xf32>
    %165 = arith.mulf %160, %164 : vector<256x128xf32>
    %166 = vector.extract_strided_slice %8 {offsets = [1, 0], sizes = [1, 128], strides = [1, 1]} : vector<3x128xf32> to vector<1x128xf32>
    %167 = vector.shape_cast %166 : vector<1x128xf32> to vector<128xf32>
    %168 = vector.shape_cast %167 : vector<128xf32> to vector<1x128xf32>
    %169 = vector.broadcast %168 : vector<1x128xf32> to vector<256x128xf32>
    %170 = arith.addf %165, %169 : vector<256x128xf32>
    %171 = vector.shape_cast %170 : vector<256x128xf32> to vector<1x16x16x128xf32>
    %cst_102 = arith.constant 0.000000e+00 : f32
    %172 = vector.broadcast %cst_102 : f32 to vector<1x16x16x128xf32>
    %173 = arith.maximumf %171, %172 : vector<1x16x16x128xf32>
    %c0_103 = arith.constant 0 : index
    %c1_104 = arith.constant 1 : index
    %c1_105 = arith.constant 1 : index
    %c0_106 = arith.constant 0 : index
    %174 = vector.load %arg9[%c0_103, %c1_104, %c1_105, %c0_106] : memref<1x18x18x128xf32, #tpu.memory_space<vmem>>, vector<1x16x16x128xf32>
    tpu.vector_store %arg9[%c0_103, %c1_104, %c1_105, %c0_106], %173 {strides = array<i32>} : memref<1x18x18x128xf32, #tpu.memory_space<vmem>>, vector<1x16x16x128xf32>,
    %c0_107 = arith.constant 0 : index
    %c0_108 = arith.constant 0 : index
    %c0_109 = arith.constant 0 : index
    %c0_110 = arith.constant 0 : index
    %175 = vector.load %arg9[%c0_107, %c0_108, %c0_109, %c0_110] : memref<1x18x18x128xf32, #tpu.memory_space<vmem>>, vector<1x16x16x128xf32>
    %176 = vector.extract_strided_slice %4 {offsets = [18, 0], sizes = [1, 128], strides = [1, 1]} : vector<27x128xf32> to vector<1x128xf32>
    %177 = vector.shape_cast %176 : vector<1x128xf32> to vector<128xf32>
    %178 = vector.shape_cast %177 : vector<128xf32> to vector<1x1x1x128xf32>
    %179 = vector.broadcast %178 : vector<1x1x1x128xf32> to vector<1x16x16x128xf32>
    %180 = arith.mulf %175, %179 : vector<1x16x16x128xf32>
    %181 = vector.extract_strided_slice %4 {offsets = [19, 0], sizes = [1, 128], strides = [1, 1]} : vector<27x128xf32> to vector<1x128xf32>
    %182 = vector.shape_cast %181 : vector<1x128xf32> to vector<128xf32>
    %183 = vector.shape_cast %182 : vector<128xf32> to vector<1x1x1x128xf32>
    %c0_111 = arith.constant 0 : index
    %c0_112 = arith.constant 0 : index
    %c1_113 = arith.constant 1 : index
    %c0_114 = arith.constant 0 : index
    %184 = vector.load %arg9[%c0_111, %c0_112, %c1_113, %c0_114] : memref<1x18x18x128xf32, #tpu.memory_space<vmem>>, vector<1x16x16x128xf32>
    %185 = vector.broadcast %183 : vector<1x1x1x128xf32> to vector<1x16x16x128xf32>
    %186 = arith.mulf %184, %185 : vector<1x16x16x128xf32>
    %187 = arith.addf %180, %186 : vector<1x16x16x128xf32>
    %188 = vector.extract_strided_slice %4 {offsets = [20, 0], sizes = [1, 128], strides = [1, 1]} : vector<27x128xf32> to vector<1x128xf32>
    %189 = vector.shape_cast %188 : vector<1x128xf32> to vector<128xf32>
    %190 = vector.shape_cast %189 : vector<128xf32> to vector<1x1x1x128xf32>
    %c0_115 = arith.constant 0 : index
    %c0_116 = arith.constant 0 : index
    %c2_117 = arith.constant 2 : index
    %c0_118 = arith.constant 0 : index
    %191 = vector.load %arg9[%c0_115, %c0_116, %c2_117, %c0_118] : memref<1x18x18x128xf32, #tpu.memory_space<vmem>>, vector<1x16x16x128xf32>
    %192 = vector.broadcast %190 : vector<1x1x1x128xf32> to vector<1x16x16x128xf32>
    %193 = arith.mulf %191, %192 : vector<1x16x16x128xf32>
    %194 = arith.addf %187, %193 : vector<1x16x16x128xf32>
    %195 = vector.extract_strided_slice %4 {offsets = [21, 0], sizes = [1, 128], strides = [1, 1]} : vector<27x128xf32> to vector<1x128xf32>
    %196 = vector.shape_cast %195 : vector<1x128xf32> to vector<128xf32>
    %197 = vector.shape_cast %196 : vector<128xf32> to vector<1x1x1x128xf32>
    %c0_119 = arith.constant 0 : index
    %c1_120 = arith.constant 1 : index
    %c0_121 = arith.constant 0 : index
    %c0_122 = arith.constant 0 : index
    %198 = vector.load %arg9[%c0_119, %c1_120, %c0_121, %c0_122] : memref<1x18x18x128xf32, #tpu.memory_space<vmem>>, vector<1x16x16x128xf32>
    %199 = vector.broadcast %197 : vector<1x1x1x128xf32> to vector<1x16x16x128xf32>
    %200 = arith.mulf %198, %199 : vector<1x16x16x128xf32>
    %201 = arith.addf %194, %200 : vector<1x16x16x128xf32>
    %202 = vector.extract_strided_slice %4 {offsets = [22, 0], sizes = [1, 128], strides = [1, 1]} : vector<27x128xf32> to vector<1x128xf32>
    %203 = vector.shape_cast %202 : vector<1x128xf32> to vector<128xf32>
    %204 = vector.shape_cast %203 : vector<128xf32> to vector<1x1x1x128xf32>
    %c0_123 = arith.constant 0 : index
    %c1_124 = arith.constant 1 : index
    %c1_125 = arith.constant 1 : index
    %c0_126 = arith.constant 0 : index
    %205 = vector.load %arg9[%c0_123, %c1_124, %c1_125, %c0_126] : memref<1x18x18x128xf32, #tpu.memory_space<vmem>>, vector<1x16x16x128xf32>
    %206 = vector.broadcast %204 : vector<1x1x1x128xf32> to vector<1x16x16x128xf32>
    %207 = arith.mulf %205, %206 : vector<1x16x16x128xf32>
    %208 = arith.addf %201, %207 : vector<1x16x16x128xf32>
    %209 = vector.extract_strided_slice %4 {offsets = [23, 0], sizes = [1, 128], strides = [1, 1]} : vector<27x128xf32> to vector<1x128xf32>
    %210 = vector.shape_cast %209 : vector<1x128xf32> to vector<128xf32>
    %211 = vector.shape_cast %210 : vector<128xf32> to vector<1x1x1x128xf32>
    %c0_127 = arith.constant 0 : index
    %c1_128 = arith.constant 1 : index
    %c2_129 = arith.constant 2 : index
    %c0_130 = arith.constant 0 : index
    %212 = vector.load %arg9[%c0_127, %c1_128, %c2_129, %c0_130] : memref<1x18x18x128xf32, #tpu.memory_space<vmem>>, vector<1x16x16x128xf32>
    %213 = vector.broadcast %211 : vector<1x1x1x128xf32> to vector<1x16x16x128xf32>
    %214 = arith.mulf %212, %213 : vector<1x16x16x128xf32>
    %215 = arith.addf %208, %214 : vector<1x16x16x128xf32>
    %216 = vector.extract_strided_slice %4 {offsets = [24, 0], sizes = [1, 128], strides = [1, 1]} : vector<27x128xf32> to vector<1x128xf32>
    %217 = vector.shape_cast %216 : vector<1x128xf32> to vector<128xf32>
    %218 = vector.shape_cast %217 : vector<128xf32> to vector<1x1x1x128xf32>
    %c0_131 = arith.constant 0 : index
    %c2_132 = arith.constant 2 : index
    %c0_133 = arith.constant 0 : index
    %c0_134 = arith.constant 0 : index
    %219 = vector.load %arg9[%c0_131, %c2_132, %c0_133, %c0_134] : memref<1x18x18x128xf32, #tpu.memory_space<vmem>>, vector<1x16x16x128xf32>
    %220 = vector.broadcast %218 : vector<1x1x1x128xf32> to vector<1x16x16x128xf32>
    %221 = arith.mulf %219, %220 : vector<1x16x16x128xf32>
    %222 = arith.addf %215, %221 : vector<1x16x16x128xf32>
    %223 = vector.extract_strided_slice %4 {offsets = [25, 0], sizes = [1, 128], strides = [1, 1]} : vector<27x128xf32> to vector<1x128xf32>
    %224 = vector.shape_cast %223 : vector<1x128xf32> to vector<128xf32>
    %225 = vector.shape_cast %224 : vector<128xf32> to vector<1x1x1x128xf32>
    %c0_135 = arith.constant 0 : index
    %c2_136 = arith.constant 2 : index
    %c1_137 = arith.constant 1 : index
    %c0_138 = arith.constant 0 : index
    %226 = vector.load %arg9[%c0_135, %c2_136, %c1_137, %c0_138] : memref<1x18x18x128xf32, #tpu.memory_space<vmem>>, vector<1x16x16x128xf32>
    %227 = vector.broadcast %225 : vector<1x1x1x128xf32> to vector<1x16x16x128xf32>
    %228 = arith.mulf %226, %227 : vector<1x16x16x128xf32>
    %229 = arith.addf %222, %228 : vector<1x16x16x128xf32>
    %230 = vector.extract_strided_slice %4 {offsets = [26, 0], sizes = [1, 128], strides = [1, 1]} : vector<27x128xf32> to vector<1x128xf32>
    %231 = vector.shape_cast %230 : vector<1x128xf32> to vector<128xf32>
    %232 = vector.shape_cast %231 : vector<128xf32> to vector<1x1x1x128xf32>
    %c0_139 = arith.constant 0 : index
    %c2_140 = arith.constant 2 : index
    %c2_141 = arith.constant 2 : index
    %c0_142 = arith.constant 0 : index
    %233 = vector.load %arg9[%c0_139, %c2_140, %c2_141, %c0_142] : memref<1x18x18x128xf32, #tpu.memory_space<vmem>>, vector<1x16x16x128xf32>
    %234 = vector.broadcast %232 : vector<1x1x1x128xf32> to vector<1x16x16x128xf32>
    %235 = arith.mulf %233, %234 : vector<1x16x16x128xf32>
    %236 = arith.addf %229, %235 : vector<1x16x16x128xf32>
    %237 = vector.shape_cast %236 : vector<1x16x16x128xf32> to vector<256x128xf32>
    %238 = arith.truncf %237 : vector<256x128xf32> to vector<256x128xbf16>
    %c0_143 = arith.constant 0 : index
    %c2_144 = arith.constant 2 : index
    %c0_145 = arith.constant 0 : index
    %c0_146 = arith.constant 0 : index
    %239 = vector.load %arg3[%c0_143, %c2_144, %c0_145, %c0_146] : memref<1x3x128x128xbf16, #tpu.memory_space<vmem>>, vector<1x1x128x128xbf16>
    %240 = vector.shape_cast %239 : vector<1x1x128x128xbf16> to vector<128x128xbf16>
    %cst_147 = arith.constant dense<0.000000e+00> : vector<256x128xf32>
    %241 = tpu.matmul %238, %240, %cst_147 {dimension_numbers = #tpu.dot_dimension_numbers<[1], [0], [0], [1], [0, 0, 1, 1], [], []>} : vector<256x128xbf16>, vector<128x128xbf16>, vector<256x128xf32> -> vector<256x128xf32>
    %242 = vector.extract_strided_slice %6 {offsets = [2, 0], sizes = [1, 128], strides = [1, 1]} : vector<3x128xf32> to vector<1x128xf32>
    %243 = vector.shape_cast %242 : vector<1x128xf32> to vector<128xf32>
    %244 = vector.shape_cast %243 : vector<128xf32> to vector<1x128xf32>
    %245 = vector.broadcast %244 : vector<1x128xf32> to vector<256x128xf32>
    %246 = arith.mulf %241, %245 : vector<256x128xf32>
    %247 = vector.extract_strided_slice %8 {offsets = [2, 0], sizes = [1, 128], strides = [1, 1]} : vector<3x128xf32> to vector<1x128xf32>
    %248 = vector.shape_cast %247 : vector<1x128xf32> to vector<128xf32>
    %249 = vector.shape_cast %248 : vector<128xf32> to vector<1x128xf32>
    %250 = vector.broadcast %249 : vector<1x128xf32> to vector<256x128xf32>
    %251 = arith.addf %246, %250 : vector<256x128xf32>
    %252 = vector.shape_cast %251 : vector<256x128xf32> to vector<1x16x16x128xf32>
    %253 = arith.addf %252, %9 : vector<1x16x16x128xf32>
    %c0_148 = arith.constant 0 : index
    %c0_149 = arith.constant 0 : index
    %c0_150 = arith.constant 0 : index
    %c0_151 = arith.constant 0 : index
    %254 = vector.load %arg8[%c0_148, %c0_149, %c0_150, %c0_151] : memref<1x16x16x128xf32, #tpu.memory_space<vmem>>, vector<1x16x16x128xf32>
    tpu.vector_store %arg8[%c0_148, %c0_149, %c0_150, %c0_151], %253 {strides = array<i32>} : memref<1x16x16x128xf32, #tpu.memory_space<vmem>>, vector<1x16x16x128xf32>,
    %c15_i32 = arith.constant 15 : i32
    %255 = arith.cmpi eq, %arg1, %c15_i32 : i32
    %256 = arith.extui %255 : i1 to i32
    %c0_i32_152 = arith.constant 0 : i32
    %257 = arith.cmpi ne, %256, %c0_i32_152 : i32
    scf.if %257 {
      %c0_153 = arith.constant 0 : index
      %c0_154 = arith.constant 0 : index
      %c0_155 = arith.constant 0 : index
      %c0_156 = arith.constant 0 : index
      %258 = vector.load %arg8[%c0_153, %c0_154, %c0_155, %c0_156] : memref<1x16x16x128xf32, #tpu.memory_space<vmem>>, vector<1x16x16x128xf32>
      %c0_157 = arith.constant 0 : index
      %c0_158 = arith.constant 0 : index
      %c0_159 = arith.constant 0 : index
      %c0_160 = arith.constant 0 : index
      %259 = vector.load %arg7[%c0_157, %c0_158, %c0_159, %c0_160] : memref<1x16x16x128xf32, #tpu.memory_space<vmem>>, vector<1x16x16x128xf32>
      tpu.vector_store %arg7[%c0_157, %c0_158, %c0_159, %c0_160], %258 {strides = array<i32>} : memref<1x16x16x128xf32, #tpu.memory_space<vmem>>, vector<1x16x16x128xf32>,
    } else {
    }
    return
  }
  func.func @transform_0(%arg0: i32, %arg1: i32) -> (i32, i32, i32) {
    %c0_i32 = arith.constant 0 : i32
    %c0_i32_0 = arith.constant 0 : i32
    %c0_i32_1 = arith.constant 0 : i32
    return %arg1, %c0_i32, %c0_i32_0 : i32, i32, i32
  }
  func.func @transform_1(%arg0: i32, %arg1: i32) -> (i32, i32, i32, i32) {
    %c0_i32 = arith.constant 0 : i32
    %c0_i32_0 = arith.constant 0 : i32
    %c0_i32_1 = arith.constant 0 : i32
    %c0_i32_2 = arith.constant 0 : i32
    return %arg1, %c0_i32, %c0_i32_0, %c0_i32_1 : i32, i32, i32, i32
  }
  func.func @transform_2(%arg0: i32, %arg1: i32) -> (i32, i32, i32) {
    %c0_i32 = arith.constant 0 : i32
    %c0_i32_0 = arith.constant 0 : i32
    %c0_i32_1 = arith.constant 0 : i32
    return %arg1, %c0_i32, %c0_i32_0 : i32, i32, i32
  }
  func.func @transform_3(%arg0: i32, %arg1: i32) -> (i32, i32, i32) {
    %c0_i32 = arith.constant 0 : i32
    %c0_i32_0 = arith.constant 0 : i32
    %c0_i32_1 = arith.constant 0 : i32
    return %arg1, %c0_i32, %c0_i32_0 : i32, i32, i32
  }
  func.func @transform_4(%arg0: i32, %arg1: i32) -> (i32, i32, i32, i32) {
    %c0_i32 = arith.constant 0 : i32
    %c0_i32_0 = arith.constant 0 : i32
    %c0_i32_1 = arith.constant 0 : i32
    %c0_i32_2 = arith.constant 0 : i32
    return %arg0, %c0_i32, %c0_i32_0, %c0_i32_1 : i32, i32, i32, i32
  }
  func.func @transform_5(%arg0: i32, %arg1: i32) -> (i32, i32, i32, i32) {
    %c0_i32 = arith.constant 0 : i32
    %c0_i32_0 = arith.constant 0 : i32
    %c0_i32_1 = arith.constant 0 : i32
    %c0_i32_2 = arith.constant 0 : i32
    return %arg0, %c0_i32, %c0_i32_0, %c0_i32_1 : i32, i32, i32, i32
  }
}

</mosaic_0001>

<llo_original>
// kernel: middle_block.1
$region0: #{middle_block.1}
  #allocation0 [shape = 'u32[]', space=smem, size = 0x4, offset = 0x4, fixed_abs, tag = 'smem constant byte address 0x4 - core index']
  #allocation1 [shape = 'u32[144,128]{1,0:T(1,128)}', space=vmem, size = 0x12000, scoped, tag = 'internal scratch']
  #allocation2 [shape = 'f32[1,16,16,128]{3,2,1,0:T(8,128)}', space=vmem, size = 0x20000, scoped, tag = 'scratch operand']
  #allocation3 [shape = 'f32[1,18,18,128]{3,2,1,0:T(8,128)}', space=vmem, size = 0x36000, scoped, tag = 'scratch operand']
  %s0 = inlined_call_operand.vmem [shape: f32[16,27,128], index: 0, kind: input, shape index: {}]
  %s1 = inlined_call_operand.vmem [shape: bf16[16,3,128,128], index: 1, kind: input, shape index: {}]
  %s2 = inlined_call_operand.vmem [shape: f32[16,3,128], index: 2, kind: input, shape index: {}]
  %s3 = inlined_call_operand.vmem [shape: f32[16,3,128], index: 3, kind: input, shape index: {}]
  %s4 = inlined_call_operand.vmem [shape: f32[2,16,16,128], index: 4, kind: input, shape index: {}]
  %s5 = inlined_call_operand.hbm [shape: f32[2,16,16,128], index: 5, kind: output, shape index: {}]
  %s6 = sld [smem:[#allocation0]]
  $region61: #{middle_block.1} parent=0
    _
  %s8 = ssub.s32 1, %s6
  %s9 = scalar_select 0, %s8, %s6
  $region1: #{middle_block.1} parent=0
    #allocation4 [shape = 'u8[262144]{0}', space=vmem, size = 0x40000, scoped, tag = 'output window, operand 0']
    #allocation5 [shape = 's32[2]{0}', space=sflag, size = 0x8, scoped, tag = 'scoped memory for middle_block.1']
    %10 = vsyncpa [#allocation5], 0
    %s11 = scalar_lea.sflag [#allocation5], 1
    %12 = vsyncpa %s11, 0
    loop: start=0, step=1, limit=34
    $region2: #{middle_block.1} parent=1 // loop_pre_header
      _
    $region3: #{middle_block.1} parent=1 // loop_header
      %s14 = sphi 0, %s18
      %p15 = scmp.ge.s32.totalorder %s14, 34
      %s21 = sphi 0, %s33
      %s22 = sphi 0, %s29
      %s23 = sphi 0, %s21
      %s24 = sphi 0, %s22
      %s25 = sphi 0, %s23
      %s26 = sphi 0, %s24
      %s36 = sphi 0, %s38
      %s39 = sphi 0, %s36
      %s40 = sphi 0, %s39
      %s56 = sphi 0, %s40
      %s62 = sphi 0, %s64
      %s65 = sphi 0, %s62
      %s66 = sphi 0, %s65
      %s82 = sphi 0, %s66
      %s88 = sphi 0, %s90
      %s91 = sphi 0, %s88
      %s92 = sphi 0, %s91
      %s108 = sphi 0, %s92
      %s114 = sphi 0, %s116
      %s117 = sphi 0, %s114
      %s118 = sphi 0, %s117
      %s134 = sphi 0, %s118
      %s140 = sphi 0, %s142
      %s143 = sphi 0, %s140
      %s144 = sphi 0, %s143
      %s160 = sphi 0, %s144
      %s166 = sphi 0, %s168
      %s169 = sphi 0, %s166
      %s170 = sphi 0, %s169
      %s186 = sphi 0, %s170
    $region4: #{middle_block.1} parent=1 // loop_header_branch
      %17 = sbr.rel (%p15) target = $region8
    $region5: #{middle_block.1} parent=1 // loop_body
      %s19 = ssub.s32 %s14, 1
      %s20 = ssub.s32 %s14, 2
      %s27 = sadd.s32 1, %s22
      %p28 = scmp.ge.s32.totalorder %s27, 16
      %s29 = scalar_select %p28, 0, %s27
      %s30 = sadd.s32 1, %s21
      %s31 = scalar_select %p28, %s30, %s21
      %p32 = scmp.ge.s32.totalorder %s31, 2
      %s33 = scalar_select %p32, 0, %s31
      %s34 = ssub.s32 %s22, %s29
      %p35 = scmp.eq.s32.totalorder %s34, 0
      %s37 = sadd.s32 %s36, 1
      %s38 = scalar_select %p35, %s36, %s37
      %p41 = pneg %p35
      %p42 = scmp.eq.s32.totalorder %s14, 31
      %p43 = por %p41, %p42
      %p44 = scmp.ne.s32.totalorder %s36, %s39
      %p45 = scmp.eq.s32.totalorder %s14, 0
      %p46 = por %p44, %p45
      %p47 = scmp.ne.s32.totalorder %s36, %s39
      %p48 = scmp.eq.s32.totalorder %s19, 31
      %p49 = por %p47, %p48
      %p50 = scmp.ne.s32.totalorder %s39, %s40
      %p51 = scmp.eq.s32.totalorder %s19, 0
      %p52 = por %p50, %p51
      %p53 = scmp.ne.s32.totalorder %s39, %s40
      %p54 = scmp.eq.s32.totalorder %s20, 31
      %p55 = por %p53, %p54
      %p57 = scmp.ne.s32.totalorder %s40, %s56
      %p58 = scmp.eq.s32.totalorder %s20, 0
      %p59 = por %p57, %p58
      %s60 = ssub.s32 %s22, %s29
      %p61 = scmp.eq.s32.totalorder %s60, 0
      %s63 = sadd.s32 %s62, 1
      %s64 = scalar_select %p61, %s62, %s63
      %p67 = pneg %p61
      %p68 = scmp.eq.s32.totalorder %s14, 31
      %p69 = por %p67, %p68
      %p70 = scmp.ne.s32.totalorder %s62, %s65
      %p71 = scmp.eq.s32.totalorder %s14, 0
      %p72 = por %p70, %p71
      %p73 = scmp.ne.s32.totalorder %s62, %s65
      %p74 = scmp.eq.s32.totalorder %s19, 31
      %p75 = por %p73, %p74
      %p76 = scmp.ne.s32.totalorder %s65, %s66
      %p77 = scmp.eq.s32.totalorder %s19, 0
      %p78 = por %p76, %p77
      %p79 = scmp.ne.s32.totalorder %s65, %s66
      %p80 = scmp.eq.s32.totalorder %s20, 31
      %p81 = por %p79, %p80
      %p83 = scmp.ne.s32.totalorder %s66, %s82
      %p84 = scmp.eq.s32.totalorder %s20, 0
      %p85 = por %p83, %p84
      %s86 = ssub.s32 %s22, %s29
      %p87 = scmp.eq.s32.totalorder %s86, 0
      %s89 = sadd.s32 %s88, 1
      %s90 = scalar_select %p87, %s88, %s89
      %p93 = pneg %p87
      %p94 = scmp.eq.s32.totalorder %s14, 31
      %p95 = por %p93, %p94
      %p96 = scmp.ne.s32.totalorder %s88, %s91
      %p97 = scmp.eq.s32.totalorder %s14, 0
      %p98 = por %p96, %p97
      %p99 = scmp.ne.s32.totalorder %s88, %s91
      %p100 = scmp.eq.s32.totalorder %s19, 31
      %p101 = por %p99, %p100
      %p102 = scmp.ne.s32.totalorder %s91, %s92
      %p103 = scmp.eq.s32.totalorder %s19, 0
      %p104 = por %p102, %p103
      %p105 = scmp.ne.s32.totalorder %s91, %s92
      %p106 = scmp.eq.s32.totalorder %s20, 31
      %p107 = por %p105, %p106
      %p109 = scmp.ne.s32.totalorder %s92, %s108
      %p110 = scmp.eq.s32.totalorder %s20, 0
      %p111 = por %p109, %p110
      %s112 = ssub.s32 %s22, %s29
      %p113 = scmp.eq.s32.totalorder %s112, 0
      %s115 = sadd.s32 %s114, 1
      %s116 = scalar_select %p113, %s114, %s115
      %p119 = pneg %p113
      %p120 = scmp.eq.s32.totalorder %s14, 31
      %p121 = por %p119, %p120
      %p122 = scmp.ne.s32.totalorder %s114, %s117
      %p123 = scmp.eq.s32.totalorder %s14, 0
      %p124 = por %p122, %p123
      %p125 = scmp.ne.s32.totalorder %s114, %s117
      %p126 = scmp.eq.s32.totalorder %s19, 31
      %p127 = por %p125, %p126
      %p128 = scmp.ne.s32.totalorder %s117, %s118
      %p129 = scmp.eq.s32.totalorder %s19, 0
      %p130 = por %p128, %p129
      %p131 = scmp.ne.s32.totalorder %s117, %s118
      %p132 = scmp.eq.s32.totalorder %s20, 31
      %p133 = por %p131, %p132
      %p135 = scmp.ne.s32.totalorder %s118, %s134
      %p136 = scmp.eq.s32.totalorder %s20, 0
      %p137 = por %p135, %p136
      %s138 = ssub.s32 %s21, %s33
      %p139 = scmp.eq.s32.totalorder %s138, 0
      %s141 = sadd.s32 %s140, 1
      %s142 = scalar_select %p139, %s140, %s141
      %p145 = pneg %p139
      %p146 = scmp.eq.s32.totalorder %s14, 31
      %p147 = por %p145, %p146
      %p148 = scmp.ne.s32.totalorder %s140, %s143
      %p149 = scmp.eq.s32.totalorder %s14, 0
      %p150 = por %p148, %p149
      %p151 = scmp.ne.s32.totalorder %s140, %s143
      %p152 = scmp.eq.s32.totalorder %s19, 31
      %p153 = por %p151, %p152
      %p154 = scmp.ne.s32.totalorder %s143, %s144
      %p155 = scmp.eq.s32.totalorder %s19, 0
      %p156 = por %p154, %p155
      %p157 = scmp.ne.s32.totalorder %s143, %s144
      %p158 = scmp.eq.s32.totalorder %s20, 31
      %p159 = por %p157, %p158
      %p161 = scmp.ne.s32.totalorder %s144, %s160
      %p162 = scmp.eq.s32.totalorder %s20, 0
      %p163 = por %p161, %p162
      %s164 = ssub.s32 %s21, %s33
      %p165 = scmp.eq.s32.totalorder %s164, 0
      %s167 = sadd.s32 %s166, 1
      %s168 = scalar_select %p165, %s166, %s167
      %p171 = pneg %p165
      %p172 = scmp.eq.s32.totalorder %s14, 31
      %p173 = por %p171, %p172
      %p174 = scmp.ne.s32.totalorder %s166, %s169
      %p175 = scmp.eq.s32.totalorder %s14, 0
      %p176 = por %p174, %p175
      %p177 = scmp.ne.s32.totalorder %s166, %s169
      %p178 = scmp.eq.s32.totalorder %s19, 31
      %p179 = por %p177, %p178
      %p180 = scmp.ne.s32.totalorder %s169, %s170
      %p181 = scmp.eq.s32.totalorder %s19, 0
      %p182 = por %p180, %p181
      %p183 = scmp.ne.s32.totalorder %s169, %s170
      %p184 = scmp.eq.s32.totalorder %s20, 31
      %p185 = por %p183, %p184
      %p187 = scmp.ne.s32.totalorder %s170, %s186
      %p188 = scmp.eq.s32.totalorder %s20, 0
      %p189 = por %p187, %p188
      %p190 = scmp.le.s32.totalorder 1, %s14
      %p191 = scmp.lt.s32.totalorder %s14, 33
      %p192 = pnand %p190, %p191
      %p193 = pneg %p192
      // Predicated region
      $region9: #{middle_block.1} parent=5 // pred_check
        _
      $region10: #{middle_block.1} parent=5 // pred_check_branch
        %195 = sbr.rel (%p192) target = $region12
      $region11: #{middle_block.1} parent=5 // pred_region
        %s196 = ssub.s32 %s14, 1
      $region12: #{middle_block.1} parent=5 // pred_fallthru
        _
      %p197 = scmp.lt.s32.totalorder %s14, 32
      // Predicated region
      $region13: #{middle_block.1} parent=5 // pred_check
        %p198 = pneg %p197
      $region14: #{middle_block.1} parent=5 // pred_check_branch
        %200 = sbr.rel (%p198) target = $region16
      $region15: #{middle_block.1} parent=5 // pred_region
        // Predicated region
        $region17: #{middle_block.1} parent=15 // pred_check
          %p201 = pneg %p46
        $region18: #{middle_block.1} parent=15 // pred_check_branch
          %203 = sbr.rel (%p201) target = $region20
        $region19: #{middle_block.1} parent=15 // pred_region
          %p204 = scmp.lt.s32.totalorder %s22, 15
          %s205 = scalar_select %p204, %s22, 15
          %s206 = smul.addr %s205, 4
          %s207 = smul.addr %s206, 8
          %s208 = scalar_lea.vmem %s0, %s207
        $region20: #{middle_block.1} parent=15 // pred_fallthru
          _
        // Predicated region
        $region21: #{middle_block.1} parent=15 // pred_check
          %p209 = pneg %p72
        $region22: #{middle_block.1} parent=15 // pred_check_branch
          %211 = sbr.rel (%p209) target = $region24
        $region23: #{middle_block.1} parent=15 // pred_region
          %p212 = scmp.lt.s32.totalorder %s22, 15
          %s213 = scalar_select %p212, %s22, 15
          %s214 = smul.addr %s213, 48
          %s215 = smul.addr %s214, 4
          %s216 = scalar_lea.vmem %s1, %s215
        $region24: #{middle_block.1} parent=15 // pred_fallthru
          _
        // Predicated region
        $region25: #{middle_block.1} parent=15 // pred_check
          %p217 = pneg %p98
        $region26: #{middle_block.1} parent=15 // pred_check_branch
          %219 = sbr.rel (%p217) target = $region28
        $region27: #{middle_block.1} parent=15 // pred_region
          %p220 = scmp.lt.s32.totalorder %s22, 15
          %s221 = scalar_select %p220, %s22, 15
          %s222 = smul.addr %s221, 4
          %s223 = scalar_lea.vmem %s2, %s222
        $region28: #{middle_block.1} parent=15 // pred_fallthru
          _
        // Predicated region
        $region29: #{middle_block.1} parent=15 // pred_check
          %p224 = pneg %p124
        $region30: #{middle_block.1} parent=15 // pred_check_branch
          %226 = sbr.rel (%p224) target = $region32
        $region31: #{middle_block.1} parent=15 // pred_region
          %p227 = scmp.lt.s32.totalorder %s22, 15
          %s228 = scalar_select %p227, %s22, 15
          %s229 = smul.addr %s228, 4
          %s230 = scalar_lea.vmem %s3, %s229
        $region32: #{middle_block.1} parent=15 // pred_fallthru
          _
        // Predicated region
        $region33: #{middle_block.1} parent=15 // pred_check
          %p231 = pneg %p150
        $region34: #{middle_block.1} parent=15 // pred_check_branch
          %233 = sbr.rel (%p231) target = $region36
        $region35: #{middle_block.1} parent=15 // pred_region
          %p234 = scmp.lt.s32.totalorder %s21, 1
          %s235 = scalar_select %p234, %s21, 1
          %s236 = smul.addr %s235, 32
          %s237 = smul.addr %s236, 8
          %s238 = scalar_lea.vmem %s4, %s237
        $region36: #{middle_block.1} parent=15 // pred_fallthru
          _
      $region16: #{middle_block.1} parent=5 // pred_fallthru
        _
      %p239 = scmp.le.s32.totalorder 1, %s14
      %p240 = scmp.lt.s32.totalorder %s14, 33
      %p241 = pnand %p239, %p240
      %p242 = pneg %p241
      // Predicated region
      $region37: #{middle_block.1} parent=5 // pred_check
        _
      $region38: #{middle_block.1} parent=5 // pred_check_branch
        %244 = sbr.rel (%p241) target = $region40
      $region39: #{middle_block.1} parent=5 // pred_region
        %s245 = ssub.s32 %s14, 1
        %p246 = scmp.lt.s32.totalorder %s24, 15
        %s247 = scalar_select %p246, %s24, 15
        %s248 = smul.addr %s247, 4
        %s249 = smul.addr %s248, 8
        %s250 = scalar_lea.vmem %s0, %s249
        %p251 = pneg %p52
        %p252 = pneg %p49
        %p253 = scmp.lt.s32.totalorder %s24, 15
        %s254 = scalar_select %p253, %s24, 15
        %s255 = smul.addr %s254, 48
        %s256 = smul.addr %s255, 4
        %s257 = scalar_lea.vmem %s1, %s256
        %p258 = pneg %p78
        %p259 = pneg %p75
        %p260 = scmp.lt.s32.totalorder %s24, 15
        %s261 = scalar_select %p260, %s24, 15
        %s262 = smul.addr %s261, 4
        %s263 = scalar_lea.vmem %s2, %s262
        %p264 = pneg %p104
        %p265 = pneg %p101
        %p266 = scmp.lt.s32.totalorder %s24, 15
        %s267 = scalar_select %p266, %s24, 15
        %s268 = smul.addr %s267, 4
        %s269 = scalar_lea.vmem %s3, %s268
        %p270 = pneg %p130
        %p271 = pneg %p127
        %p272 = scmp.lt.s32.totalorder %s23, 1
        %s273 = scalar_select %p272, %s23, 1
        %s274 = smul.addr %s273, 32
        %s275 = smul.addr %s274, 8
        %s276 = scalar_lea.vmem %s4, %s275
        %p277 = pneg %p156
        %p278 = pneg %p153
        %p279 = pneg %p182
        %p280 = pneg %p179
        %s281 = sand.u32 %s169, 1
        %s282 = scalar_lea.sflag [#allocation5], %s281
        %s283 = sand.u32 %s169, 1
        %s284 = smul.addr %s283, 256
        %s285 = scalar_lea.vmem [#allocation4], %s284
        %p286 = scmp.lt.s32.totalorder %s24, 15
        %s287 = scalar_select %p286, %s24, 15
        %s288 = smul.addr %s287, 4
        %s289 = smul.addr %s288, 8
        %s290 = scalar_lea.vmem %s0, %s289
        %p291 = scmp.lt.s32.totalorder %s24, 15
        %s292 = scalar_select %p291, %s24, 15
        %s293 = smul.addr %s292, 48
        %s294 = smul.addr %s293, 4
        %s295 = scalar_lea.vmem %s1, %s294
        %p296 = scmp.lt.s32.totalorder %s24, 15
        %s297 = scalar_select %p296, %s24, 15
        %s298 = smul.addr %s297, 4
        %s299 = scalar_lea.vmem %s2, %s298
        %p300 = scmp.lt.s32.totalorder %s24, 15
        %s301 = scalar_select %p300, %s24, 15
        %s302 = smul.addr %s301, 4
        %s303 = scalar_lea.vmem %s3, %s302
        %p304 = scmp.lt.s32.totalorder %s23, 1
        %s305 = scalar_select %p304, %s23, 1
        %s306 = smul.addr %s305, 32
        %s307 = smul.addr %s306, 8
        %s308 = scalar_lea.vmem %s4, %s307
        %p310 = scmp.eq.s32.totalorder %s24, 0
        // Predicated region
        $region41: #{middle_block.1} parent=39 // pred_check
          %p311 = pneg %p310
        $region42: #{middle_block.1} parent=39 // pred_check_branch
          %313 = sbr.rel (%p311) target = $region44
        $region43: #{middle_block.1} parent=39 // pred_region
          %v314 = vld [vmem:[%s308] sm:$0xff]
          %v315 = vld [vmem:[%s308 + $0x8] sm:$0xff]
          %v316 = vld [vmem:[%s308 + $0x10] sm:$0xff]
          %v317 = vld [vmem:[%s308 + $0x18] sm:$0xff]
          %v318 = vld [vmem:[%s308 + $0x20] sm:$0xff]
          %v319 = vld [vmem:[%s308 + $0x28] sm:$0xff]
          %v320 = vld [vmem:[%s308 + $0x30] sm:$0xff]
          %v321 = vld [vmem:[%s308 + $0x38] sm:$0xff]
          %v322 = vld [vmem:[%s308 + $0x40] sm:$0xff]
          %v323 = vld [vmem:[%s308 + $0x48] sm:$0xff]
          %v324 = vld [vmem:[%s308 + $0x50] sm:$0xff]
          %v325 = vld [vmem:[%s308 + $0x58] sm:$0xff]
          %v326 = vld [vmem:[%s308 + $0x60] sm:$0xff]
          %v327 = vld [vmem:[%s308 + $0x68] sm:$0xff]
          %v328 = vld [vmem:[%s308 + $0x70] sm:$0xff]
          %v329 = vld [vmem:[%s308 + $0x78] sm:$0xff]
          %v330 = vld [vmem:[%s308 + $0x80] sm:$0xff]
          %v331 = vld [vmem:[%s308 + $0x88] sm:$0xff]
          %v332 = vld [vmem:[%s308 + $0x90] sm:$0xff]
          %v333 = vld [vmem:[%s308 + $0x98] sm:$0xff]
          %v334 = vld [vmem:[%s308 + $0xa0] sm:$0xff]
          %v335 = vld [vmem:[%s308 + $0xa8] sm:$0xff]
          %v336 = vld [vmem:[%s308 + $0xb0] sm:$0xff]
          %v337 = vld [vmem:[%s308 + $0xb8] sm:$0xff]
          %v338 = vld [vmem:[%s308 + $0xc0] sm:$0xff]
          %v339 = vld [vmem:[%s308 + $0xc8] sm:$0xff]
          %v340 = vld [vmem:[%s308 + $0xd0] sm:$0xff]
          %v341 = vld [vmem:[%s308 + $0xd8] sm:$0xff]
          %v342 = vld [vmem:[%s308 + $0xe0] sm:$0xff]
          %v343 = vld [vmem:[%s308 + $0xe8] sm:$0xff]
          %v344 = vld [vmem:[%s308 + $0xf0] sm:$0xff]
          %v345 = vld [vmem:[%s308 + $0xf8] sm:$0xff]
          %346 = vst [vmem:[#allocation2] sm:$0xff] %v314
          %347 = vst [vmem:[#allocation2 + $0x8] sm:$0xff] %v315
          %348 = vst [vmem:[#allocation2 + $0x10] sm:$0xff] %v316
          %349 = vst [vmem:[#allocation2 + $0x18] sm:$0xff] %v317
          %350 = vst [vmem:[#allocation2 + $0x20] sm:$0xff] %v318
          %351 = vst [vmem:[#allocation2 + $0x28] sm:$0xff] %v319
          %352 = vst [vmem:[#allocation2 + $0x30] sm:$0xff] %v320
          %353 = vst [vmem:[#allocation2 + $0x38] sm:$0xff] %v321
          %354 = vst [vmem:[#allocation2 + $0x40] sm:$0xff] %v322
          %355 = vst [vmem:[#allocation2 + $0x48] sm:$0xff] %v323
          %356 = vst [vmem:[#allocation2 + $0x50] sm:$0xff] %v324
          %357 = vst [vmem:[#allocation2 + $0x58] sm:$0xff] %v325
          %358 = vst [vmem:[#allocation2 + $0x60] sm:$0xff] %v326
          %359 = vst [vmem:[#allocation2 + $0x68] sm:$0xff] %v327
          %360 = vst [vmem:[#allocation2 + $0x70] sm:$0xff] %v328
          %361 = vst [vmem:[#allocation2 + $0x78] sm:$0xff] %v329
          %362 = vst [vmem:[#allocation2 + $0x80] sm:$0xff] %v330
          %363 = vst [vmem:[#allocation2 + $0x88] sm:$0xff] %v331
          %364 = vst [vmem:[#allocation2 + $0x90] sm:$0xff] %v332
          %365 = vst [vmem:[#allocation2 + $0x98] sm:$0xff] %v333
          %366 = vst [vmem:[#allocation2 + $0xa0] sm:$0xff] %v334
          %367 = vst [vmem:[#allocation2 + $0xa8] sm:$0xff] %v335
          %368 = vst [vmem:[#allocation2 + $0xb0] sm:$0xff] %v336
          %369 = vst [vmem:[#allocation2 + $0xb8] sm:$0xff] %v337
          %370 = vst [vmem:[#allocation2 + $0xc0] sm:$0xff] %v338
          %371 = vst [vmem:[#allocation2 + $0xc8] sm:$0xff] %v339
          %372 = vst [vmem:[#allocation2 + $0xd0] sm:$0xff] %v340
          %373 = vst [vmem:[#allocation2 + $0xd8] sm:$0xff] %v341
          %374 = vst [vmem:[#allocation2 + $0xe0] sm:$0xff] %v342
          %375 = vst [vmem:[#allocation2 + $0xe8] sm:$0xff] %v343
          %376 = vst [vmem:[#allocation2 + $0xf0] sm:$0xff] %v344
          %377 = vst [vmem:[#allocation2 + $0xf8] sm:$0xff] %v345
          %378 = vst [vmem:[#allocation3] sm:$0xff] 0.0
          %379 = vst [vmem:[#allocation3 + $0x8] sm:$0xff] 0.0
          %380 = vst [vmem:[#allocation3 + $0x10] sm:$0x3] 0.0
          %381 = vst [vmem:[#allocation3 + $0x18] sm:$0xff] 0.0
          %382 = vst [vmem:[#allocation3 + $0x20] sm:$0xff] 0.0
          %383 = vst [vmem:[#allocation3 + $0x28] sm:$0x3] 0.0
          %384 = vst [vmem:[#allocation3 + $0x30] sm:$0xff] 0.0
          %385 = vst [vmem:[#allocation3 + $0x38] sm:$0xff] 0.0
          %386 = vst [vmem:[#allocation3 + $0x40] sm:$0x3] 0.0
          %387 = vst [vmem:[#allocation3 + $0x48] sm:$0xff] 0.0
          %388 = vst [vmem:[#allocation3 + $0x50] sm:$0xff] 0.0
          %389 = vst [vmem:[#allocation3 + $0x58] sm:$0x3] 0.0
          %390 = vst [vmem:[#allocation3 + $0x60] sm:$0xff] 0.0
          %391 = vst [vmem:[#allocation3 + $0x68] sm:$0xff] 0.0
          %392 = vst [vmem:[#allocation3 + $0x70] sm:$0x3] 0.0
          %393 = vst [vmem:[#allocation3 + $0x78] sm:$0xff] 0.0
          %394 = vst [vmem:[#allocation3 + $0x80] sm:$0xff] 0.0
          %395 = vst [vmem:[#allocation3 + $0x88] sm:$0x3] 0.0
          %396 = vst [vmem:[#allocation3 + $0x90] sm:$0xff] 0.0
          %397 = vst [vmem:[#allocation3 + $0x98] sm:$0xff] 0.0
          %398 = vst [vmem:[#allocation3 + $0xa0] sm:$0x3] 0.0
          %399 = vst [vmem:[#allocation3 + $0xa8] sm:$0xff] 0.0
          %400 = vst [vmem:[#allocation3 + $0xb0] sm:$0xff] 0.0
          %401 = vst [vmem:[#allocation3 + $0xb8] sm:$0x3] 0.0
          %402 = vst [vmem:[#allocation3 + $0xc0] sm:$0xff] 0.0
          %403 = vst [vmem:[#allocation3 + $0xc8] sm:$0xff] 0.0
          %404 = vst [vmem:[#allocation3 + $0xd0] sm:$0x3] 0.0
          %405 = vst [vmem:[#allocation3 + $0xd8] sm:$0xff] 0.0
          %406 = vst [vmem:[#allocation3 + $0xe0] sm:$0xff] 0.0
          %407 = vst [vmem:[#allocation3 + $0xe8] sm:$0x3] 0.0
          %408 = vst [vmem:[#allocation3 + $0xf0] sm:$0xff] 0.0
          %409 = vst [vmem:[#allocation3 + $0xf8] sm:$0xff] 0.0
          %410 = vst [vmem:[#allocation3 + $0x100] sm:$0x3] 0.0
          %411 = vst [vmem:[#allocation3 + $0x108] sm:$0xff] 0.0
          %412 = vst [vmem:[#allocation3 + $0x110] sm:$0xff] 0.0
          %413 = vst [vmem:[#allocation3 + $0x118] sm:$0x3] 0.0
          %414 = vst [vmem:[#allocation3 + $0x120] sm:$0xff] 0.0
          %415 = vst [vmem:[#allocation3 + $0x128] sm:$0xff] 0.0
          %416 = vst [vmem:[#allocation3 + $0x130] sm:$0x3] 0.0
          %417 = vst [vmem:[#allocation3 + $0x138] sm:$0xff] 0.0
          %418 = vst [vmem:[#allocation3 + $0x140] sm:$0xff] 0.0
          %419 = vst [vmem:[#allocation3 + $0x148] sm:$0x3] 0.0
          %420 = vst [vmem:[#allocation3 + $0x150] sm:$0xff] 0.0
          %421 = vst [vmem:[#allocation3 + $0x158] sm:$0xff] 0.0
          %422 = vst [vmem:[#allocation3 + $0x160] sm:$0x3] 0.0
          %423 = vst [vmem:[#allocation3 + $0x168] sm:$0xff] 0.0
          %424 = vst [vmem:[#allocation3 + $0x170] sm:$0xff] 0.0
          %425 = vst [vmem:[#allocation3 + $0x178] sm:$0x3] 0.0
          %426 = vst [vmem:[#allocation3 + $0x180] sm:$0xff] 0.0
          %427 = vst [vmem:[#allocation3 + $0x188] sm:$0xff] 0.0
          %428 = vst [vmem:[#allocation3 + $0x190] sm:$0x3] 0.0
          %429 = vst [vmem:[#allocation3 + $0x198] sm:$0xff] 0.0
          %430 = vst [vmem:[#allocation3 + $0x1a0] sm:$0xff] 0.0
          %431 = vst [vmem:[#allocation3 + $0x1a8] sm:$0x3] 0.0
        $region44: #{middle_block.1} parent=39 // pred_fallthru
          _
        %v432 = vld [vmem:[%s290] sm:$0xff]
        %v433 = vld [vmem:[%s290 + $0x8] sm:$0xff]
        %v434 = vld [vmem:[%s290 + $0x10] sm:$0xff]
        %v435 = vld [vmem:[%s290 + $0x18] sm:$0x7]
        %v436 = vld [vmem:[%s299] sm:$0x7]
        %v437 = vld [vmem:[%s303] sm:$0x7]
        %v438 = vld [vmem:[#allocation2] sm:$0xff]
        %v439 = vld [vmem:[#allocation2 + $0x8] sm:$0xff]
        %v440 = vld [vmem:[#allocation2 + $0x10] sm:$0xff]
        %v441 = vld [vmem:[#allocation2 + $0x18] sm:$0xff]
        %v442 = vld [vmem:[#allocation2 + $0x20] sm:$0xff]
        %v443 = vld [vmem:[#allocation2 + $0x28] sm:$0xff]
        %v444 = vld [vmem:[#allocation2 + $0x30] sm:$0xff]
        %v445 = vld [vmem:[#allocation2 + $0x38] sm:$0xff]
        %v446 = vld [vmem:[#allocation2 + $0x40] sm:$0xff]
        %v447 = vld [vmem:[#allocation2 + $0x48] sm:$0xff]
        %v448 = vld [vmem:[#allocation2 + $0x50] sm:$0xff]
        %v449 = vld [vmem:[#allocation2 + $0x58] sm:$0xff]
        %v450 = vld [vmem:[#allocation2 + $0x60] sm:$0xff]
        %v451 = vld [vmem:[#allocation2 + $0x68] sm:$0xff]
        %v452 = vld [vmem:[#allocation2 + $0x70] sm:$0xff]
        %v453 = vld [vmem:[#allocation2 + $0x78] sm:$0xff]
        %v454 = vld [vmem:[#allocation2 + $0x80] sm:$0xff]
        %v455 = vld [vmem:[#allocation2 + $0x88] sm:$0xff]
        %v456 = vld [vmem:[#allocation2 + $0x90] sm:$0xff]
        %v457 = vld [vmem:[#allocation2 + $0x98] sm:$0xff]
        %v458 = vld [vmem:[#allocation2 + $0xa0] sm:$0xff]
        %v459 = vld [vmem:[#allocation2 + $0xa8] sm:$0xff]
        %v460 = vld [vmem:[#allocation2 + $0xb0] sm:$0xff]
        %v461 = vld [vmem:[#allocation2 + $0xb8] sm:$0xff]
        %v462 = vld [vmem:[#allocation2 + $0xc0] sm:$0xff]
        %v463 = vld [vmem:[#allocation2 + $0xc8] sm:$0xff]
        %v464 = vld [vmem:[#allocation2 + $0xd0] sm:$0xff]
        %v465 = vld [vmem:[#allocation2 + $0xd8] sm:$0xff]
        %v466 = vld [vmem:[#allocation2 + $0xe0] sm:$0xff]
        %v467 = vld [vmem:[#allocation2 + $0xe8] sm:$0xff]
        %v468 = vld [vmem:[#allocation2 + $0xf0] sm:$0xff]
        %v469 = vld [vmem:[#allocation2 + $0xf8] sm:$0xff]
        %v470 = vmax.f32 %v438, 0.0
        %v471 = vmax.f32 %v439, 0.0
        %v472 = vmax.f32 %v440, 0.0
        %v473 = vmax.f32 %v441, 0.0
        %v474 = vmax.f32 %v442, 0.0
        %v475 = vmax.f32 %v443, 0.0
        %v476 = vmax.f32 %v444, 0.0
        %v477 = vmax.f32 %v445, 0.0
        %v478 = vmax.f32 %v446, 0.0
        %v479 = vmax.f32 %v447, 0.0
        %v480 = vmax.f32 %v448, 0.0
        %v481 = vmax.f32 %v449, 0.0
        %v482 = vmax.f32 %v450, 0.0
        %v483 = vmax.f32 %v451, 0.0
        %v484 = vmax.f32 %v452, 0.0
        %v485 = vmax.f32 %v453, 0.0
        %v486 = vmax.f32 %v454, 0.0
        %v487 = vmax.f32 %v455, 0.0
        %v488 = vmax.f32 %v456, 0.0
        %v489 = vmax.f32 %v457, 0.0
        %v490 = vmax.f32 %v458, 0.0
        %v491 = vmax.f32 %v459, 0.0
        %v492 = vmax.f32 %v460, 0.0
        %v493 = vmax.f32 %v461, 0.0
        %v494 = vmax.f32 %v462, 0.0
        %v495 = vmax.f32 %v463, 0.0
        %v496 = vmax.f32 %v464, 0.0
        %v497 = vmax.f32 %v465, 0.0
        %v498 = vmax.f32 %v466, 0.0
        %v499 = vmax.f32 %v467, 0.0
        %v500 = vmax.f32 %v468, 0.0
        %v501 = vmax.f32 %v469, 0.0
        %s502 = scalar_lea.vmem [#allocation3], 24
        %503 = vst [vmem:[%s502 + $0x1] sm:$0xff] %v470
        %504 = vst [vmem:[%s502 + $0x9] sm:$0xff] %v471
        %505 = vst [vmem:[%s502 + $0x19] sm:$0xff] %v472
        %506 = vst [vmem:[%s502 + $0x21] sm:$0xff] %v473
        %507 = vst [vmem:[%s502 + $0x31] sm:$0xff] %v474
        %508 = vst [vmem:[%s502 + $0x39] sm:$0xff] %v475
        %509 = vst [vmem:[%s502 + $0x49] sm:$0xff] %v476
        %510 = vst [vmem:[%s502 + $0x51] sm:$0xff] %v477
        %511 = vst [vmem:[%s502 + $0x61] sm:$0xff] %v478
        %512 = vst [vmem:[%s502 + $0x69] sm:$0xff] %v479
        %513 = vst [vmem:[%s502 + $0x79] sm:$0xff] %v480
        %514 = vst [vmem:[%s502 + $0x81] sm:$0xff] %v481
        %515 = vst [vmem:[%s502 + $0x91] sm:$0xff] %v482
        %516 = vst [vmem:[%s502 + $0x99] sm:$0xff] %v483
        %517 = vst [vmem:[%s502 + $0xa9] sm:$0xff] %v484
        %518 = vst [vmem:[%s502 + $0xb1] sm:$0xff] %v485
        %519 = vst [vmem:[%s502 + $0xc1] sm:$0xff] %v486
        %520 = vst [vmem:[%s502 + $0xc9] sm:$0xff] %v487
        %521 = vst [vmem:[%s502 + $0xd9] sm:$0xff] %v488
        %522 = vst [vmem:[%s502 + $0xe1] sm:$0xff] %v489
        %523 = vst [vmem:[%s502 + $0xf1] sm:$0xff] %v490
        %524 = vst [vmem:[%s502 + $0xf9] sm:$0xff] %v491
        %525 = vst [vmem:[%s502 + $0x109] sm:$0xff] %v492
        %526 = vst [vmem:[%s502 + $0x111] sm:$0xff] %v493
        %527 = vst [vmem:[%s502 + $0x121] sm:$0xff] %v494
        %528 = vst [vmem:[%s502 + $0x129] sm:$0xff] %v495
        %529 = vst [vmem:[%s502 + $0x139] sm:$0xff] %v496
        %530 = vst [vmem:[%s502 + $0x141] sm:$0xff] %v497
        %531 = vst [vmem:[%s502 + $0x151] sm:$0xff] %v498
        %532 = vst [vmem:[%s502 + $0x159] sm:$0xff] %v499
        %533 = vst [vmem:[%s502 + $0x169] sm:$0xff] %v500
        %534 = vst [vmem:[%s502 + $0x171] sm:$0xff] %v501
        %v535 = vld [vmem:[#allocation3] sm:$0xff]
        %v536 = vld [vmem:[#allocation3 + $0x8] sm:$0xff]
        %v537 = vld [vmem:[#allocation3 + $0x18] sm:$0xff]
        %v538 = vld [vmem:[#allocation3 + $0x20] sm:$0xff]
        %v539 = vld [vmem:[#allocation3 + $0x30] sm:$0xff]
        %v540 = vld [vmem:[#allocation3 + $0x38] sm:$0xff]
        %v541 = vld [vmem:[#allocation3 + $0x48] sm:$0xff]
        %v542 = vld [vmem:[#allocation3 + $0x50] sm:$0xff]
        %v543 = vld [vmem:[#allocation3 + $0x60] sm:$0xff]
        %v544 = vld [vmem:[#allocation3 + $0x68] sm:$0xff]
        %v545 = vld [vmem:[#allocation3 + $0x78] sm:$0xff]
        %v546 = vld [vmem:[#allocation3 + $0x80] sm:$0xff]
        %v547 = vld [vmem:[#allocation3 + $0x90] sm:$0xff]
        %v548 = vld [vmem:[#allocation3 + $0x98] sm:$0xff]
        %v549 = vld [vmem:[#allocation3 + $0xa8] sm:$0xff]
        %v550 = vld [vmem:[#allocation3 + $0xb0] sm:$0xff]
        %v551 = vld [vmem:[#allocation3 + $0xc0] sm:$0xff]
        %v552 = vld [vmem:[#allocation3 + $0xc8] sm:$0xff]
        %v553 = vld [vmem:[#allocation3 + $0xd8] sm:$0xff]
        %v554 = vld [vmem:[#allocation3 + $0xe0] sm:$0xff]
        %v555 = vld [vmem:[#allocation3 + $0xf0] sm:$0xff]
        %v556 = vld [vmem:[#allocation3 + $0xf8] sm:$0xff]
        %v557 = vld [vmem:[#allocation3 + $0x108] sm:$0xff]
        %v558 = vld [vmem:[#allocation3 + $0x110] sm:$0xff]
        %v559 = vld [vmem:[#allocation3 + $0x120] sm:$0xff]
        %v560 = vld [vmem:[#allocation3 + $0x128] sm:$0xff]
        %v561 = vld [vmem:[#allocation3 + $0x138] sm:$0xff]
        %v562 = vld [vmem:[#allocation3 + $0x140] sm:$0xff]
        %v563 = vld [vmem:[#allocation3 + $0x150] sm:$0xff]
        %v564 = vld [vmem:[#allocation3 + $0x158] sm:$0xff]
        %v565 = vld [vmem:[#allocation3 + $0x168] sm:$0xff]
        %v566 = vld [vmem:[#allocation3 + $0x170] sm:$0xff]
        %v567 = vlaneseq
        %v568 = vshrl.u32 %v567, 7
        %v569 = vsub.s32 0, %v568
        %v570 = vrot.slane %v432, %v569
        %v571 = vmul.f32 %v535, %v570
        %v572 = vmul.f32 %v536, %v570
        %v573 = vmul.f32 %v537, %v570
        %v574 = vmul.f32 %v538, %v570
        %v575 = vmul.f32 %v539, %v570
        %v576 = vmul.f32 %v540, %v570
        %v577 = vmul.f32 %v541, %v570
        %v578 = vmul.f32 %v542, %v570
        %v579 = vmul.f32 %v543, %v570
        %v580 = vmul.f32 %v544, %v570
        %v581 = vmul.f32 %v545, %v570
        %v582 = vmul.f32 %v546, %v570
        %v583 = vmul.f32 %v547, %v570
        %v584 = vmul.f32 %v548, %v570
        %v585 = vmul.f32 %v549, %v570
        %v586 = vmul.f32 %v550, %v570
        %v587 = vmul.f32 %v551, %v570
        %v588 = vmul.f32 %v552, %v570
        %v589 = vmul.f32 %v553, %v570
        %v590 = vmul.f32 %v554, %v570
        %v591 = vmul.f32 %v555, %v570
        %v592 = vmul.f32 %v556, %v570
        %v593 = vmul.f32 %v557, %v570
        %v594 = vmul.f32 %v558, %v570
        %v595 = vmul.f32 %v559, %v570
        %v596 = vmul.f32 %v560, %v570
        %v597 = vmul.f32 %v561, %v570
        %v598 = vmul.f32 %v562, %v570
        %v599 = vmul.f32 %v563, %v570
        %v600 = vmul.f32 %v564, %v570
        %v601 = vmul.f32 %v565, %v570
        %v602 = vmul.f32 %v566, %v570
        %v603 = vld [vmem:[#allocation3 + $0x1] sm:$0xff]
        %v604 = vld [vmem:[#allocation3 + $0x9] sm:$0xff]
        %v605 = vld [vmem:[#allocation3 + $0x19] sm:$0xff]
        %v606 = vld [vmem:[#allocation3 + $0x21] sm:$0xff]
        %v607 = vld [vmem:[#allocation3 + $0x31] sm:$0xff]
        %v608 = vld [vmem:[#allocation3 + $0x39] sm:$0xff]
        %v609 = vld [vmem:[#allocation3 + $0x49] sm:$0xff]
        %v610 = vld [vmem:[#allocation3 + $0x51] sm:$0xff]
        %v611 = vld [vmem:[#allocation3 + $0x61] sm:$0xff]
        %v612 = vld [vmem:[#allocation3 + $0x69] sm:$0xff]
        %v613 = vld [vmem:[#allocation3 + $0x79] sm:$0xff]
        %v614 = vld [vmem:[#allocation3 + $0x81] sm:$0xff]
        %v615 = vld [vmem:[#allocation3 + $0x91] sm:$0xff]
        %v616 = vld [vmem:[#allocation3 + $0x99] sm:$0xff]
        %v617 = vld [vmem:[#allocation3 + $0xa9] sm:$0xff]
        %v618 = vld [vmem:[#allocation3 + $0xb1] sm:$0xff]
        %v619 = vld [vmem:[#allocation3 + $0xc1] sm:$0xff]
        %v620 = vld [vmem:[#allocation3 + $0xc9] sm:$0xff]
        %v621 = vld [vmem:[#allocation3 + $0xd9] sm:$0xff]
        %v622 = vld [vmem:[#allocation3 + $0xe1] sm:$0xff]
        %v623 = vld [vmem:[#allocation3 + $0xf1] sm:$0xff]
        %v624 = vld [vmem:[#allocation3 + $0xf9] sm:$0xff]
        %v625 = vld [vmem:[#allocation3 + $0x109] sm:$0xff]
        %v626 = vld [vmem:[#allocation3 + $0x111] sm:$0xff]
        %v627 = vld [vmem:[#allocation3 + $0x121] sm:$0xff]
        %v628 = vld [vmem:[#allocation3 + $0x129] sm:$0xff]
        %v629 = vld [vmem:[#allocation3 + $0x139] sm:$0xff]
        %v630 = vld [vmem:[#allocation3 + $0x141] sm:$0xff]
        %v631 = vld [vmem:[#allocation3 + $0x151] sm:$0xff]
        %v632 = vld [vmem:[#allocation3 + $0x159] sm:$0xff]
        %v633 = vld [vmem:[#allocation3 + $0x169] sm:$0xff]
        %v634 = vld [vmem:[#allocation3 + $0x171] sm:$0xff]
        %v635 = vlaneseq
        %v636 = vshrl.u32 %v635, 7
        %v637 = vsub.s32 1, %v636
        %v638 = vrot.slane %v432, %v637
        %v639 = vmul.f32 %v603, %v638
        %v640 = vmul.f32 %v604, %v638
        %v641 = vmul.f32 %v605, %v638
        %v642 = vmul.f32 %v606, %v638
        %v643 = vmul.f32 %v607, %v638
        %v644 = vmul.f32 %v608, %v638
        %v645 = vmul.f32 %v609, %v638
        %v646 = vmul.f32 %v610, %v638
        %v647 = vmul.f32 %v611, %v638
        %v648 = vmul.f32 %v612, %v638
        %v649 = vmul.f32 %v613, %v638
        %v650 = vmul.f32 %v614, %v638
        %v651 = vmul.f32 %v615, %v638
        %v652 = vmul.f32 %v616, %v638
        %v653 = vmul.f32 %v617, %v638
        %v654 = vmul.f32 %v618, %v638
        %v655 = vmul.f32 %v619, %v638
        %v656 = vmul.f32 %v620, %v638
        %v657 = vmul.f32 %v621, %v638
        %v658 = vmul.f32 %v622, %v638
        %v659 = vmul.f32 %v623, %v638
        %v660 = vmul.f32 %v624, %v638
        %v661 = vmul.f32 %v625, %v638
        %v662 = vmul.f32 %v626, %v638
        %v663 = vmul.f32 %v627, %v638
        %v664 = vmul.f32 %v628, %v638
        %v665 = vmul.f32 %v629, %v638
        %v666 = vmul.f32 %v630, %v638
        %v667 = vmul.f32 %v631, %v638
        %v668 = vmul.f32 %v632, %v638
        %v669 = vmul.f32 %v633, %v638
        %v670 = vmul.f32 %v634, %v638
        %v671 = vadd.f32 %v571, %v639
        %v672 = vadd.f32 %v572, %v640
        %v673 = vadd.f32 %v573, %v641
        %v674 = vadd.f32 %v574, %v642
        %v675 = vadd.f32 %v575, %v643
        %v676 = vadd.f32 %v576, %v644
        %v677 = vadd.f32 %v577, %v645
        %v678 = vadd.f32 %v578, %v646
        %v679 = vadd.f32 %v579, %v647
        %v680 = vadd.f32 %v580, %v648
        %v681 = vadd.f32 %v581, %v649
        %v682 = vadd.f32 %v582, %v650
        %v683 = vadd.f32 %v583, %v651
        %v684 = vadd.f32 %v584, %v652
        %v685 = vadd.f32 %v585, %v653
        %v686 = vadd.f32 %v586, %v654
        %v687 = vadd.f32 %v587, %v655
        %v688 = vadd.f32 %v588, %v656
        %v689 = vadd.f32 %v589, %v657
        %v690 = vadd.f32 %v590, %v658
        %v691 = vadd.f32 %v591, %v659
        %v692 = vadd.f32 %v592, %v660
        %v693 = vadd.f32 %v593, %v661
        %v694 = vadd.f32 %v594, %v662
        %v695 = vadd.f32 %v595, %v663
        %v696 = vadd.f32 %v596, %v664
        %v697 = vadd.f32 %v597, %v665
        %v698 = vadd.f32 %v598, %v666
        %v699 = vadd.f32 %v599, %v667
        %v700 = vadd.f32 %v600, %v668
        %v701 = vadd.f32 %v601, %v669
        %v702 = vadd.f32 %v602, %v670
        %v703 = vld [vmem:[#allocation3 + $0x2] sm:$0xff]
        %v704 = vld [vmem:[#allocation3 + $0xa] sm:$0xff]
        %v705 = vld [vmem:[#allocation3 + $0x1a] sm:$0xff]
        %v706 = vld [vmem:[#allocation3 + $0x22] sm:$0xff]
        %v707 = vld [vmem:[#allocation3 + $0x32] sm:$0xff]
        %v708 = vld [vmem:[#allocation3 + $0x3a] sm:$0xff]
        %v709 = vld [vmem:[#allocation3 + $0x4a] sm:$0xff]
        %v710 = vld [vmem:[#allocation3 + $0x52] sm:$0xff]
        %v711 = vld [vmem:[#allocation3 + $0x62] sm:$0xff]
        %v712 = vld [vmem:[#allocation3 + $0x6a] sm:$0xff]
        %v713 = vld [vmem:[#allocation3 + $0x7a] sm:$0xff]
        %v714 = vld [vmem:[#allocation3 + $0x82] sm:$0xff]
        %v715 = vld [vmem:[#allocation3 + $0x92] sm:$0xff]
        %v716 = vld [vmem:[#allocation3 + $0x9a] sm:$0xff]
        %v717 = vld [vmem:[#allocation3 + $0xaa] sm:$0xff]
        %v718 = vld [vmem:[#allocation3 + $0xb2] sm:$0xff]
        %v719 = vld [vmem:[#allocation3 + $0xc2] sm:$0xff]
        %v720 = vld [vmem:[#allocation3 + $0xca] sm:$0xff]
        %v721 = vld [vmem:[#allocation3 + $0xda] sm:$0xff]
        %v722 = vld [vmem:[#allocation3 + $0xe2] sm:$0xff]
        %v723 = vld [vmem:[#allocation3 + $0xf2] sm:$0xff]
        %v724 = vld [vmem:[#allocation3 + $0xfa] sm:$0xff]
        %v725 = vld [vmem:[#allocation3 + $0x10a] sm:$0xff]
        %v726 = vld [vmem:[#allocation3 + $0x112] sm:$0xff]
        %v727 = vld [vmem:[#allocation3 + $0x122] sm:$0xff]
        %v728 = vld [vmem:[#allocation3 + $0x12a] sm:$0xff]
        %v729 = vld [vmem:[#allocation3 + $0x13a] sm:$0xff]
        %v730 = vld [vmem:[#allocation3 + $0x142] sm:$0xff]
        %v731 = vld [vmem:[#allocation3 + $0x152] sm:$0xff]
        %v732 = vld [vmem:[#allocation3 + $0x15a] sm:$0xff]
        %v733 = vld [vmem:[#allocation3 + $0x16a] sm:$0xff]
        %v734 = vld [vmem:[#allocation3 + $0x172] sm:$0xff]
        %v735 = vlaneseq
        %v736 = vshrl.u32 %v735, 7
        %v737 = vsub.s32 2, %v736
        %v738 = vrot.slane %v432, %v737
        %v739 = vmul.f32 %v703, %v738
        %v740 = vmul.f32 %v704, %v738
        %v741 = vmul.f32 %v705, %v738
        %v742 = vmul.f32 %v706, %v738
        %v743 = vmul.f32 %v707, %v738
        %v744 = vmul.f32 %v708, %v738
        %v745 = vmul.f32 %v709, %v738
        %v746 = vmul.f32 %v710, %v738
        %v747 = vmul.f32 %v711, %v738
        %v748 = vmul.f32 %v712, %v738
        %v749 = vmul.f32 %v713, %v738
        %v750 = vmul.f32 %v714, %v738
        %v751 = vmul.f32 %v715, %v738
        %v752 = vmul.f32 %v716, %v738
        %v753 = vmul.f32 %v717, %v738
        %v754 = vmul.f32 %v718, %v738
        %v755 = vmul.f32 %v719, %v738
        %v756 = vmul.f32 %v720, %v738
        %v757 = vmul.f32 %v721, %v738
        %v758 = vmul.f32 %v722, %v738
        %v759 = vmul.f32 %v723, %v738
        %v760 = vmul.f32 %v724, %v738
        %v761 = vmul.f32 %v725, %v738
        %v762 = vmul.f32 %v726, %v738
        %v763 = vmul.f32 %v727, %v738
        %v764 = vmul.f32 %v728, %v738
        %v765 = vmul.f32 %v729, %v738
        %v766 = vmul.f32 %v730, %v738
        %v767 = vmul.f32 %v731, %v738
        %v768 = vmul.f32 %v732, %v738
        %v769 = vmul.f32 %v733, %v738
        %v770 = vmul.f32 %v734, %v738
        %v771 = vadd.f32 %v671, %v739
        %v772 = vadd.f32 %v672, %v740
        %v773 = vadd.f32 %v673, %v741
        %v774 = vadd.f32 %v674, %v742
        %v775 = vadd.f32 %v675, %v743
        %v776 = vadd.f32 %v676, %v744
        %v777 = vadd.f32 %v677, %v745
        %v778 = vadd.f32 %v678, %v746
        %v779 = vadd.f32 %v679, %v747
        %v780 = vadd.f32 %v680, %v748
        %v781 = vadd.f32 %v681, %v749
        %v782 = vadd.f32 %v682, %v750
        %v783 = vadd.f32 %v683, %v751
        %v784 = vadd.f32 %v684, %v752
        %v785 = vadd.f32 %v685, %v753
        %v786 = vadd.f32 %v686, %v754
        %v787 = vadd.f32 %v687, %v755
        %v788 = vadd.f32 %v688, %v756
        %v789 = vadd.f32 %v689, %v757
        %v790 = vadd.f32 %v690, %v758
        %v791 = vadd.f32 %v691, %v759
        %v792 = vadd.f32 %v692, %v760
        %v793 = vadd.f32 %v693, %v761
        %v794 = vadd.f32 %v694, %v762
        %v795 = vadd.f32 %v695, %v763
        %v796 = vadd.f32 %v696, %v764
        %v797 = vadd.f32 %v697, %v765
        %v798 = vadd.f32 %v698, %v766
        %v799 = vadd.f32 %v699, %v767
        %v800 = vadd.f32 %v700, %v768
        %v801 = vadd.f32 %v701, %v769
        %v802 = vadd.f32 %v702, %v770
        %v803 = vld [vmem:[%s502] sm:$0xff]
        %v804 = vld [vmem:[%s502 + $0x8] sm:$0xff]
        %v805 = vld [vmem:[%s502 + $0x18] sm:$0xff]
        %v806 = vld [vmem:[%s502 + $0x20] sm:$0xff]
        %v807 = vld [vmem:[%s502 + $0x30] sm:$0xff]
        %v808 = vld [vmem:[%s502 + $0x38] sm:$0xff]
        %v809 = vld [vmem:[%s502 + $0x48] sm:$0xff]
        %v810 = vld [vmem:[%s502 + $0x50] sm:$0xff]
        %v811 = vld [vmem:[%s502 + $0x60] sm:$0xff]
        %v812 = vld [vmem:[%s502 + $0x68] sm:$0xff]
        %v813 = vld [vmem:[%s502 + $0x78] sm:$0xff]
        %v814 = vld [vmem:[%s502 + $0x80] sm:$0xff]
        %v815 = vld [vmem:[%s502 + $0x90] sm:$0xff]
        %v816 = vld [vmem:[%s502 + $0x98] sm:$0xff]
        %v817 = vld [vmem:[%s502 + $0xa8] sm:$0xff]
        %v818 = vld [vmem:[%s502 + $0xb0] sm:$0xff]
        %v819 = vld [vmem:[%s502 + $0xc0] sm:$0xff]
        %v820 = vld [vmem:[%s502 + $0xc8] sm:$0xff]
        %v821 = vld [vmem:[%s502 + $0xd8] sm:$0xff]
        %v822 = vld [vmem:[%s502 + $0xe0] sm:$0xff]
        %v823 = vld [vmem:[%s502 + $0xf0] sm:$0xff]
        %v824 = vld [vmem:[%s502 + $0xf8] sm:$0xff]
        %v825 = vld [vmem:[%s502 + $0x108] sm:$0xff]
        %v826 = vld [vmem:[%s502 + $0x110] sm:$0xff]
        %v827 = vld [vmem:[%s502 + $0x120] sm:$0xff]
        %v828 = vld [vmem:[%s502 + $0x128] sm:$0xff]
        %v829 = vld [vmem:[%s502 + $0x138] sm:$0xff]
        %v830 = vld [vmem:[%s502 + $0x140] sm:$0xff]
        %v831 = vld [vmem:[%s502 + $0x150] sm:$0xff]
        %v832 = vld [vmem:[%s502 + $0x158] sm:$0xff]
        %v833 = vld [vmem:[%s502 + $0x168] sm:$0xff]
        %v834 = vld [vmem:[%s502 + $0x170] sm:$0xff]
        %v835 = vlaneseq
        %v836 = vshrl.u32 %v835, 7
        %v837 = vsub.s32 3, %v836
        %v838 = vrot.slane %v432, %v837
        %v839 = vmul.f32 %v803, %v838
        %v840 = vmul.f32 %v804, %v838
        %v841 = vmul.f32 %v805, %v838
        %v842 = vmul.f32 %v806, %v838
        %v843 = vmul.f32 %v807, %v838
        %v844 = vmul.f32 %v808, %v838
        %v845 = vmul.f32 %v809, %v838
        %v846 = vmul.f32 %v810, %v838
        %v847 = vmul.f32 %v811, %v838
        %v848 = vmul.f32 %v812, %v838
        %v849 = vmul.f32 %v813, %v838
        %v850 = vmul.f32 %v814, %v838
        %v851 = vmul.f32 %v815, %v838
        %v852 = vmul.f32 %v816, %v838
        %v853 = vmul.f32 %v817, %v838
        %v854 = vmul.f32 %v818, %v838
        %v855 = vmul.f32 %v819, %v838
        %v856 = vmul.f32 %v820, %v838
        %v857 = vmul.f32 %v821, %v838
        %v858 = vmul.f32 %v822, %v838
        %v859 = vmul.f32 %v823, %v838
        %v860 = vmul.f32 %v824, %v838
        %v861 = vmul.f32 %v825, %v838
        %v862 = vmul.f32 %v826, %v838
        %v863 = vmul.f32 %v827, %v838
        %v864 = vmul.f32 %v828, %v838
        %v865 = vmul.f32 %v829, %v838
        %v866 = vmul.f32 %v830, %v838
        %v867 = vmul.f32 %v831, %v838
        %v868 = vmul.f32 %v832, %v838
        %v869 = vmul.f32 %v833, %v838
        %v870 = vmul.f32 %v834, %v838
        %v871 = vadd.f32 %v771, %v839
        %v872 = vadd.f32 %v772, %v840
        %v873 = vadd.f32 %v773, %v841
        %v874 = vadd.f32 %v774, %v842
        %v875 = vadd.f32 %v775, %v843
        %v876 = vadd.f32 %v776, %v844
        %v877 = vadd.f32 %v777, %v845
        %v878 = vadd.f32 %v778, %v846
        %v879 = vadd.f32 %v779, %v847
        %v880 = vadd.f32 %v780, %v848
        %v881 = vadd.f32 %v781, %v849
        %v882 = vadd.f32 %v782, %v850
        %v883 = vadd.f32 %v783, %v851
        %v884 = vadd.f32 %v784, %v852
        %v885 = vadd.f32 %v785, %v853
        %v886 = vadd.f32 %v786, %v854
        %v887 = vadd.f32 %v787, %v855
        %v888 = vadd.f32 %v788, %v856
        %v889 = vadd.f32 %v789, %v857
        %v890 = vadd.f32 %v790, %v858
        %v891 = vadd.f32 %v791, %v859
        %v892 = vadd.f32 %v792, %v860
        %v893 = vadd.f32 %v793, %v861
        %v894 = vadd.f32 %v794, %v862
        %v895 = vadd.f32 %v795, %v863
        %v896 = vadd.f32 %v796, %v864
        %v897 = vadd.f32 %v797, %v865
        %v898 = vadd.f32 %v798, %v866
        %v899 = vadd.f32 %v799, %v867
        %v900 = vadd.f32 %v800, %v868
        %v901 = vadd.f32 %v801, %v869
        %v902 = vadd.f32 %v802, %v870
        %v903 = vld [vmem:[%s502 + $0x1] sm:$0xff]
        %v904 = vld [vmem:[%s502 + $0x9] sm:$0xff]
        %v905 = vld [vmem:[%s502 + $0x19] sm:$0xff]
        %v906 = vld [vmem:[%s502 + $0x21] sm:$0xff]
        %v907 = vld [vmem:[%s502 + $0x31] sm:$0xff]
        %v908 = vld [vmem:[%s502 + $0x39] sm:$0xff]
        %v909 = vld [vmem:[%s502 + $0x49] sm:$0xff]
        %v910 = vld [vmem:[%s502 + $0x51] sm:$0xff]
        %v911 = vld [vmem:[%s502 + $0x61] sm:$0xff]
        %v912 = vld [vmem:[%s502 + $0x69] sm:$0xff]
        %v913 = vld [vmem:[%s502 + $0x79] sm:$0xff]
        %v914 = vld [vmem:[%s502 + $0x81] sm:$0xff]
        %v915 = vld [vmem:[%s502 + $0x91] sm:$0xff]
        %v916 = vld [vmem:[%s502 + $0x99] sm:$0xff]
        %v917 = vld [vmem:[%s502 + $0xa9] sm:$0xff]
        %v918 = vld [vmem:[%s502 + $0xb1] sm:$0xff]
        %v919 = vld [vmem:[%s502 + $0xc1] sm:$0xff]
        %v920 = vld [vmem:[%s502 + $0xc9] sm:$0xff]
        %v921 = vld [vmem:[%s502 + $0xd9] sm:$0xff]
        %v922 = vld [vmem:[%s502 + $0xe1] sm:$0xff]
        %v923 = vld [vmem:[%s502 + $0xf1] sm:$0xff]
        %v924 = vld [vmem:[%s502 + $0xf9] sm:$0xff]
        %v925 = vld [vmem:[%s502 + $0x109] sm:$0xff]
        %v926 = vld [vmem:[%s502 + $0x111] sm:$0xff]
        %v927 = vld [vmem:[%s502 + $0x121] sm:$0xff]
        %v928 = vld [vmem:[%s502 + $0x129] sm:$0xff]
        %v929 = vld [vmem:[%s502 + $0x139] sm:$0xff]
        %v930 = vld [vmem:[%s502 + $0x141] sm:$0xff]
        %v931 = vld [vmem:[%s502 + $0x151] sm:$0xff]
        %v932 = vld [vmem:[%s502 + $0x159] sm:$0xff]
        %v933 = vld [vmem:[%s502 + $0x169] sm:$0xff]
        %v934 = vld [vmem:[%s502 + $0x171] sm:$0xff]
        %v935 = vlaneseq
        %v936 = vshrl.u32 %v935, 7
        %v937 = vsub.s32 4, %v936
        %v938 = vrot.slane %v432, %v937
        %v939 = vmul.f32 %v903, %v938
        %v940 = vmul.f32 %v904, %v938
        %v941 = vmul.f32 %v905, %v938
        %v942 = vmul.f32 %v906, %v938
        %v943 = vmul.f32 %v907, %v938
        %v944 = vmul.f32 %v908, %v938
        %v945 = vmul.f32 %v909, %v938
        %v946 = vmul.f32 %v910, %v938
        %v947 = vmul.f32 %v911, %v938
        %v948 = vmul.f32 %v912, %v938
        %v949 = vmul.f32 %v913, %v938
        %v950 = vmul.f32 %v914, %v938
        %v951 = vmul.f32 %v915, %v938
        %v952 = vmul.f32 %v916, %v938
        %v953 = vmul.f32 %v917, %v938
        %v954 = vmul.f32 %v918, %v938
        %v955 = vmul.f32 %v919, %v938
        %v956 = vmul.f32 %v920, %v938
        %v957 = vmul.f32 %v921, %v938
        %v958 = vmul.f32 %v922, %v938
        %v959 = vmul.f32 %v923, %v938
        %v960 = vmul.f32 %v924, %v938
        %v961 = vmul.f32 %v925, %v938
        %v962 = vmul.f32 %v926, %v938
        %v963 = vmul.f32 %v927, %v938
        %v964 = vmul.f32 %v928, %v938
        %v965 = vmul.f32 %v929, %v938
        %v966 = vmul.f32 %v930, %v938
        %v967 = vmul.f32 %v931, %v938
        %v968 = vmul.f32 %v932, %v938
        %v969 = vmul.f32 %v933, %v938
        %v970 = vmul.f32 %v934, %v938
        %v971 = vadd.f32 %v871, %v939
        %v972 = vadd.f32 %v872, %v940
        %v973 = vadd.f32 %v873, %v941
        %v974 = vadd.f32 %v874, %v942
        %v975 = vadd.f32 %v875, %v943
        %v976 = vadd.f32 %v876, %v944
        %v977 = vadd.f32 %v877, %v945
        %v978 = vadd.f32 %v878, %v946
        %v979 = vadd.f32 %v879, %v947
        %v980 = vadd.f32 %v880, %v948
        %v981 = vadd.f32 %v881, %v949
        %v982 = vadd.f32 %v882, %v950
        %v983 = vadd.f32 %v883, %v951
        %v984 = vadd.f32 %v884, %v952
        %v985 = vadd.f32 %v885, %v953
        %v986 = vadd.f32 %v886, %v954
        %v987 = vadd.f32 %v887, %v955
        %v988 = vadd.f32 %v888, %v956
        %v989 = vadd.f32 %v889, %v957
        %v990 = vadd.f32 %v890, %v958
        %v991 = vadd.f32 %v891, %v959
        %v992 = vadd.f32 %v892, %v960
        %v993 = vadd.f32 %v893, %v961
        %v994 = vadd.f32 %v894, %v962
        %v995 = vadd.f32 %v895, %v963
        %v996 = vadd.f32 %v896, %v964
        %v997 = vadd.f32 %v897, %v965
        %v998 = vadd.f32 %v898, %v966
        %v999 = vadd.f32 %v899, %v967
        %v1000 = vadd.f32 %v900, %v968
        %v1001 = vadd.f32 %v901, %v969
        %v1002 = vadd.f32 %v902, %v970
        %v1003 = vld [vmem:[%s502 + $0x2] sm:$0xff]
        %v1004 = vld [vmem:[%s502 + $0xa] sm:$0xff]
        %v1005 = vld [vmem:[%s502 + $0x1a] sm:$0xff]
        %v1006 = vld [vmem:[%s502 + $0x22] sm:$0xff]
        %v1007 = vld [vmem:[%s502 + $0x32] sm:$0xff]
        %v1008 = vld [vmem:[%s502 + $0x3a] sm:$0xff]
        %v1009 = vld [vmem:[%s502 + $0x4a] sm:$0xff]
        %v1010 = vld [vmem:[%s502 + $0x52] sm:$0xff]
        %v1011 = vld [vmem:[%s502 + $0x62] sm:$0xff]
        %v1012 = vld [vmem:[%s502 + $0x6a] sm:$0xff]
        %v1013 = vld [vmem:[%s502 + $0x7a] sm:$0xff]
        %v1014 = vld [vmem:[%s502 + $0x82] sm:$0xff]
        %v1015 = vld [vmem:[%s502 + $0x92] sm:$0xff]
        %v1016 = vld [vmem:[%s502 + $0x9a] sm:$0xff]
        %v1017 = vld [vmem:[%s502 + $0xaa] sm:$0xff]
        %v1018 = vld [vmem:[%s502 + $0xb2] sm:$0xff]
        %v1019 = vld [vmem:[%s502 + $0xc2] sm:$0xff]
        %v1020 = vld [vmem:[%s502 + $0xca] sm:$0xff]
        %v1021 = vld [vmem:[%s502 + $0xda] sm:$0xff]
        %v1022 = vld [vmem:[%s502 + $0xe2] sm:$0xff]
        %v1023 = vld [vmem:[%s502 + $0xf2] sm:$0xff]
        %v1024 = vld [vmem:[%s502 + $0xfa] sm:$0xff]
        %v1025 = vld [vmem:[%s502 + $0x10a] sm:$0xff]
        %v1026 = vld [vmem:[%s502 + $0x112] sm:$0xff]
        %v1027 = vld [vmem:[%s502 + $0x122] sm:$0xff]
        %v1028 = vld [vmem:[%s502 + $0x12a] sm:$0xff]
        %v1029 = vld [vmem:[%s502 + $0x13a] sm:$0xff]
        %v1030 = vld [vmem:[%s502 + $0x142] sm:$0xff]
        %v1031 = vld [vmem:[%s502 + $0x152] sm:$0xff]
        %v1032 = vld [vmem:[%s502 + $0x15a] sm:$0xff]
        %v1033 = vld [vmem:[%s502 + $0x16a] sm:$0xff]
        %v1034 = vld [vmem:[%s502 + $0x172] sm:$0xff]
        %v1035 = vlaneseq
        %v1036 = vshrl.u32 %v1035, 7
        %v1037 = vsub.s32 5, %v1036
        %v1038 = vrot.slane %v432, %v1037
        %v1039 = vmul.f32 %v1003, %v1038
        %v1040 = vmul.f32 %v1004, %v1038
        %v1041 = vmul.f32 %v1005, %v1038
        %v1042 = vmul.f32 %v1006, %v1038
        %v1043 = vmul.f32 %v1007, %v1038
        %v1044 = vmul.f32 %v1008, %v1038
        %v1045 = vmul.f32 %v1009, %v1038
        %v1046 = vmul.f32 %v1010, %v1038
        %v1047 = vmul.f32 %v1011, %v1038
        %v1048 = vmul.f32 %v1012, %v1038
        %v1049 = vmul.f32 %v1013, %v1038
        %v1050 = vmul.f32 %v1014, %v1038
        %v1051 = vmul.f32 %v1015, %v1038
        %v1052 = vmul.f32 %v1016, %v1038
        %v1053 = vmul.f32 %v1017, %v1038
        %v1054 = vmul.f32 %v1018, %v1038
        %v1055 = vmul.f32 %v1019, %v1038
        %v1056 = vmul.f32 %v1020, %v1038
        %v1057 = vmul.f32 %v1021, %v1038
        %v1058 = vmul.f32 %v1022, %v1038
        %v1059 = vmul.f32 %v1023, %v1038
        %v1060 = vmul.f32 %v1024, %v1038
        %v1061 = vmul.f32 %v1025, %v1038
        %v1062 = vmul.f32 %v1026, %v1038
        %v1063 = vmul.f32 %v1027, %v1038
        %v1064 = vmul.f32 %v1028, %v1038
        %v1065 = vmul.f32 %v1029, %v1038
        %v1066 = vmul.f32 %v1030, %v1038
        %v1067 = vmul.f32 %v1031, %v1038
        %v1068 = vmul.f32 %v1032, %v1038
        %v1069 = vmul.f32 %v1033, %v1038
        %v1070 = vmul.f32 %v1034, %v1038
        %v1071 = vadd.f32 %v971, %v1039
        %v1072 = vadd.f32 %v972, %v1040
        %v1073 = vadd.f32 %v973, %v1041
        %v1074 = vadd.f32 %v974, %v1042
        %v1075 = vadd.f32 %v975, %v1043
        %v1076 = vadd.f32 %v976, %v1044
        %v1077 = vadd.f32 %v977, %v1045
        %v1078 = vadd.f32 %v978, %v1046
        %v1079 = vadd.f32 %v979, %v1047
        %v1080 = vadd.f32 %v980, %v1048
        %v1081 = vadd.f32 %v981, %v1049
        %v1082 = vadd.f32 %v982, %v1050
        %v1083 = vadd.f32 %v983, %v1051
        %v1084 = vadd.f32 %v984, %v1052
        %v1085 = vadd.f32 %v985, %v1053
        %v1086 = vadd.f32 %v986, %v1054
        %v1087 = vadd.f32 %v987, %v1055
        %v1088 = vadd.f32 %v988, %v1056
        %v1089 = vadd.f32 %v989, %v1057
        %v1090 = vadd.f32 %v990, %v1058
        %v1091 = vadd.f32 %v991, %v1059
        %v1092 = vadd.f32 %v992, %v1060
        %v1093 = vadd.f32 %v993, %v1061
        %v1094 = vadd.f32 %v994, %v1062
        %v1095 = vadd.f32 %v995, %v1063
        %v1096 = vadd.f32 %v996, %v1064
        %v1097 = vadd.f32 %v997, %v1065
        %v1098 = vadd.f32 %v998, %v1066
        %v1099 = vadd.f32 %v999, %v1067
        %v1100 = vadd.f32 %v1000, %v1068
        %v1101 = vadd.f32 %v1001, %v1069
        %v1102 = vadd.f32 %v1002, %v1070
        %s1103 = scalar_lea.vmem [#allocation3], 48
        %v1104 = vld [vmem:[%s1103] sm:$0xff]
        %v1105 = vld [vmem:[%s1103 + $0x8] sm:$0xff]
        %v1106 = vld [vmem:[%s1103 + $0x18] sm:$0xff]
        %v1107 = vld [vmem:[%s1103 + $0x20] sm:$0xff]
        %v1108 = vld [vmem:[%s1103 + $0x30] sm:$0xff]
        %v1109 = vld [vmem:[%s1103 + $0x38] sm:$0xff]
        %v1110 = vld [vmem:[%s1103 + $0x48] sm:$0xff]
        %v1111 = vld [vmem:[%s1103 + $0x50] sm:$0xff]
        %v1112 = vld [vmem:[%s1103 + $0x60] sm:$0xff]
        %v1113 = vld [vmem:[%s1103 + $0x68] sm:$0xff]
        %v1114 = vld [vmem:[%s1103 + $0x78] sm:$0xff]
        %v1115 = vld [vmem:[%s1103 + $0x80] sm:$0xff]
        %v1116 = vld [vmem:[%s1103 + $0x90] sm:$0xff]
        %v1117 = vld [vmem:[%s1103 + $0x98] sm:$0xff]
        %v1118 = vld [vmem:[%s1103 + $0xa8] sm:$0xff]
        %v1119 = vld [vmem:[%s1103 + $0xb0] sm:$0xff]
        %v1120 = vld [vmem:[%s1103 + $0xc0] sm:$0xff]
        %v1121 = vld [vmem:[%s1103 + $0xc8] sm:$0xff]
        %v1122 = vld [vmem:[%s1103 + $0xd8] sm:$0xff]
        %v1123 = vld [vmem:[%s1103 + $0xe0] sm:$0xff]
        %v1124 = vld [vmem:[%s1103 + $0xf0] sm:$0xff]
        %v1125 = vld [vmem:[%s1103 + $0xf8] sm:$0xff]
        %v1126 = vld [vmem:[%s1103 + $0x108] sm:$0xff]
        %v1127 = vld [vmem:[%s1103 + $0x110] sm:$0xff]
        %v1128 = vld [vmem:[%s1103 + $0x120] sm:$0xff]
        %v1129 = vld [vmem:[%s1103 + $0x128] sm:$0xff]
        %v1130 = vld [vmem:[%s1103 + $0x138] sm:$0xff]
        %v1131 = vld [vmem:[%s1103 + $0x140] sm:$0xff]
        %v1132 = vld [vmem:[%s1103 + $0x150] sm:$0xff]
        %v1133 = vld [vmem:[%s1103 + $0x158] sm:$0xff]
        %v1134 = vld [vmem:[%s1103 + $0x168] sm:$0xff]
        %v1135 = vld [vmem:[%s1103 + $0x170] sm:$0xff]
        %v1136 = vlaneseq
        %v1137 = vshrl.u32 %v1136, 7
        %v1138 = vsub.s32 6, %v1137
        %v1139 = vrot.slane %v432, %v1138
        %v1140 = vmul.f32 %v1104, %v1139
        %v1141 = vmul.f32 %v1105, %v1139
        %v1142 = vmul.f32 %v1106, %v1139
        %v1143 = vmul.f32 %v1107, %v1139
        %v1144 = vmul.f32 %v1108, %v1139
        %v1145 = vmul.f32 %v1109, %v1139
        %v1146 = vmul.f32 %v1110, %v1139
        %v1147 = vmul.f32 %v1111, %v1139
        %v1148 = vmul.f32 %v1112, %v1139
        %v1149 = vmul.f32 %v1113, %v1139
        %v1150 = vmul.f32 %v1114, %v1139
        %v1151 = vmul.f32 %v1115, %v1139
        %v1152 = vmul.f32 %v1116, %v1139
        %v1153 = vmul.f32 %v1117, %v1139
        %v1154 = vmul.f32 %v1118, %v1139
        %v1155 = vmul.f32 %v1119, %v1139
        %v1156 = vmul.f32 %v1120, %v1139
        %v1157 = vmul.f32 %v1121, %v1139
        %v1158 = vmul.f32 %v1122, %v1139
        %v1159 = vmul.f32 %v1123, %v1139
        %v1160 = vmul.f32 %v1124, %v1139
        %v1161 = vmul.f32 %v1125, %v1139
        %v1162 = vmul.f32 %v1126, %v1139
        %v1163 = vmul.f32 %v1127, %v1139
        %v1164 = vmul.f32 %v1128, %v1139
        %v1165 = vmul.f32 %v1129, %v1139
        %v1166 = vmul.f32 %v1130, %v1139
        %v1167 = vmul.f32 %v1131, %v1139
        %v1168 = vmul.f32 %v1132, %v1139
        %v1169 = vmul.f32 %v1133, %v1139
        %v1170 = vmul.f32 %v1134, %v1139
        %v1171 = vmul.f32 %v1135, %v1139
        %v1172 = vadd.f32 %v1071, %v1140
        %v1173 = vadd.f32 %v1072, %v1141
        %v1174 = vadd.f32 %v1073, %v1142
        %v1175 = vadd.f32 %v1074, %v1143
        %v1176 = vadd.f32 %v1075, %v1144
        %v1177 = vadd.f32 %v1076, %v1145
        %v1178 = vadd.f32 %v1077, %v1146
        %v1179 = vadd.f32 %v1078, %v1147
        %v1180 = vadd.f32 %v1079, %v1148
        %v1181 = vadd.f32 %v1080, %v1149
        %v1182 = vadd.f32 %v1081, %v1150
        %v1183 = vadd.f32 %v1082, %v1151
        %v1184 = vadd.f32 %v1083, %v1152
        %v1185 = vadd.f32 %v1084, %v1153
        %v1186 = vadd.f32 %v1085, %v1154
        %v1187 = vadd.f32 %v1086, %v1155
        %v1188 = vadd.f32 %v1087, %v1156
        %v1189 = vadd.f32 %v1088, %v1157
        %v1190 = vadd.f32 %v1089, %v1158
        %v1191 = vadd.f32 %v1090, %v1159
        %v1192 = vadd.f32 %v1091, %v1160
        %v1193 = vadd.f32 %v1092, %v1161
        %v1194 = vadd.f32 %v1093, %v1162
        %v1195 = vadd.f32 %v1094, %v1163
        %v1196 = vadd.f32 %v1095, %v1164
        %v1197 = vadd.f32 %v1096, %v1165
        %v1198 = vadd.f32 %v1097, %v1166
        %v1199 = vadd.f32 %v1098, %v1167
        %v1200 = vadd.f32 %v1099, %v1168
        %v1201 = vadd.f32 %v1100, %v1169
        %v1202 = vadd.f32 %v1101, %v1170
        %v1203 = vadd.f32 %v1102, %v1171
        %v1204 = vld [vmem:[%s1103 + $0x1] sm:$0xff]
        %v1205 = vld [vmem:[%s1103 + $0x9] sm:$0xff]
        %v1206 = vld [vmem:[%s1103 + $0x19] sm:$0xff]
        %v1207 = vld [vmem:[%s1103 + $0x21] sm:$0xff]
        %v1208 = vld [vmem:[%s1103 + $0x31] sm:$0xff]
        %v1209 = vld [vmem:[%s1103 + $0x39] sm:$0xff]
        %v1210 = vld [vmem:[%s1103 + $0x49] sm:$0xff]
        %v1211 = vld [vmem:[%s1103 + $0x51] sm:$0xff]
        %v1212 = vld [vmem:[%s1103 + $0x61] sm:$0xff]
        %v1213 = vld [vmem:[%s1103 + $0x69] sm:$0xff]
        %v1214 = vld [vmem:[%s1103 + $0x79] sm:$0xff]
        %v1215 = vld [vmem:[%s1103 + $0x81] sm:$0xff]
        %v1216 = vld [vmem:[%s1103 + $0x91] sm:$0xff]
        %v1217 = vld [vmem:[%s1103 + $0x99] sm:$0xff]
        %v1218 = vld [vmem:[%s1103 + $0xa9] sm:$0xff]
        %v1219 = vld [vmem:[%s1103 + $0xb1] sm:$0xff]
        %v1220 = vld [vmem:[%s1103 + $0xc1] sm:$0xff]
        %v1221 = vld [vmem:[%s1103 + $0xc9] sm:$0xff]
        %v1222 = vld [vmem:[%s1103 + $0xd9] sm:$0xff]
        %v1223 = vld [vmem:[%s1103 + $0xe1] sm:$0xff]
        %v1224 = vld [vmem:[%s1103 + $0xf1] sm:$0xff]
        %v1225 = vld [vmem:[%s1103 + $0xf9] sm:$0xff]
        %v1226 = vld [vmem:[%s1103 + $0x109] sm:$0xff]
        %v1227 = vld [vmem:[%s1103 + $0x111] sm:$0xff]
        %v1228 = vld [vmem:[%s1103 + $0x121] sm:$0xff]
        %v1229 = vld [vmem:[%s1103 + $0x129] sm:$0xff]
        %v1230 = vld [vmem:[%s1103 + $0x139] sm:$0xff]
        %v1231 = vld [vmem:[%s1103 + $0x141] sm:$0xff]
        %v1232 = vld [vmem:[%s1103 + $0x151] sm:$0xff]
        %v1233 = vld [vmem:[%s1103 + $0x159] sm:$0xff]
        %v1234 = vld [vmem:[%s1103 + $0x169] sm:$0xff]
        %v1235 = vld [vmem:[%s1103 + $0x171] sm:$0xff]
        %v1236 = vlaneseq
        %v1237 = vshrl.u32 %v1236, 7
        %v1238 = vsub.s32 7, %v1237
        %v1239 = vrot.slane %v432, %v1238
        %v1240 = vmul.f32 %v1204, %v1239
        %v1241 = vmul.f32 %v1205, %v1239
        %v1242 = vmul.f32 %v1206, %v1239
        %v1243 = vmul.f32 %v1207, %v1239
        %v1244 = vmul.f32 %v1208, %v1239
        %v1245 = vmul.f32 %v1209, %v1239
        %v1246 = vmul.f32 %v1210, %v1239
        %v1247 = vmul.f32 %v1211, %v1239
        %v1248 = vmul.f32 %v1212, %v1239
        %v1249 = vmul.f32 %v1213, %v1239
        %v1250 = vmul.f32 %v1214, %v1239
        %v1251 = vmul.f32 %v1215, %v1239
        %v1252 = vmul.f32 %v1216, %v1239
        %v1253 = vmul.f32 %v1217, %v1239
        %v1254 = vmul.f32 %v1218, %v1239
        %v1255 = vmul.f32 %v1219, %v1239
        %v1256 = vmul.f32 %v1220, %v1239
        %v1257 = vmul.f32 %v1221, %v1239
        %v1258 = vmul.f32 %v1222, %v1239
        %v1259 = vmul.f32 %v1223, %v1239
        %v1260 = vmul.f32 %v1224, %v1239
        %v1261 = vmul.f32 %v1225, %v1239
        %v1262 = vmul.f32 %v1226, %v1239
        %v1263 = vmul.f32 %v1227, %v1239
        %v1264 = vmul.f32 %v1228, %v1239
        %v1265 = vmul.f32 %v1229, %v1239
        %v1266 = vmul.f32 %v1230, %v1239
        %v1267 = vmul.f32 %v1231, %v1239
        %v1268 = vmul.f32 %v1232, %v1239
        %v1269 = vmul.f32 %v1233, %v1239
        %v1270 = vmul.f32 %v1234, %v1239
        %v1271 = vmul.f32 %v1235, %v1239
        %v1272 = vadd.f32 %v1172, %v1240
        %v1273 = vadd.f32 %v1173, %v1241
        %v1274 = vadd.f32 %v1174, %v1242
        %v1275 = vadd.f32 %v1175, %v1243
        %v1276 = vadd.f32 %v1176, %v1244
        %v1277 = vadd.f32 %v1177, %v1245
        %v1278 = vadd.f32 %v1178, %v1246
        %v1279 = vadd.f32 %v1179, %v1247
        %v1280 = vadd.f32 %v1180, %v1248
        %v1281 = vadd.f32 %v1181, %v1249
        %v1282 = vadd.f32 %v1182, %v1250
        %v1283 = vadd.f32 %v1183, %v1251
        %v1284 = vadd.f32 %v1184, %v1252
        %v1285 = vadd.f32 %v1185, %v1253
        %v1286 = vadd.f32 %v1186, %v1254
        %v1287 = vadd.f32 %v1187, %v1255
        %v1288 = vadd.f32 %v1188, %v1256
        %v1289 = vadd.f32 %v1189, %v1257
        %v1290 = vadd.f32 %v1190, %v1258
        %v1291 = vadd.f32 %v1191, %v1259
        %v1292 = vadd.f32 %v1192, %v1260
        %v1293 = vadd.f32 %v1193, %v1261
        %v1294 = vadd.f32 %v1194, %v1262
        %v1295 = vadd.f32 %v1195, %v1263
        %v1296 = vadd.f32 %v1196, %v1264
        %v1297 = vadd.f32 %v1197, %v1265
        %v1298 = vadd.f32 %v1198, %v1266
        %v1299 = vadd.f32 %v1199, %v1267
        %v1300 = vadd.f32 %v1200, %v1268
        %v1301 = vadd.f32 %v1201, %v1269
        %v1302 = vadd.f32 %v1202, %v1270
        %v1303 = vadd.f32 %v1203, %v1271
        %v1304 = vld [vmem:[%s1103 + $0x2] sm:$0xff]
        %v1305 = vld [vmem:[%s1103 + $0xa] sm:$0xff]
        %v1306 = vld [vmem:[%s1103 + $0x1a] sm:$0xff]
        %v1307 = vld [vmem:[%s1103 + $0x22] sm:$0xff]
        %v1308 = vld [vmem:[%s1103 + $0x32] sm:$0xff]
        %v1309 = vld [vmem:[%s1103 + $0x3a] sm:$0xff]
        %v1310 = vld [vmem:[%s1103 + $0x4a] sm:$0xff]
        %v1311 = vld [vmem:[%s1103 + $0x52] sm:$0xff]
        %v1312 = vld [vmem:[%s1103 + $0x62] sm:$0xff]
        %v1313 = vld [vmem:[%s1103 + $0x6a] sm:$0xff]
        %v1314 = vld [vmem:[%s1103 + $0x7a] sm:$0xff]
        %v1315 = vld [vmem:[%s1103 + $0x82] sm:$0xff]
        %v1316 = vld [vmem:[%s1103 + $0x92] sm:$0xff]
        %v1317 = vld [vmem:[%s1103 + $0x9a] sm:$0xff]
        %v1318 = vld [vmem:[%s1103 + $0xaa] sm:$0xff]
        %v1319 = vld [vmem:[%s1103 + $0xb2] sm:$0xff]
        %v1320 = vld [vmem:[%s1103 + $0xc2] sm:$0xff]
        %v1321 = vld [vmem:[%s1103 + $0xca] sm:$0xff]
        %v1322 = vld [vmem:[%s1103 + $0xda] sm:$0xff]
        %v1323 = vld [vmem:[%s1103 + $0xe2] sm:$0xff]
        %v1324 = vld [vmem:[%s1103 + $0xf2] sm:$0xff]
        %v1325 = vld [vmem:[%s1103 + $0xfa] sm:$0xff]
        %v1326 = vld [vmem:[%s1103 + $0x10a] sm:$0xff]
        %v1327 = vld [vmem:[%s1103 + $0x112] sm:$0xff]
        %v1328 = vld [vmem:[%s1103 + $0x122] sm:$0xff]
        %v1329 = vld [vmem:[%s1103 + $0x12a] sm:$0xff]
        %v1330 = vld [vmem:[%s1103 + $0x13a] sm:$0xff]
        %v1331 = vld [vmem:[%s1103 + $0x142] sm:$0xff]
        %v1332 = vld [vmem:[%s1103 + $0x152] sm:$0xff]
        %v1333 = vld [vmem:[%s1103 + $0x15a] sm:$0xff]
        %v1334 = vld [vmem:[%s1103 + $0x16a] sm:$0xff]
        %v1335 = vld [vmem:[%s1103 + $0x172] sm:$0xff]
        %v1336 = vlaneseq
        %v1337 = vshrl.u32 %v1336, 7
        %v1338 = vsub.s32 0, %v1337
        %v1339 = vrot.slane %v433, %v1338
        %v1340 = vmul.f32 %v1304, %v1339
        %v1341 = vmul.f32 %v1305, %v1339
        %v1342 = vmul.f32 %v1306, %v1339
        %v1343 = vmul.f32 %v1307, %v1339
        %v1344 = vmul.f32 %v1308, %v1339
        %v1345 = vmul.f32 %v1309, %v1339
        %v1346 = vmul.f32 %v1310, %v1339
        %v1347 = vmul.f32 %v1311, %v1339
        %v1348 = vmul.f32 %v1312, %v1339
        %v1349 = vmul.f32 %v1313, %v1339
        %v1350 = vmul.f32 %v1314, %v1339
        %v1351 = vmul.f32 %v1315, %v1339
        %v1352 = vmul.f32 %v1316, %v1339
        %v1353 = vmul.f32 %v1317, %v1339
        %v1354 = vmul.f32 %v1318, %v1339
        %v1355 = vmul.f32 %v1319, %v1339
        %v1356 = vmul.f32 %v1320, %v1339
        %v1357 = vmul.f32 %v1321, %v1339
        %v1358 = vmul.f32 %v1322, %v1339
        %v1359 = vmul.f32 %v1323, %v1339
        %v1360 = vmul.f32 %v1324, %v1339
        %v1361 = vmul.f32 %v1325, %v1339
        %v1362 = vmul.f32 %v1326, %v1339
        %v1363 = vmul.f32 %v1327, %v1339
        %v1364 = vmul.f32 %v1328, %v1339
        %v1365 = vmul.f32 %v1329, %v1339
        %v1366 = vmul.f32 %v1330, %v1339
        %v1367 = vmul.f32 %v1331, %v1339
        %v1368 = vmul.f32 %v1332, %v1339
        %v1369 = vmul.f32 %v1333, %v1339
        %v1370 = vmul.f32 %v1334, %v1339
        %v1371 = vmul.f32 %v1335, %v1339
        %v1372 = vadd.f32 %v1272, %v1340
        %v1373 = vadd.f32 %v1273, %v1341
        %v1374 = vadd.f32 %v1274, %v1342
        %v1375 = vadd.f32 %v1275, %v1343
        %v1376 = vadd.f32 %v1276, %v1344
        %v1377 = vadd.f32 %v1277, %v1345
        %v1378 = vadd.f32 %v1278, %v1346
        %v1379 = vadd.f32 %v1279, %v1347
        %v1380 = vadd.f32 %v1280, %v1348
        %v1381 = vadd.f32 %v1281, %v1349
        %v1382 = vadd.f32 %v1282, %v1350
        %v1383 = vadd.f32 %v1283, %v1351
        %v1384 = vadd.f32 %v1284, %v1352
        %v1385 = vadd.f32 %v1285, %v1353
        %v1386 = vadd.f32 %v1286, %v1354
        %v1387 = vadd.f32 %v1287, %v1355
        %v1388 = vadd.f32 %v1288, %v1356
        %v1389 = vadd.f32 %v1289, %v1357
        %v1390 = vadd.f32 %v1290, %v1358
        %v1391 = vadd.f32 %v1291, %v1359
        %v1392 = vadd.f32 %v1292, %v1360
        %v1393 = vadd.f32 %v1293, %v1361
        %v1394 = vadd.f32 %v1294, %v1362
        %v1395 = vadd.f32 %v1295, %v1363
        %v1396 = vadd.f32 %v1296, %v1364
        %v1397 = vadd.f32 %v1297, %v1365
        %v1398 = vadd.f32 %v1298, %v1366
        %v1399 = vadd.f32 %v1299, %v1367
        %v1400 = vadd.f32 %v1300, %v1368
        %v1401 = vadd.f32 %v1301, %v1369
        %v1402 = vadd.f32 %v1302, %v1370
        %v1403 = vadd.f32 %v1303, %v1371
        %v1404 = vpack.c.bf16 %v1373, %v1372
        %v1405 = vpack.c.bf16 %v1375, %v1374
        %v1406 = vpack.c.bf16 %v1377, %v1376
        %v1407 = vpack.c.bf16 %v1379, %v1378
        %v1408 = vpack.c.bf16 %v1381, %v1380
        %v1409 = vpack.c.bf16 %v1383, %v1382
        %v1410 = vpack.c.bf16 %v1385, %v1384
        %v1411 = vpack.c.bf16 %v1387, %v1386
        %v1412 = vpack.c.bf16 %v1389, %v1388
        %v1413 = vpack.c.bf16 %v1391, %v1390
        %v1414 = vpack.c.bf16 %v1393, %v1392
        %v1415 = vpack.c.bf16 %v1395, %v1394
        %v1416 = vpack.c.bf16 %v1397, %v1396
        %v1417 = vpack.c.bf16 %v1399, %v1398
        %v1418 = vpack.c.bf16 %v1401, %v1400
        %v1419 = vpack.c.bf16 %v1403, %v1402
        %v1420 = vld [vmem:[%s295] sm:$0xf]
        %v1421 = vld [vmem:[%s295 + $0x4] sm:$0xf]
        %v1422 = vld [vmem:[%s295 + $0x8] sm:$0xf]
        %v1423 = vld [vmem:[%s295 + $0xc] sm:$0xf]
        %v1424 = vld [vmem:[%s295 + $0x10] sm:$0xf]
        %v1425 = vld [vmem:[%s295 + $0x14] sm:$0xf]
        %v1426 = vld [vmem:[%s295 + $0x18] sm:$0xf]
        %v1427 = vld [vmem:[%s295 + $0x1c] sm:$0xf]
        %v1428 = vld [vmem:[%s295 + $0x20] sm:$0xf]
        %v1429 = vld [vmem:[%s295 + $0x24] sm:$0xf]
        %v1430 = vld [vmem:[%s295 + $0x28] sm:$0xf]
        %v1431 = vld [vmem:[%s295 + $0x2c] sm:$0xf]
        %v1432 = vld [vmem:[%s295 + $0x30] sm:$0xf]
        %v1433 = vld [vmem:[%s295 + $0x34] sm:$0xf]
        %v1434 = vld [vmem:[%s295 + $0x38] sm:$0xf]
        %v1435 = vld [vmem:[%s295 + $0x3c] sm:$0xf]
        %v1452 = vunpack.c.l.b16 %v1420
        %v1453 = vunpack.c.l.b16 %v1421
        %v1454 = vunpack.c.l.b16 %v1422
        %v1455 = vunpack.c.l.b16 %v1423
        %v1456 = vunpack.c.l.b16 %v1424
        %v1457 = vunpack.c.l.b16 %v1425
        %v1458 = vunpack.c.l.b16 %v1426
        %v1459 = vunpack.c.l.b16 %v1427
        %v1460 = vunpack.c.l.b16 %v1428
        %v1461 = vunpack.c.l.b16 %v1429
        %v1462 = vunpack.c.l.b16 %v1430
        %v1463 = vunpack.c.l.b16 %v1431
        %v1464 = vunpack.c.l.b16 %v1432
        %v1465 = vunpack.c.l.b16 %v1433
        %v1466 = vunpack.c.l.b16 %v1434
        %v1467 = vunpack.c.l.b16 %v1435
        %v1468 = vpack.c.b16 %v1453, %v1452
        %v1469 = vpack.c.b16 %v1455, %v1454
        %v1470 = vpack.c.b16 %v1457, %v1456
        %v1471 = vpack.c.b16 %v1459, %v1458
        %v1472 = vpack.c.b16 %v1461, %v1460
        %v1473 = vpack.c.b16 %v1463, %v1462
        %v1474 = vpack.c.b16 %v1465, %v1464
        %v1475 = vpack.c.b16 %v1467, %v1466
        %1484 = vmatprep.subr.bf16.mxu0 0
        %1485 = vmatpush1.bf16.msra.mxu0 %v1468
        %1486 = vmatprep.subr.bf16.mxu0 0
        %1487 = vmatpush1.bf16.msra.mxu0 %v1469
        %1488 = vmatprep.subr.bf16.mxu0 0
        %1489 = vmatpush1.bf16.msra.mxu0 %v1470
        %1490 = vmatprep.subr.bf16.mxu0 0
        %1491 = vmatpush1.bf16.msra.mxu0 %v1471
        %1492 = vmatprep.subr.bf16.mxu0 0
        %1493 = vmatpush1.bf16.msra.mxu0 %v1472
        %1494 = vmatprep.subr.bf16.mxu0 0
        %1495 = vmatpush1.bf16.msra.mxu0 %v1473
        %1496 = vmatprep.subr.bf16.mxu0 0
        %1497 = vmatpush1.bf16.msra.mxu0 %v1474
        %1498 = vmatprep.subr.bf16.mxu0 0
        %1499 = vmatpush1.bf16.msra.mxu0 %v1475
        %1500 = vmatprep.subr.bf16.mxu0 0
        %1501 = vmatpush1.bf16.msra.mxu0 0
        %1502 = vmatprep.subr.bf16.mxu0 0
        %1503 = vmatpush1.bf16.msra.mxu0 0
        %1504 = vmatprep.subr.bf16.mxu0 0
        %1505 = vmatpush1.bf16.msra.mxu0 0
        %1506 = vmatprep.subr.bf16.mxu0 0
        %1507 = vmatpush1.bf16.msra.mxu0 0
        %1508 = vmatprep.subr.bf16.mxu0 0
        %1509 = vmatpush1.bf16.msra.mxu0 0
        %1510 = vmatprep.subr.bf16.mxu0 0
        %1511 = vmatpush1.bf16.msra.mxu0 0
        %1512 = vmatprep.subr.bf16.mxu0 0
        %1513 = vmatpush1.bf16.msra.mxu0 0
        %1514 = vmatprep.subr.bf16.mxu0 0
        %1515 = vmatpush1.bf16.msra.mxu0 0
        %1516 = vmatprep.mubr.bf16.mxu0 0
        %1517 = vmatmul.mubr.bf16.gmra.mrb[0].mxu0 %v1404
        %v1518 = vpop.f32.mrb[0].mxu0
        %v1519 = vadd.f32 0.0, %v1518
        %v1520 = vpop.f32.mrb[0].mxu0
        %v1521 = vpop.f32.mrb[0].mxu0
        %v1522 = vadd.f32 0.0, %v1521
        %v1523 = vpop.f32.mrb[0].mxu0
        %1524 = vmatprep.mubr.bf16.mxu0 0
        %1525 = vmatmul.mubr.bf16.gmra.mrb[0].mxu0 %v1405
        %v1526 = vpop.f32.mrb[0].mxu0
        %v1527 = vadd.f32 0.0, %v1526
        %v1528 = vpop.f32.mrb[0].mxu0
        %v1529 = vpop.f32.mrb[0].mxu0
        %v1530 = vadd.f32 0.0, %v1529
        %v1531 = vpop.f32.mrb[0].mxu0
        %1532 = vmatprep.mubr.bf16.mxu0 0
        %1533 = vmatmul.mubr.bf16.gmra.mrb[0].mxu0 %v1406
        %v1534 = vpop.f32.mrb[0].mxu0
        %v1535 = vadd.f32 0.0, %v1534
        %v1536 = vpop.f32.mrb[0].mxu0
        %v1537 = vpop.f32.mrb[0].mxu0
        %v1538 = vadd.f32 0.0, %v1537
        %v1539 = vpop.f32.mrb[0].mxu0
        %1540 = vmatprep.mubr.bf16.mxu0 0
        %1541 = vmatmul.mubr.bf16.gmra.mrb[0].mxu0 %v1407
        %v1542 = vpop.f32.mrb[0].mxu0
        %v1543 = vadd.f32 0.0, %v1542
        %v1544 = vpop.f32.mrb[0].mxu0
        %v1545 = vpop.f32.mrb[0].mxu0
        %v1546 = vadd.f32 0.0, %v1545
        %v1547 = vpop.f32.mrb[0].mxu0
        %1548 = vmatprep.mubr.bf16.mxu0 0
        %1549 = vmatmul.mubr.bf16.gmra.mrb[0].mxu0 %v1408
        %v1550 = vpop.f32.mrb[0].mxu0
        %v1551 = vadd.f32 0.0, %v1550
        %v1552 = vpop.f32.mrb[0].mxu0
        %v1553 = vpop.f32.mrb[0].mxu0
        %v1554 = vadd.f32 0.0, %v1553
        %v1555 = vpop.f32.mrb[0].mxu0
        %1556 = vmatprep.mubr.bf16.mxu0 0
        %1557 = vmatmul.mubr.bf16.gmra.mrb[0].mxu0 %v1409
        %v1558 = vpop.f32.mrb[0].mxu0
        %v1559 = vadd.f32 0.0, %v1558
        %v1560 = vpop.f32.mrb[0].mxu0
        %v1561 = vpop.f32.mrb[0].mxu0
        %v1562 = vadd.f32 0.0, %v1561
        %v1563 = vpop.f32.mrb[0].mxu0
        %1564 = vmatprep.mubr.bf16.mxu0 0
        %1565 = vmatmul.mubr.bf16.gmra.mrb[0].mxu0 %v1410
        %v1566 = vpop.f32.mrb[0].mxu0
        %v1567 = vadd.f32 0.0, %v1566
        %v1568 = vpop.f32.mrb[0].mxu0
        %v1569 = vpop.f32.mrb[0].mxu0
        %v1570 = vadd.f32 0.0, %v1569
        %v1571 = vpop.f32.mrb[0].mxu0
        %1572 = vmatprep.mubr.bf16.mxu0 0
        %1573 = vmatmul.mubr.bf16.gmra.mrb[0].mxu0 %v1411
        %v1574 = vpop.f32.mrb[0].mxu0
        %v1575 = vadd.f32 0.0, %v1574
        %v1576 = vpop.f32.mrb[0].mxu0
        %v1577 = vpop.f32.mrb[0].mxu0
        %v1578 = vadd.f32 0.0, %v1577
        %v1579 = vpop.f32.mrb[0].mxu0
        %1580 = vmatprep.mubr.bf16.mxu0 0
        %1581 = vmatmul.mubr.bf16.gmra.mrb[0].mxu0 %v1412
        %v1582 = vpop.f32.mrb[0].mxu0
        %v1583 = vadd.f32 0.0, %v1582
        %v1584 = vpop.f32.mrb[0].mxu0
        %v1585 = vpop.f32.mrb[0].mxu0
        %v1586 = vadd.f32 0.0, %v1585
        %v1587 = vpop.f32.mrb[0].mxu0
        %1588 = vmatprep.mubr.bf16.mxu0 0
        %1589 = vmatmul.mubr.bf16.gmra.mrb[0].mxu0 %v1413
        %v1590 = vpop.f32.mrb[0].mxu0
        %v1591 = vadd.f32 0.0, %v1590
        %v1592 = vpop.f32.mrb[0].mxu0
        %v1593 = vpop.f32.mrb[0].mxu0
        %v1594 = vadd.f32 0.0, %v1593
        %v1595 = vpop.f32.mrb[0].mxu0
        %1596 = vmatprep.mubr.bf16.mxu0 0
        %1597 = vmatmul.mubr.bf16.gmra.mrb[0].mxu0 %v1414
        %v1598 = vpop.f32.mrb[0].mxu0
        %v1599 = vadd.f32 0.0, %v1598
        %v1600 = vpop.f32.mrb[0].mxu0
        %v1601 = vpop.f32.mrb[0].mxu0
        %v1602 = vadd.f32 0.0, %v1601
        %v1603 = vpop.f32.mrb[0].mxu0
        %1604 = vmatprep.mubr.bf16.mxu0 0
        %1605 = vmatmul.mubr.bf16.gmra.mrb[0].mxu0 %v1415
        %v1606 = vpop.f32.mrb[0].mxu0
        %v1607 = vadd.f32 0.0, %v1606
        %v1608 = vpop.f32.mrb[0].mxu0
        %v1609 = vpop.f32.mrb[0].mxu0
        %v1610 = vadd.f32 0.0, %v1609
        %v1611 = vpop.f32.mrb[0].mxu0
        %1612 = vmatprep.mubr.bf16.mxu0 0
        %1613 = vmatmul.mubr.bf16.gmra.mrb[0].mxu0 %v1416
        %v1614 = vpop.f32.mrb[0].mxu0
        %v1615 = vadd.f32 0.0, %v1614
        %v1616 = vpop.f32.mrb[0].mxu0
        %v1617 = vpop.f32.mrb[0].mxu0
        %v1618 = vadd.f32 0.0, %v1617
        %v1619 = vpop.f32.mrb[0].mxu0
        %1620 = vmatprep.mubr.bf16.mxu0 0
        %1621 = vmatmul.mubr.bf16.gmra.mrb[0].mxu0 %v1417
        %v1622 = vpop.f32.mrb[0].mxu0
        %v1623 = vadd.f32 0.0, %v1622
        %v1624 = vpop.f32.mrb[0].mxu0
        %v1625 = vpop.f32.mrb[0].mxu0
        %v1626 = vadd.f32 0.0, %v1625
        %v1627 = vpop.f32.mrb[0].mxu0
        %1628 = vmatprep.mubr.bf16.mxu0 0
        %1629 = vmatmul.mubr.bf16.gmra.mrb[0].mxu0 %v1418
        %v1630 = vpop.f32.mrb[0].mxu0
        %v1631 = vadd.f32 0.0, %v1630
        %v1632 = vpop.f32.mrb[0].mxu0
        %v1633 = vpop.f32.mrb[0].mxu0
        %v1634 = vadd.f32 0.0, %v1633
        %v1635 = vpop.f32.mrb[0].mxu0
        %1636 = vmatprep.mubr.bf16.mxu0 0
        %1637 = vmatmul.mubr.bf16.gmra.mrb[0].mxu0 %v1419
        %v1638 = vpop.f32.mrb[0].mxu0
        %v1639 = vadd.f32 0.0, %v1638
        %v1640 = vpop.f32.mrb[0].mxu0
        %v1641 = vpop.f32.mrb[0].mxu0
        %v1642 = vadd.f32 0.0, %v1641
        %v1643 = vpop.f32.mrb[0].mxu0
        %1644 = vdwg.mxu0
        %v1645 = vlaneseq
        %v1646 = vshrl.u32 %v1645, 7
        %v1647 = vsub.s32 0, %v1646
        %v1648 = vrot.slane %v436, %v1647
        %v1649 = vmul.f32 %v1519, %v1648
        %v1650 = vmul.f32 %v1522, %v1648
        %v1651 = vmul.f32 %v1527, %v1648
        %v1652 = vmul.f32 %v1530, %v1648
        %v1653 = vmul.f32 %v1535, %v1648
        %v1654 = vmul.f32 %v1538, %v1648
        %v1655 = vmul.f32 %v1543, %v1648
        %v1656 = vmul.f32 %v1546, %v1648
        %v1657 = vmul.f32 %v1551, %v1648
        %v1658 = vmul.f32 %v1554, %v1648
        %v1659 = vmul.f32 %v1559, %v1648
        %v1660 = vmul.f32 %v1562, %v1648
        %v1661 = vmul.f32 %v1567, %v1648
        %v1662 = vmul.f32 %v1570, %v1648
        %v1663 = vmul.f32 %v1575, %v1648
        %v1664 = vmul.f32 %v1578, %v1648
        %v1665 = vmul.f32 %v1583, %v1648
        %v1666 = vmul.f32 %v1586, %v1648
        %v1667 = vmul.f32 %v1591, %v1648
        %v1668 = vmul.f32 %v1594, %v1648
        %v1669 = vmul.f32 %v1599, %v1648
        %v1670 = vmul.f32 %v1602, %v1648
        %v1671 = vmul.f32 %v1607, %v1648
        %v1672 = vmul.f32 %v1610, %v1648
        %v1673 = vmul.f32 %v1615, %v1648
        %v1674 = vmul.f32 %v1618, %v1648
        %v1675 = vmul.f32 %v1623, %v1648
        %v1676 = vmul.f32 %v1626, %v1648
        %v1677 = vmul.f32 %v1631, %v1648
        %v1678 = vmul.f32 %v1634, %v1648
        %v1679 = vmul.f32 %v1639, %v1648
        %v1680 = vmul.f32 %v1642, %v1648
        %v1681 = vlaneseq
        %v1682 = vshrl.u32 %v1681, 7
        %v1683 = vsub.s32 0, %v1682
        %v1684 = vrot.slane %v437, %v1683
        %v1685 = vadd.f32 %v1649, %v1684
        %v1686 = vadd.f32 %v1650, %v1684
        %v1687 = vadd.f32 %v1651, %v1684
        %v1688 = vadd.f32 %v1652, %v1684
        %v1689 = vadd.f32 %v1653, %v1684
        %v1690 = vadd.f32 %v1654, %v1684
        %v1691 = vadd.f32 %v1655, %v1684
        %v1692 = vadd.f32 %v1656, %v1684
        %v1693 = vadd.f32 %v1657, %v1684
        %v1694 = vadd.f32 %v1658, %v1684
        %v1695 = vadd.f32 %v1659, %v1684
        %v1696 = vadd.f32 %v1660, %v1684
        %v1697 = vadd.f32 %v1661, %v1684
        %v1698 = vadd.f32 %v1662, %v1684
        %v1699 = vadd.f32 %v1663, %v1684
        %v1700 = vadd.f32 %v1664, %v1684
        %v1701 = vadd.f32 %v1665, %v1684
        %v1702 = vadd.f32 %v1666, %v1684
        %v1703 = vadd.f32 %v1667, %v1684
        %v1704 = vadd.f32 %v1668, %v1684
        %v1705 = vadd.f32 %v1669, %v1684
        %v1706 = vadd.f32 %v1670, %v1684
        %v1707 = vadd.f32 %v1671, %v1684
        %v1708 = vadd.f32 %v1672, %v1684
        %v1709 = vadd.f32 %v1673, %v1684
        %v1710 = vadd.f32 %v1674, %v1684
        %v1711 = vadd.f32 %v1675, %v1684
        %v1712 = vadd.f32 %v1676, %v1684
        %v1713 = vadd.f32 %v1677, %v1684
        %v1714 = vadd.f32 %v1678, %v1684
        %v1715 = vadd.f32 %v1679, %v1684
        %v1716 = vadd.f32 %v1680, %v1684
        %v1717 = vmax.f32 %v1685, 0.0
        %v1718 = vmax.f32 %v1686, 0.0
        %v1719 = vmax.f32 %v1687, 0.0
        %v1720 = vmax.f32 %v1688, 0.0
        %v1721 = vmax.f32 %v1689, 0.0
        %v1722 = vmax.f32 %v1690, 0.0
        %v1723 = vmax.f32 %v1691, 0.0
        %v1724 = vmax.f32 %v1692, 0.0
        %v1725 = vmax.f32 %v1693, 0.0
        %v1726 = vmax.f32 %v1694, 0.0
        %v1727 = vmax.f32 %v1695, 0.0
        %v1728 = vmax.f32 %v1696, 0.0
        %v1729 = vmax.f32 %v1697, 0.0
        %v1730 = vmax.f32 %v1698, 0.0
        %v1731 = vmax.f32 %v1699, 0.0
        %v1732 = vmax.f32 %v1700, 0.0
        %v1733 = vmax.f32 %v1701, 0.0
        %v1734 = vmax.f32 %v1702, 0.0
        %v1735 = vmax.f32 %v1703, 0.0
        %v1736 = vmax.f32 %v1704, 0.0
        %v1737 = vmax.f32 %v1705, 0.0
        %v1738 = vmax.f32 %v1706, 0.0
        %v1739 = vmax.f32 %v1707, 0.0
        %v1740 = vmax.f32 %v1708, 0.0
        %v1741 = vmax.f32 %v1709, 0.0
        %v1742 = vmax.f32 %v1710, 0.0
        %v1743 = vmax.f32 %v1711, 0.0
        %v1744 = vmax.f32 %v1712, 0.0
        %v1745 = vmax.f32 %v1713, 0.0
        %v1746 = vmax.f32 %v1714, 0.0
        %v1747 = vmax.f32 %v1715, 0.0
        %v1748 = vmax.f32 %v1716, 0.0
        %1749 = vst [vmem:[%s502 + $0x1] sm:$0xff] %v1717
        %1750 = vst [vmem:[%s502 + $0x9] sm:$0xff] %v1718
        %1751 = vst [vmem:[%s502 + $0x19] sm:$0xff] %v1719
        %1752 = vst [vmem:[%s502 + $0x21] sm:$0xff] %v1720
        %1753 = vst [vmem:[%s502 + $0x31] sm:$0xff] %v1721
        %1754 = vst [vmem:[%s502 + $0x39] sm:$0xff] %v1722
        %1755 = vst [vmem:[%s502 + $0x49] sm:$0xff] %v1723
        %1756 = vst [vmem:[%s502 + $0x51] sm:$0xff] %v1724
        %1757 = vst [vmem:[%s502 + $0x61] sm:$0xff] %v1725
        %1758 = vst [vmem:[%s502 + $0x69] sm:$0xff] %v1726
        %1759 = vst [vmem:[%s502 + $0x79] sm:$0xff] %v1727
        %1760 = vst [vmem:[%s502 + $0x81] sm:$0xff] %v1728
        %1761 = vst [vmem:[%s502 + $0x91] sm:$0xff] %v1729
        %1762 = vst [vmem:[%s502 + $0x99] sm:$0xff] %v1730
        %1763 = vst [vmem:[%s502 + $0xa9] sm:$0xff] %v1731
        %1764 = vst [vmem:[%s502 + $0xb1] sm:$0xff] %v1732
        %1765 = vst [vmem:[%s502 + $0xc1] sm:$0xff] %v1733
        %1766 = vst [vmem:[%s502 + $0xc9] sm:$0xff] %v1734
        %1767 = vst [vmem:[%s502 + $0xd9] sm:$0xff] %v1735
        %1768 = vst [vmem:[%s502 + $0xe1] sm:$0xff] %v1736
        %1769 = vst [vmem:[%s502 + $0xf1] sm:$0xff] %v1737
        %1770 = vst [vmem:[%s502 + $0xf9] sm:$0xff] %v1738
        %1771 = vst [vmem:[%s502 + $0x109] sm:$0xff] %v1739
        %1772 = vst [vmem:[%s502 + $0x111] sm:$0xff] %v1740
        %1773 = vst [vmem:[%s502 + $0x121] sm:$0xff] %v1741
        %1774 = vst [vmem:[%s502 + $0x129] sm:$0xff] %v1742
        %1775 = vst [vmem:[%s502 + $0x139] sm:$0xff] %v1743
        %1776 = vst [vmem:[%s502 + $0x141] sm:$0xff] %v1744
        %1777 = vst [vmem:[%s502 + $0x151] sm:$0xff] %v1745
        %1778 = vst [vmem:[%s502 + $0x159] sm:$0xff] %v1746
        %1779 = vst [vmem:[%s502 + $0x169] sm:$0xff] %v1747
        %1780 = vst [vmem:[%s502 + $0x171] sm:$0xff] %v1748
        %v1781 = vld [vmem:[#allocation3] sm:$0xff]
        %v1782 = vld [vmem:[#allocation3 + $0x8] sm:$0xff]
        %v1783 = vld [vmem:[#allocation3 + $0x18] sm:$0xff]
        %v1784 = vld [vmem:[#allocation3 + $0x20] sm:$0xff]
        %v1785 = vld [vmem:[#allocation3 + $0x30] sm:$0xff]
        %v1786 = vld [vmem:[#allocation3 + $0x38] sm:$0xff]
        %v1787 = vld [vmem:[#allocation3 + $0x48] sm:$0xff]
        %v1788 = vld [vmem:[#allocation3 + $0x50] sm:$0xff]
        %v1789 = vld [vmem:[#allocation3 + $0x60] sm:$0xff]
        %v1790 = vld [vmem:[#allocation3 + $0x68] sm:$0xff]
        %v1791 = vld [vmem:[#allocation3 + $0x78] sm:$0xff]
        %v1792 = vld [vmem:[#allocation3 + $0x80] sm:$0xff]
        %v1793 = vld [vmem:[#allocation3 + $0x90] sm:$0xff]
        %v1794 = vld [vmem:[#allocation3 + $0x98] sm:$0xff]
        %v1795 = vld [vmem:[#allocation3 + $0xa8] sm:$0xff]
        %v1796 = vld [vmem:[#allocation3 + $0xb0] sm:$0xff]
        %v1797 = vld [vmem:[#allocation3 + $0xc0] sm:$0xff]
        %v1798 = vld [vmem:[#allocation3 + $0xc8] sm:$0xff]
        %v1799 = vld [vmem:[#allocation3 + $0xd8] sm:$0xff]
        %v1800 = vld [vmem:[#allocation3 + $0xe0] sm:$0xff]
        %v1801 = vld [vmem:[#allocation3 + $0xf0] sm:$0xff]
        %v1802 = vld [vmem:[#allocation3 + $0xf8] sm:$0xff]
        %v1803 = vld [vmem:[#allocation3 + $0x108] sm:$0xff]
        %v1804 = vld [vmem:[#allocation3 + $0x110] sm:$0xff]
        %v1805 = vld [vmem:[#allocation3 + $0x120] sm:$0xff]
        %v1806 = vld [vmem:[#allocation3 + $0x128] sm:$0xff]
        %v1807 = vld [vmem:[#allocation3 + $0x138] sm:$0xff]
        %v1808 = vld [vmem:[#allocation3 + $0x140] sm:$0xff]
        %v1809 = vld [vmem:[#allocation3 + $0x150] sm:$0xff]
        %v1810 = vld [vmem:[#allocation3 + $0x158] sm:$0xff]
        %v1811 = vld [vmem:[#allocation3 + $0x168] sm:$0xff]
        %v1812 = vld [vmem:[#allocation3 + $0x170] sm:$0xff]
        %v1813 = vlaneseq
        %v1814 = vshrl.u32 %v1813, 7
        %v1815 = vsub.s32 1, %v1814
        %v1816 = vrot.slane %v433, %v1815
        %v1817 = vmul.f32 %v1781, %v1816
        %v1818 = vmul.f32 %v1782, %v1816
        %v1819 = vmul.f32 %v1783, %v1816
        %v1820 = vmul.f32 %v1784, %v1816
        %v1821 = vmul.f32 %v1785, %v1816
        %v1822 = vmul.f32 %v1786, %v1816
        %v1823 = vmul.f32 %v1787, %v1816
        %v1824 = vmul.f32 %v1788, %v1816
        %v1825 = vmul.f32 %v1789, %v1816
        %v1826 = vmul.f32 %v1790, %v1816
        %v1827 = vmul.f32 %v1791, %v1816
        %v1828 = vmul.f32 %v1792, %v1816
        %v1829 = vmul.f32 %v1793, %v1816
        %v1830 = vmul.f32 %v1794, %v1816
        %v1831 = vmul.f32 %v1795, %v1816
        %v1832 = vmul.f32 %v1796, %v1816
        %v1833 = vmul.f32 %v1797, %v1816
        %v1834 = vmul.f32 %v1798, %v1816
        %v1835 = vmul.f32 %v1799, %v1816
        %v1836 = vmul.f32 %v1800, %v1816
        %v1837 = vmul.f32 %v1801, %v1816
        %v1838 = vmul.f32 %v1802, %v1816
        %v1839 = vmul.f32 %v1803, %v1816
        %v1840 = vmul.f32 %v1804, %v1816
        %v1841 = vmul.f32 %v1805, %v1816
        %v1842 = vmul.f32 %v1806, %v1816
        %v1843 = vmul.f32 %v1807, %v1816
        %v1844 = vmul.f32 %v1808, %v1816
        %v1845 = vmul.f32 %v1809, %v1816
        %v1846 = vmul.f32 %v1810, %v1816
        %v1847 = vmul.f32 %v1811, %v1816
        %v1848 = vmul.f32 %v1812, %v1816
        %v1849 = vld [vmem:[#allocation3 + $0x1] sm:$0xff]
        %v1850 = vld [vmem:[#allocation3 + $0x9] sm:$0xff]
        %v1851 = vld [vmem:[#allocation3 + $0x19] sm:$0xff]
        %v1852 = vld [vmem:[#allocation3 + $0x21] sm:$0xff]
        %v1853 = vld [vmem:[#allocation3 + $0x31] sm:$0xff]
        %v1854 = vld [vmem:[#allocation3 + $0x39] sm:$0xff]
        %v1855 = vld [vmem:[#allocation3 + $0x49] sm:$0xff]
        %v1856 = vld [vmem:[#allocation3 + $0x51] sm:$0xff]
        %v1857 = vld [vmem:[#allocation3 + $0x61] sm:$0xff]
        %v1858 = vld [vmem:[#allocation3 + $0x69] sm:$0xff]
        %v1859 = vld [vmem:[#allocation3 + $0x79] sm:$0xff]
        %v1860 = vld [vmem:[#allocation3 + $0x81] sm:$0xff]
        %v1861 = vld [vmem:[#allocation3 + $0x91] sm:$0xff]
        %v1862 = vld [vmem:[#allocation3 + $0x99] sm:$0xff]
        %v1863 = vld [vmem:[#allocation3 + $0xa9] sm:$0xff]
        %v1864 = vld [vmem:[#allocation3 + $0xb1] sm:$0xff]
        %v1865 = vld [vmem:[#allocation3 + $0xc1] sm:$0xff]
        %v1866 = vld [vmem:[#allocation3 + $0xc9] sm:$0xff]
        %v1867 = vld [vmem:[#allocation3 + $0xd9] sm:$0xff]
        %v1868 = vld [vmem:[#allocation3 + $0xe1] sm:$0xff]
        %v1869 = vld [vmem:[#allocation3 + $0xf1] sm:$0xff]
        %v1870 = vld [vmem:[#allocation3 + $0xf9] sm:$0xff]
        %v1871 = vld [vmem:[#allocation3 + $0x109] sm:$0xff]
        %v1872 = vld [vmem:[#allocation3 + $0x111] sm:$0xff]
        %v1873 = vld [vmem:[#allocation3 + $0x121] sm:$0xff]
        %v1874 = vld [vmem:[#allocation3 + $0x129] sm:$0xff]
        %v1875 = vld [vmem:[#allocation3 + $0x139] sm:$0xff]
        %v1876 = vld [vmem:[#allocation3 + $0x141] sm:$0xff]
        %v1877 = vld [vmem:[#allocation3 + $0x151] sm:$0xff]
        %v1878 = vld [vmem:[#allocation3 + $0x159] sm:$0xff]
        %v1879 = vld [vmem:[#allocation3 + $0x169] sm:$0xff]
        %v1880 = vld [vmem:[#allocation3 + $0x171] sm:$0xff]
        %v1881 = vlaneseq
        %v1882 = vshrl.u32 %v1881, 7
        %v1883 = vsub.s32 2, %v1882
        %v1884 = vrot.slane %v433, %v1883
        %v1885 = vmul.f32 %v1849, %v1884
        %v1886 = vmul.f32 %v1850, %v1884
        %v1887 = vmul.f32 %v1851, %v1884
        %v1888 = vmul.f32 %v1852, %v1884
        %v1889 = vmul.f32 %v1853, %v1884
        %v1890 = vmul.f32 %v1854, %v1884
        %v1891 = vmul.f32 %v1855, %v1884
        %v1892 = vmul.f32 %v1856, %v1884
        %v1893 = vmul.f32 %v1857, %v1884
        %v1894 = vmul.f32 %v1858, %v1884
        %v1895 = vmul.f32 %v1859, %v1884
        %v1896 = vmul.f32 %v1860, %v1884
        %v1897 = vmul.f32 %v1861, %v1884
        %v1898 = vmul.f32 %v1862, %v1884
        %v1899 = vmul.f32 %v1863, %v1884
        %v1900 = vmul.f32 %v1864, %v1884
        %v1901 = vmul.f32 %v1865, %v1884
        %v1902 = vmul.f32 %v1866, %v1884
        %v1903 = vmul.f32 %v1867, %v1884
        %v1904 = vmul.f32 %v1868, %v1884
        %v1905 = vmul.f32 %v1869, %v1884
        %v1906 = vmul.f32 %v1870, %v1884
        %v1907 = vmul.f32 %v1871, %v1884
        %v1908 = vmul.f32 %v1872, %v1884
        %v1909 = vmul.f32 %v1873, %v1884
        %v1910 = vmul.f32 %v1874, %v1884
        %v1911 = vmul.f32 %v1875, %v1884
        %v1912 = vmul.f32 %v1876, %v1884
        %v1913 = vmul.f32 %v1877, %v1884
        %v1914 = vmul.f32 %v1878, %v1884
        %v1915 = vmul.f32 %v1879, %v1884
        %v1916 = vmul.f32 %v1880, %v1884
        %v1917 = vadd.f32 %v1817, %v1885
        %v1918 = vadd.f32 %v1818, %v1886
        %v1919 = vadd.f32 %v1819, %v1887
        %v1920 = vadd.f32 %v1820, %v1888
        %v1921 = vadd.f32 %v1821, %v1889
        %v1922 = vadd.f32 %v1822, %v1890
        %v1923 = vadd.f32 %v1823, %v1891
        %v1924 = vadd.f32 %v1824, %v1892
        %v1925 = vadd.f32 %v1825, %v1893
        %v1926 = vadd.f32 %v1826, %v1894
        %v1927 = vadd.f32 %v1827, %v1895
        %v1928 = vadd.f32 %v1828, %v1896
        %v1929 = vadd.f32 %v1829, %v1897
        %v1930 = vadd.f32 %v1830, %v1898
        %v1931 = vadd.f32 %v1831, %v1899
        %v1932 = vadd.f32 %v1832, %v1900
        %v1933 = vadd.f32 %v1833, %v1901
        %v1934 = vadd.f32 %v1834, %v1902
        %v1935 = vadd.f32 %v1835, %v1903
        %v1936 = vadd.f32 %v1836, %v1904
        %v1937 = vadd.f32 %v1837, %v1905
        %v1938 = vadd.f32 %v1838, %v1906
        %v1939 = vadd.f32 %v1839, %v1907
        %v1940 = vadd.f32 %v1840, %v1908
        %v1941 = vadd.f32 %v1841, %v1909
        %v1942 = vadd.f32 %v1842, %v1910
        %v1943 = vadd.f32 %v1843, %v1911
        %v1944 = vadd.f32 %v1844, %v1912
        %v1945 = vadd.f32 %v1845, %v1913
        %v1946 = vadd.f32 %v1846, %v1914
        %v1947 = vadd.f32 %v1847, %v1915
        %v1948 = vadd.f32 %v1848, %v1916
        %v1949 = vld [vmem:[#allocation3 + $0x2] sm:$0xff]
        %v1950 = vld [vmem:[#allocation3 + $0xa] sm:$0xff]
        %v1951 = vld [vmem:[#allocation3 + $0x1a] sm:$0xff]
        %v1952 = vld [vmem:[#allocation3 + $0x22] sm:$0xff]
        %v1953 = vld [vmem:[#allocation3 + $0x32] sm:$0xff]
        %v1954 = vld [vmem:[#allocation3 + $0x3a] sm:$0xff]
        %v1955 = vld [vmem:[#allocation3 + $0x4a] sm:$0xff]
        %v1956 = vld [vmem:[#allocation3 + $0x52] sm:$0xff]
        %v1957 = vld [vmem:[#allocation3 + $0x62] sm:$0xff]
        %v1958 = vld [vmem:[#allocation3 + $0x6a] sm:$0xff]
        %v1959 = vld [vmem:[#allocation3 + $0x7a] sm:$0xff]
        %v1960 = vld [vmem:[#allocation3 + $0x82] sm:$0xff]
        %v1961 = vld [vmem:[#allocation3 + $0x92] sm:$0xff]
        %v1962 = vld [vmem:[#allocation3 + $0x9a] sm:$0xff]
        %v1963 = vld [vmem:[#allocation3 + $0xaa] sm:$0xff]
        %v1964 = vld [vmem:[#allocation3 + $0xb2] sm:$0xff]
        %v1965 = vld [vmem:[#allocation3 + $0xc2] sm:$0xff]
        %v1966 = vld [vmem:[#allocation3 + $0xca] sm:$0xff]
        %v1967 = vld [vmem:[#allocation3 + $0xda] sm:$0xff]
        %v1968 = vld [vmem:[#allocation3 + $0xe2] sm:$0xff]
        %v1969 = vld [vmem:[#allocation3 + $0xf2] sm:$0xff]
        %v1970 = vld [vmem:[#allocation3 + $0xfa] sm:$0xff]
        %v1971 = vld [vmem:[#allocation3 + $0x10a] sm:$0xff]
        %v1972 = vld [vmem:[#allocation3 + $0x112] sm:$0xff]
        %v1973 = vld [vmem:[#allocation3 + $0x122] sm:$0xff]
        %v1974 = vld [vmem:[#allocation3 + $0x12a] sm:$0xff]
        %v1975 = vld [vmem:[#allocation3 + $0x13a] sm:$0xff]
        %v1976 = vld [vmem:[#allocation3 + $0x142] sm:$0xff]
        %v1977 = vld [vmem:[#allocation3 + $0x152] sm:$0xff]
        %v1978 = vld [vmem:[#allocation3 + $0x15a] sm:$0xff]
        %v1979 = vld [vmem:[#allocation3 + $0x16a] sm:$0xff]
        %v1980 = vld [vmem:[#allocation3 + $0x172] sm:$0xff]
        %v1981 = vlaneseq
        %v1982 = vshrl.u32 %v1981, 7
        %v1983 = vsub.s32 3, %v1982
        %v1984 = vrot.slane %v433, %v1983
        %v1985 = vmul.f32 %v1949, %v1984
        %v1986 = vmul.f32 %v1950, %v1984
        %v1987 = vmul.f32 %v1951, %v1984
        %v1988 = vmul.f32 %v1952, %v1984
        %v1989 = vmul.f32 %v1953, %v1984
        %v1990 = vmul.f32 %v1954, %v1984
        %v1991 = vmul.f32 %v1955, %v1984
        %v1992 = vmul.f32 %v1956, %v1984
        %v1993 = vmul.f32 %v1957, %v1984
        %v1994 = vmul.f32 %v1958, %v1984
        %v1995 = vmul.f32 %v1959, %v1984
        %v1996 = vmul.f32 %v1960, %v1984
        %v1997 = vmul.f32 %v1961, %v1984
        %v1998 = vmul.f32 %v1962, %v1984
        %v1999 = vmul.f32 %v1963, %v1984
        %v2000 = vmul.f32 %v1964, %v1984
        %v2001 = vmul.f32 %v1965, %v1984
        %v2002 = vmul.f32 %v1966, %v1984
        %v2003 = vmul.f32 %v1967, %v1984
        %v2004 = vmul.f32 %v1968, %v1984
        %v2005 = vmul.f32 %v1969, %v1984
        %v2006 = vmul.f32 %v1970, %v1984
        %v2007 = vmul.f32 %v1971, %v1984
        %v2008 = vmul.f32 %v1972, %v1984
        %v2009 = vmul.f32 %v1973, %v1984
        %v2010 = vmul.f32 %v1974, %v1984
        %v2011 = vmul.f32 %v1975, %v1984
        %v2012 = vmul.f32 %v1976, %v1984
        %v2013 = vmul.f32 %v1977, %v1984
        %v2014 = vmul.f32 %v1978, %v1984
        %v2015 = vmul.f32 %v1979, %v1984
        %v2016 = vmul.f32 %v1980, %v1984
        %v2017 = vadd.f32 %v1917, %v1985
        %v2018 = vadd.f32 %v1918, %v1986
        %v2019 = vadd.f32 %v1919, %v1987
        %v2020 = vadd.f32 %v1920, %v1988
        %v2021 = vadd.f32 %v1921, %v1989
        %v2022 = vadd.f32 %v1922, %v1990
        %v2023 = vadd.f32 %v1923, %v1991
        %v2024 = vadd.f32 %v1924, %v1992
        %v2025 = vadd.f32 %v1925, %v1993
        %v2026 = vadd.f32 %v1926, %v1994
        %v2027 = vadd.f32 %v1927, %v1995
        %v2028 = vadd.f32 %v1928, %v1996
        %v2029 = vadd.f32 %v1929, %v1997
        %v2030 = vadd.f32 %v1930, %v1998
        %v2031 = vadd.f32 %v1931, %v1999
        %v2032 = vadd.f32 %v1932, %v2000
        %v2033 = vadd.f32 %v1933, %v2001
        %v2034 = vadd.f32 %v1934, %v2002
        %v2035 = vadd.f32 %v1935, %v2003
        %v2036 = vadd.f32 %v1936, %v2004
        %v2037 = vadd.f32 %v1937, %v2005
        %v2038 = vadd.f32 %v1938, %v2006
        %v2039 = vadd.f32 %v1939, %v2007
        %v2040 = vadd.f32 %v1940, %v2008
        %v2041 = vadd.f32 %v1941, %v2009
        %v2042 = vadd.f32 %v1942, %v2010
        %v2043 = vadd.f32 %v1943, %v2011
        %v2044 = vadd.f32 %v1944, %v2012
        %v2045 = vadd.f32 %v1945, %v2013
        %v2046 = vadd.f32 %v1946, %v2014
        %v2047 = vadd.f32 %v1947, %v2015
        %v2048 = vadd.f32 %v1948, %v2016
        %v2049 = vld [vmem:[%s502] sm:$0xff]
        %v2050 = vld [vmem:[%s502 + $0x8] sm:$0xff]
        %v2051 = vld [vmem:[%s502 + $0x18] sm:$0xff]
        %v2052 = vld [vmem:[%s502 + $0x20] sm:$0xff]
        %v2053 = vld [vmem:[%s502 + $0x30] sm:$0xff]
        %v2054 = vld [vmem:[%s502 + $0x38] sm:$0xff]
        %v2055 = vld [vmem:[%s502 + $0x48] sm:$0xff]
        %v2056 = vld [vmem:[%s502 + $0x50] sm:$0xff]
        %v2057 = vld [vmem:[%s502 + $0x60] sm:$0xff]
        %v2058 = vld [vmem:[%s502 + $0x68] sm:$0xff]
        %v2059 = vld [vmem:[%s502 + $0x78] sm:$0xff]
        %v2060 = vld [vmem:[%s502 + $0x80] sm:$0xff]
        %v2061 = vld [vmem:[%s502 + $0x90] sm:$0xff]
        %v2062 = vld [vmem:[%s502 + $0x98] sm:$0xff]
        %v2063 = vld [vmem:[%s502 + $0xa8] sm:$0xff]
        %v2064 = vld [vmem:[%s502 + $0xb0] sm:$0xff]
        %v2065 = vld [vmem:[%s502 + $0xc0] sm:$0xff]
        %v2066 = vld [vmem:[%s502 + $0xc8] sm:$0xff]
        %v2067 = vld [vmem:[%s502 + $0xd8] sm:$0xff]
        %v2068 = vld [vmem:[%s502 + $0xe0] sm:$0xff]
        %v2069 = vld [vmem:[%s502 + $0xf0] sm:$0xff]
        %v2070 = vld [vmem:[%s502 + $0xf8] sm:$0xff]
        %v2071 = vld [vmem:[%s502 + $0x108] sm:$0xff]
        %v2072 = vld [vmem:[%s502 + $0x110] sm:$0xff]
        %v2073 = vld [vmem:[%s502 + $0x120] sm:$0xff]
        %v2074 = vld [vmem:[%s502 + $0x128] sm:$0xff]
        %v2075 = vld [vmem:[%s502 + $0x138] sm:$0xff]
        %v2076 = vld [vmem:[%s502 + $0x140] sm:$0xff]
        %v2077 = vld [vmem:[%s502 + $0x150] sm:$0xff]
        %v2078 = vld [vmem:[%s502 + $0x158] sm:$0xff]
        %v2079 = vld [vmem:[%s502 + $0x168] sm:$0xff]
        %v2080 = vld [vmem:[%s502 + $0x170] sm:$0xff]
        %v2081 = vlaneseq
        %v2082 = vshrl.u32 %v2081, 7
        %v2083 = vsub.s32 4, %v2082
        %v2084 = vrot.slane %v433, %v2083
        %v2085 = vmul.f32 %v2049, %v2084
        %v2086 = vmul.f32 %v2050, %v2084
        %v2087 = vmul.f32 %v2051, %v2084
        %v2088 = vmul.f32 %v2052, %v2084
        %v2089 = vmul.f32 %v2053, %v2084
        %v2090 = vmul.f32 %v2054, %v2084
        %v2091 = vmul.f32 %v2055, %v2084
        %v2092 = vmul.f32 %v2056, %v2084
        %v2093 = vmul.f32 %v2057, %v2084
        %v2094 = vmul.f32 %v2058, %v2084
        %v2095 = vmul.f32 %v2059, %v2084
        %v2096 = vmul.f32 %v2060, %v2084
        %v2097 = vmul.f32 %v2061, %v2084
        %v2098 = vmul.f32 %v2062, %v2084
        %v2099 = vmul.f32 %v2063, %v2084
        %v2100 = vmul.f32 %v2064, %v2084
        %v2101 = vmul.f32 %v2065, %v2084
        %v2102 = vmul.f32 %v2066, %v2084
        %v2103 = vmul.f32 %v2067, %v2084
        %v2104 = vmul.f32 %v2068, %v2084
        %v2105 = vmul.f32 %v2069, %v2084
        %v2106 = vmul.f32 %v2070, %v2084
        %v2107 = vmul.f32 %v2071, %v2084
        %v2108 = vmul.f32 %v2072, %v2084
        %v2109 = vmul.f32 %v2073, %v2084
        %v2110 = vmul.f32 %v2074, %v2084
        %v2111 = vmul.f32 %v2075, %v2084
        %v2112 = vmul.f32 %v2076, %v2084
        %v2113 = vmul.f32 %v2077, %v2084
        %v2114 = vmul.f32 %v2078, %v2084
        %v2115 = vmul.f32 %v2079, %v2084
        %v2116 = vmul.f32 %v2080, %v2084
        %v2117 = vadd.f32 %v2017, %v2085
        %v2118 = vadd.f32 %v2018, %v2086
        %v2119 = vadd.f32 %v2019, %v2087
        %v2120 = vadd.f32 %v2020, %v2088
        %v2121 = vadd.f32 %v2021, %v2089
        %v2122 = vadd.f32 %v2022, %v2090
        %v2123 = vadd.f32 %v2023, %v2091
        %v2124 = vadd.f32 %v2024, %v2092
        %v2125 = vadd.f32 %v2025, %v2093
        %v2126 = vadd.f32 %v2026, %v2094
        %v2127 = vadd.f32 %v2027, %v2095
        %v2128 = vadd.f32 %v2028, %v2096
        %v2129 = vadd.f32 %v2029, %v2097
        %v2130 = vadd.f32 %v2030, %v2098
        %v2131 = vadd.f32 %v2031, %v2099
        %v2132 = vadd.f32 %v2032, %v2100
        %v2133 = vadd.f32 %v2033, %v2101
        %v2134 = vadd.f32 %v2034, %v2102
        %v2135 = vadd.f32 %v2035, %v2103
        %v2136 = vadd.f32 %v2036, %v2104
        %v2137 = vadd.f32 %v2037, %v2105
        %v2138 = vadd.f32 %v2038, %v2106
        %v2139 = vadd.f32 %v2039, %v2107
        %v2140 = vadd.f32 %v2040, %v2108
        %v2141 = vadd.f32 %v2041, %v2109
        %v2142 = vadd.f32 %v2042, %v2110
        %v2143 = vadd.f32 %v2043, %v2111
        %v2144 = vadd.f32 %v2044, %v2112
        %v2145 = vadd.f32 %v2045, %v2113
        %v2146 = vadd.f32 %v2046, %v2114
        %v2147 = vadd.f32 %v2047, %v2115
        %v2148 = vadd.f32 %v2048, %v2116
        %v2149 = vld [vmem:[%s502 + $0x1] sm:$0xff]
        %v2150 = vld [vmem:[%s502 + $0x9] sm:$0xff]
        %v2151 = vld [vmem:[%s502 + $0x19] sm:$0xff]
        %v2152 = vld [vmem:[%s502 + $0x21] sm:$0xff]
        %v2153 = vld [vmem:[%s502 + $0x31] sm:$0xff]
        %v2154 = vld [vmem:[%s502 + $0x39] sm:$0xff]
        %v2155 = vld [vmem:[%s502 + $0x49] sm:$0xff]
        %v2156 = vld [vmem:[%s502 + $0x51] sm:$0xff]
        %v2157 = vld [vmem:[%s502 + $0x61] sm:$0xff]
        %v2158 = vld [vmem:[%s502 + $0x69] sm:$0xff]
        %v2159 = vld [vmem:[%s502 + $0x79] sm:$0xff]
        %v2160 = vld [vmem:[%s502 + $0x81] sm:$0xff]
        %v2161 = vld [vmem:[%s502 + $0x91] sm:$0xff]
        %v2162 = vld [vmem:[%s502 + $0x99] sm:$0xff]
        %v2163 = vld [vmem:[%s502 + $0xa9] sm:$0xff]
        %v2164 = vld [vmem:[%s502 + $0xb1] sm:$0xff]
        %v2165 = vld [vmem:[%s502 + $0xc1] sm:$0xff]
        %v2166 = vld [vmem:[%s502 + $0xc9] sm:$0xff]
        %v2167 = vld [vmem:[%s502 + $0xd9] sm:$0xff]
        %v2168 = vld [vmem:[%s502 + $0xe1] sm:$0xff]
        %v2169 = vld [vmem:[%s502 + $0xf1] sm:$0xff]
        %v2170 = vld [vmem:[%s502 + $0xf9] sm:$0xff]
        %v2171 = vld [vmem:[%s502 + $0x109] sm:$0xff]
        %v2172 = vld [vmem:[%s502 + $0x111] sm:$0xff]
        %v2173 = vld [vmem:[%s502 + $0x121] sm:$0xff]
        %v2174 = vld [vmem:[%s502 + $0x129] sm:$0xff]
        %v2175 = vld [vmem:[%s502 + $0x139] sm:$0xff]
        %v2176 = vld [vmem:[%s502 + $0x141] sm:$0xff]
        %v2177 = vld [vmem:[%s502 + $0x151] sm:$0xff]
        %v2178 = vld [vmem:[%s502 + $0x159] sm:$0xff]
        %v2179 = vld [vmem:[%s502 + $0x169] sm:$0xff]
        %v2180 = vld [vmem:[%s502 + $0x171] sm:$0xff]
        %v2181 = vlaneseq
        %v2182 = vshrl.u32 %v2181, 7
        %v2183 = vsub.s32 5, %v2182
        %v2184 = vrot.slane %v433, %v2183
        %v2185 = vmul.f32 %v2149, %v2184
        %v2186 = vmul.f32 %v2150, %v2184
        %v2187 = vmul.f32 %v2151, %v2184
        %v2188 = vmul.f32 %v2152, %v2184
        %v2189 = vmul.f32 %v2153, %v2184
        %v2190 = vmul.f32 %v2154, %v2184
        %v2191 = vmul.f32 %v2155, %v2184
        %v2192 = vmul.f32 %v2156, %v2184
        %v2193 = vmul.f32 %v2157, %v2184
        %v2194 = vmul.f32 %v2158, %v2184
        %v2195 = vmul.f32 %v2159, %v2184
        %v2196 = vmul.f32 %v2160, %v2184
        %v2197 = vmul.f32 %v2161, %v2184
        %v2198 = vmul.f32 %v2162, %v2184
        %v2199 = vmul.f32 %v2163, %v2184
        %v2200 = vmul.f32 %v2164, %v2184
        %v2201 = vmul.f32 %v2165, %v2184
        %v2202 = vmul.f32 %v2166, %v2184
        %v2203 = vmul.f32 %v2167, %v2184
        %v2204 = vmul.f32 %v2168, %v2184
        %v2205 = vmul.f32 %v2169, %v2184
        %v2206 = vmul.f32 %v2170, %v2184
        %v2207 = vmul.f32 %v2171, %v2184
        %v2208 = vmul.f32 %v2172, %v2184
        %v2209 = vmul.f32 %v2173, %v2184
        %v2210 = vmul.f32 %v2174, %v2184
        %v2211 = vmul.f32 %v2175, %v2184
        %v2212 = vmul.f32 %v2176, %v2184
        %v2213 = vmul.f32 %v2177, %v2184
        %v2214 = vmul.f32 %v2178, %v2184
        %v2215 = vmul.f32 %v2179, %v2184
        %v2216 = vmul.f32 %v2180, %v2184
        %v2217 = vadd.f32 %v2117, %v2185
        %v2218 = vadd.f32 %v2118, %v2186
        %v2219 = vadd.f32 %v2119, %v2187
        %v2220 = vadd.f32 %v2120, %v2188
        %v2221 = vadd.f32 %v2121, %v2189
        %v2222 = vadd.f32 %v2122, %v2190
        %v2223 = vadd.f32 %v2123, %v2191
        %v2224 = vadd.f32 %v2124, %v2192
        %v2225 = vadd.f32 %v2125, %v2193
        %v2226 = vadd.f32 %v2126, %v2194
        %v2227 = vadd.f32 %v2127, %v2195
        %v2228 = vadd.f32 %v2128, %v2196
        %v2229 = vadd.f32 %v2129, %v2197
        %v2230 = vadd.f32 %v2130, %v2198
        %v2231 = vadd.f32 %v2131, %v2199
        %v2232 = vadd.f32 %v2132, %v2200
        %v2233 = vadd.f32 %v2133, %v2201
        %v2234 = vadd.f32 %v2134, %v2202
        %v2235 = vadd.f32 %v2135, %v2203
        %v2236 = vadd.f32 %v2136, %v2204
        %v2237 = vadd.f32 %v2137, %v2205
        %v2238 = vadd.f32 %v2138, %v2206
        %v2239 = vadd.f32 %v2139, %v2207
        %v2240 = vadd.f32 %v2140, %v2208
        %v2241 = vadd.f32 %v2141, %v2209
        %v2242 = vadd.f32 %v2142, %v2210
        %v2243 = vadd.f32 %v2143, %v2211
        %v2244 = vadd.f32 %v2144, %v2212
        %v2245 = vadd.f32 %v2145, %v2213
        %v2246 = vadd.f32 %v2146, %v2214
        %v2247 = vadd.f32 %v2147, %v2215
        %v2248 = vadd.f32 %v2148, %v2216
        %v2249 = vld [vmem:[%s502 + $0x2] sm:$0xff]
        %v2250 = vld [vmem:[%s502 + $0xa] sm:$0xff]
        %v2251 = vld [vmem:[%s502 + $0x1a] sm:$0xff]
        %v2252 = vld [vmem:[%s502 + $0x22] sm:$0xff]
        %v2253 = vld [vmem:[%s502 + $0x32] sm:$0xff]
        %v2254 = vld [vmem:[%s502 + $0x3a] sm:$0xff]
        %v2255 = vld [vmem:[%s502 + $0x4a] sm:$0xff]
        %v2256 = vld [vmem:[%s502 + $0x52] sm:$0xff]
        %v2257 = vld [vmem:[%s502 + $0x62] sm:$0xff]
        %v2258 = vld [vmem:[%s502 + $0x6a] sm:$0xff]
        %v2259 = vld [vmem:[%s502 + $0x7a] sm:$0xff]
        %v2260 = vld [vmem:[%s502 + $0x82] sm:$0xff]
        %v2261 = vld [vmem:[%s502 + $0x92] sm:$0xff]
        %v2262 = vld [vmem:[%s502 + $0x9a] sm:$0xff]
        %v2263 = vld [vmem:[%s502 + $0xaa] sm:$0xff]
        %v2264 = vld [vmem:[%s502 + $0xb2] sm:$0xff]
        %v2265 = vld [vmem:[%s502 + $0xc2] sm:$0xff]
        %v2266 = vld [vmem:[%s502 + $0xca] sm:$0xff]
        %v2267 = vld [vmem:[%s502 + $0xda] sm:$0xff]
        %v2268 = vld [vmem:[%s502 + $0xe2] sm:$0xff]
        %v2269 = vld [vmem:[%s502 + $0xf2] sm:$0xff]
        %v2270 = vld [vmem:[%s502 + $0xfa] sm:$0xff]
        %v2271 = vld [vmem:[%s502 + $0x10a] sm:$0xff]
        %v2272 = vld [vmem:[%s502 + $0x112] sm:$0xff]
        %v2273 = vld [vmem:[%s502 + $0x122] sm:$0xff]
        %v2274 = vld [vmem:[%s502 + $0x12a] sm:$0xff]
        %v2275 = vld [vmem:[%s502 + $0x13a] sm:$0xff]
        %v2276 = vld [vmem:[%s502 + $0x142] sm:$0xff]
        %v2277 = vld [vmem:[%s502 + $0x152] sm:$0xff]
        %v2278 = vld [vmem:[%s502 + $0x15a] sm:$0xff]
        %v2279 = vld [vmem:[%s502 + $0x16a] sm:$0xff]
        %v2280 = vld [vmem:[%s502 + $0x172] sm:$0xff]
        %v2281 = vlaneseq
        %v2282 = vshrl.u32 %v2281, 7
        %v2283 = vsub.s32 6, %v2282
        %v2284 = vrot.slane %v433, %v2283
        %v2285 = vmul.f32 %v2249, %v2284
        %v2286 = vmul.f32 %v2250, %v2284
        %v2287 = vmul.f32 %v2251, %v2284
        %v2288 = vmul.f32 %v2252, %v2284
        %v2289 = vmul.f32 %v2253, %v2284
        %v2290 = vmul.f32 %v2254, %v2284
        %v2291 = vmul.f32 %v2255, %v2284
        %v2292 = vmul.f32 %v2256, %v2284
        %v2293 = vmul.f32 %v2257, %v2284
        %v2294 = vmul.f32 %v2258, %v2284
        %v2295 = vmul.f32 %v2259, %v2284
        %v2296 = vmul.f32 %v2260, %v2284
        %v2297 = vmul.f32 %v2261, %v2284
        %v2298 = vmul.f32 %v2262, %v2284
        %v2299 = vmul.f32 %v2263, %v2284
        %v2300 = vmul.f32 %v2264, %v2284
        %v2301 = vmul.f32 %v2265, %v2284
        %v2302 = vmul.f32 %v2266, %v2284
        %v2303 = vmul.f32 %v2267, %v2284
        %v2304 = vmul.f32 %v2268, %v2284
        %v2305 = vmul.f32 %v2269, %v2284
        %v2306 = vmul.f32 %v2270, %v2284
        %v2307 = vmul.f32 %v2271, %v2284
        %v2308 = vmul.f32 %v2272, %v2284
        %v2309 = vmul.f32 %v2273, %v2284
        %v2310 = vmul.f32 %v2274, %v2284
        %v2311 = vmul.f32 %v2275, %v2284
        %v2312 = vmul.f32 %v2276, %v2284
        %v2313 = vmul.f32 %v2277, %v2284
        %v2314 = vmul.f32 %v2278, %v2284
        %v2315 = vmul.f32 %v2279, %v2284
        %v2316 = vmul.f32 %v2280, %v2284
        %v2317 = vadd.f32 %v2217, %v2285
        %v2318 = vadd.f32 %v2218, %v2286
        %v2319 = vadd.f32 %v2219, %v2287
        %v2320 = vadd.f32 %v2220, %v2288
        %v2321 = vadd.f32 %v2221, %v2289
        %v2322 = vadd.f32 %v2222, %v2290
        %v2323 = vadd.f32 %v2223, %v2291
        %v2324 = vadd.f32 %v2224, %v2292
        %v2325 = vadd.f32 %v2225, %v2293
        %v2326 = vadd.f32 %v2226, %v2294
        %v2327 = vadd.f32 %v2227, %v2295
        %v2328 = vadd.f32 %v2228, %v2296
        %v2329 = vadd.f32 %v2229, %v2297
        %v2330 = vadd.f32 %v2230, %v2298
        %v2331 = vadd.f32 %v2231, %v2299
        %v2332 = vadd.f32 %v2232, %v2300
        %v2333 = vadd.f32 %v2233, %v2301
        %v2334 = vadd.f32 %v2234, %v2302
        %v2335 = vadd.f32 %v2235, %v2303
        %v2336 = vadd.f32 %v2236, %v2304
        %v2337 = vadd.f32 %v2237, %v2305
        %v2338 = vadd.f32 %v2238, %v2306
        %v2339 = vadd.f32 %v2239, %v2307
        %v2340 = vadd.f32 %v2240, %v2308
        %v2341 = vadd.f32 %v2241, %v2309
        %v2342 = vadd.f32 %v2242, %v2310
        %v2343 = vadd.f32 %v2243, %v2311
        %v2344 = vadd.f32 %v2244, %v2312
        %v2345 = vadd.f32 %v2245, %v2313
        %v2346 = vadd.f32 %v2246, %v2314
        %v2347 = vadd.f32 %v2247, %v2315
        %v2348 = vadd.f32 %v2248, %v2316
        %v2349 = vld [vmem:[%s1103] sm:$0xff]
        %v2350 = vld [vmem:[%s1103 + $0x8] sm:$0xff]
        %v2351 = vld [vmem:[%s1103 + $0x18] sm:$0xff]
        %v2352 = vld [vmem:[%s1103 + $0x20] sm:$0xff]
        %v2353 = vld [vmem:[%s1103 + $0x30] sm:$0xff]
        %v2354 = vld [vmem:[%s1103 + $0x38] sm:$0xff]
        %v2355 = vld [vmem:[%s1103 + $0x48] sm:$0xff]
        %v2356 = vld [vmem:[%s1103 + $0x50] sm:$0xff]
        %v2357 = vld [vmem:[%s1103 + $0x60] sm:$0xff]
        %v2358 = vld [vmem:[%s1103 + $0x68] sm:$0xff]
        %v2359 = vld [vmem:[%s1103 + $0x78] sm:$0xff]
        %v2360 = vld [vmem:[%s1103 + $0x80] sm:$0xff]
        %v2361 = vld [vmem:[%s1103 + $0x90] sm:$0xff]
        %v2362 = vld [vmem:[%s1103 + $0x98] sm:$0xff]
        %v2363 = vld [vmem:[%s1103 + $0xa8] sm:$0xff]
        %v2364 = vld [vmem:[%s1103 + $0xb0] sm:$0xff]
        %v2365 = vld [vmem:[%s1103 + $0xc0] sm:$0xff]
        %v2366 = vld [vmem:[%s1103 + $0xc8] sm:$0xff]
        %v2367 = vld [vmem:[%s1103 + $0xd8] sm:$0xff]
        %v2368 = vld [vmem:[%s1103 + $0xe0] sm:$0xff]
        %v2369 = vld [vmem:[%s1103 + $0xf0] sm:$0xff]
        %v2370 = vld [vmem:[%s1103 + $0xf8] sm:$0xff]
        %v2371 = vld [vmem:[%s1103 + $0x108] sm:$0xff]
        %v2372 = vld [vmem:[%s1103 + $0x110] sm:$0xff]
        %v2373 = vld [vmem:[%s1103 + $0x120] sm:$0xff]
        %v2374 = vld [vmem:[%s1103 + $0x128] sm:$0xff]
        %v2375 = vld [vmem:[%s1103 + $0x138] sm:$0xff]
        %v2376 = vld [vmem:[%s1103 + $0x140] sm:$0xff]
        %v2377 = vld [vmem:[%s1103 + $0x150] sm:$0xff]
        %v2378 = vld [vmem:[%s1103 + $0x158] sm:$0xff]
        %v2379 = vld [vmem:[%s1103 + $0x168] sm:$0xff]
        %v2380 = vld [vmem:[%s1103 + $0x170] sm:$0xff]
        %v2381 = vlaneseq
        %v2382 = vshrl.u32 %v2381, 7
        %v2383 = vsub.s32 7, %v2382
        %v2384 = vrot.slane %v433, %v2383
        %v2385 = vmul.f32 %v2349, %v2384
        %v2386 = vmul.f32 %v2350, %v2384
        %v2387 = vmul.f32 %v2351, %v2384
        %v2388 = vmul.f32 %v2352, %v2384
        %v2389 = vmul.f32 %v2353, %v2384
        %v2390 = vmul.f32 %v2354, %v2384
        %v2391 = vmul.f32 %v2355, %v2384
        %v2392 = vmul.f32 %v2356, %v2384
        %v2393 = vmul.f32 %v2357, %v2384
        %v2394 = vmul.f32 %v2358, %v2384
        %v2395 = vmul.f32 %v2359, %v2384
        %v2396 = vmul.f32 %v2360, %v2384
        %v2397 = vmul.f32 %v2361, %v2384
        %v2398 = vmul.f32 %v2362, %v2384
        %v2399 = vmul.f32 %v2363, %v2384
        %v2400 = vmul.f32 %v2364, %v2384
        %v2401 = vmul.f32 %v2365, %v2384
        %v2402 = vmul.f32 %v2366, %v2384
        %v2403 = vmul.f32 %v2367, %v2384
        %v2404 = vmul.f32 %v2368, %v2384
        %v2405 = vmul.f32 %v2369, %v2384
        %v2406 = vmul.f32 %v2370, %v2384
        %v2407 = vmul.f32 %v2371, %v2384
        %v2408 = vmul.f32 %v2372, %v2384
        %v2409 = vmul.f32 %v2373, %v2384
        %v2410 = vmul.f32 %v2374, %v2384
        %v2411 = vmul.f32 %v2375, %v2384
        %v2412 = vmul.f32 %v2376, %v2384
        %v2413 = vmul.f32 %v2377, %v2384
        %v2414 = vmul.f32 %v2378, %v2384
        %v2415 = vmul.f32 %v2379, %v2384
        %v2416 = vmul.f32 %v2380, %v2384
        %v2417 = vadd.f32 %v2317, %v2385
        %v2418 = vadd.f32 %v2318, %v2386
        %v2419 = vadd.f32 %v2319, %v2387
        %v2420 = vadd.f32 %v2320, %v2388
        %v2421 = vadd.f32 %v2321, %v2389
        %v2422 = vadd.f32 %v2322, %v2390
        %v2423 = vadd.f32 %v2323, %v2391
        %v2424 = vadd.f32 %v2324, %v2392
        %v2425 = vadd.f32 %v2325, %v2393
        %v2426 = vadd.f32 %v2326, %v2394
        %v2427 = vadd.f32 %v2327, %v2395
        %v2428 = vadd.f32 %v2328, %v2396
        %v2429 = vadd.f32 %v2329, %v2397
        %v2430 = vadd.f32 %v2330, %v2398
        %v2431 = vadd.f32 %v2331, %v2399
        %v2432 = vadd.f32 %v2332, %v2400
        %v2433 = vadd.f32 %v2333, %v2401
        %v2434 = vadd.f32 %v2334, %v2402
        %v2435 = vadd.f32 %v2335, %v2403
        %v2436 = vadd.f32 %v2336, %v2404
        %v2437 = vadd.f32 %v2337, %v2405
        %v2438 = vadd.f32 %v2338, %v2406
        %v2439 = vadd.f32 %v2339, %v2407
        %v2440 = vadd.f32 %v2340, %v2408
        %v2441 = vadd.f32 %v2341, %v2409
        %v2442 = vadd.f32 %v2342, %v2410
        %v2443 = vadd.f32 %v2343, %v2411
        %v2444 = vadd.f32 %v2344, %v2412
        %v2445 = vadd.f32 %v2345, %v2413
        %v2446 = vadd.f32 %v2346, %v2414
        %v2447 = vadd.f32 %v2347, %v2415
        %v2448 = vadd.f32 %v2348, %v2416
        %v2449 = vld [vmem:[%s1103 + $0x1] sm:$0xff]
        %v2450 = vld [vmem:[%s1103 + $0x9] sm:$0xff]
        %v2451 = vld [vmem:[%s1103 + $0x19] sm:$0xff]
        %v2452 = vld [vmem:[%s1103 + $0x21] sm:$0xff]
        %v2453 = vld [vmem:[%s1103 + $0x31] sm:$0xff]
        %v2454 = vld [vmem:[%s1103 + $0x39] sm:$0xff]
        %v2455 = vld [vmem:[%s1103 + $0x49] sm:$0xff]
        %v2456 = vld [vmem:[%s1103 + $0x51] sm:$0xff]
        %v2457 = vld [vmem:[%s1103 + $0x61] sm:$0xff]
        %v2458 = vld [vmem:[%s1103 + $0x69] sm:$0xff]
        %v2459 = vld [vmem:[%s1103 + $0x79] sm:$0xff]
        %v2460 = vld [vmem:[%s1103 + $0x81] sm:$0xff]
        %v2461 = vld [vmem:[%s1103 + $0x91] sm:$0xff]
        %v2462 = vld [vmem:[%s1103 + $0x99] sm:$0xff]
        %v2463 = vld [vmem:[%s1103 + $0xa9] sm:$0xff]
        %v2464 = vld [vmem:[%s1103 + $0xb1] sm:$0xff]
        %v2465 = vld [vmem:[%s1103 + $0xc1] sm:$0xff]
        %v2466 = vld [vmem:[%s1103 + $0xc9] sm:$0xff]
        %v2467 = vld [vmem:[%s1103 + $0xd9] sm:$0xff]
        %v2468 = vld [vmem:[%s1103 + $0xe1] sm:$0xff]
        %v2469 = vld [vmem:[%s1103 + $0xf1] sm:$0xff]
        %v2470 = vld [vmem:[%s1103 + $0xf9] sm:$0xff]
        %v2471 = vld [vmem:[%s1103 + $0x109] sm:$0xff]
        %v2472 = vld [vmem:[%s1103 + $0x111] sm:$0xff]
        %v2473 = vld [vmem:[%s1103 + $0x121] sm:$0xff]
        %v2474 = vld [vmem:[%s1103 + $0x129] sm:$0xff]
        %v2475 = vld [vmem:[%s1103 + $0x139] sm:$0xff]
        %v2476 = vld [vmem:[%s1103 + $0x141] sm:$0xff]
        %v2477 = vld [vmem:[%s1103 + $0x151] sm:$0xff]
        %v2478 = vld [vmem:[%s1103 + $0x159] sm:$0xff]
        %v2479 = vld [vmem:[%s1103 + $0x169] sm:$0xff]
        %v2480 = vld [vmem:[%s1103 + $0x171] sm:$0xff]
        %v2481 = vlaneseq
        %v2482 = vshrl.u32 %v2481, 7
        %v2483 = vsub.s32 0, %v2482
        %v2484 = vrot.slane %v434, %v2483
        %v2485 = vmul.f32 %v2449, %v2484
        %v2486 = vmul.f32 %v2450, %v2484
        %v2487 = vmul.f32 %v2451, %v2484
        %v2488 = vmul.f32 %v2452, %v2484
        %v2489 = vmul.f32 %v2453, %v2484
        %v2490 = vmul.f32 %v2454, %v2484
        %v2491 = vmul.f32 %v2455, %v2484
        %v2492 = vmul.f32 %v2456, %v2484
        %v2493 = vmul.f32 %v2457, %v2484
        %v2494 = vmul.f32 %v2458, %v2484
        %v2495 = vmul.f32 %v2459, %v2484
        %v2496 = vmul.f32 %v2460, %v2484
        %v2497 = vmul.f32 %v2461, %v2484
        %v2498 = vmul.f32 %v2462, %v2484
        %v2499 = vmul.f32 %v2463, %v2484
        %v2500 = vmul.f32 %v2464, %v2484
        %v2501 = vmul.f32 %v2465, %v2484
        %v2502 = vmul.f32 %v2466, %v2484
        %v2503 = vmul.f32 %v2467, %v2484
        %v2504 = vmul.f32 %v2468, %v2484
        %v2505 = vmul.f32 %v2469, %v2484
        %v2506 = vmul.f32 %v2470, %v2484
        %v2507 = vmul.f32 %v2471, %v2484
        %v2508 = vmul.f32 %v2472, %v2484
        %v2509 = vmul.f32 %v2473, %v2484
        %v2510 = vmul.f32 %v2474, %v2484
        %v2511 = vmul.f32 %v2475, %v2484
        %v2512 = vmul.f32 %v2476, %v2484
        %v2513 = vmul.f32 %v2477, %v2484
        %v2514 = vmul.f32 %v2478, %v2484
        %v2515 = vmul.f32 %v2479, %v2484
        %v2516 = vmul.f32 %v2480, %v2484
        %v2517 = vadd.f32 %v2417, %v2485
        %v2518 = vadd.f32 %v2418, %v2486
        %v2519 = vadd.f32 %v2419, %v2487
        %v2520 = vadd.f32 %v2420, %v2488
        %v2521 = vadd.f32 %v2421, %v2489
        %v2522 = vadd.f32 %v2422, %v2490
        %v2523 = vadd.f32 %v2423, %v2491
        %v2524 = vadd.f32 %v2424, %v2492
        %v2525 = vadd.f32 %v2425, %v2493
        %v2526 = vadd.f32 %v2426, %v2494
        %v2527 = vadd.f32 %v2427, %v2495
        %v2528 = vadd.f32 %v2428, %v2496
        %v2529 = vadd.f32 %v2429, %v2497
        %v2530 = vadd.f32 %v2430, %v2498
        %v2531 = vadd.f32 %v2431, %v2499
        %v2532 = vadd.f32 %v2432, %v2500
        %v2533 = vadd.f32 %v2433, %v2501
        %v2534 = vadd.f32 %v2434, %v2502
        %v2535 = vadd.f32 %v2435, %v2503
        %v2536 = vadd.f32 %v2436, %v2504
        %v2537 = vadd.f32 %v2437, %v2505
        %v2538 = vadd.f32 %v2438, %v2506
        %v2539 = vadd.f32 %v2439, %v2507
        %v2540 = vadd.f32 %v2440, %v2508
        %v2541 = vadd.f32 %v2441, %v2509
        %v2542 = vadd.f32 %v2442, %v2510
        %v2543 = vadd.f32 %v2443, %v2511
        %v2544 = vadd.f32 %v2444, %v2512
        %v2545 = vadd.f32 %v2445, %v2513
        %v2546 = vadd.f32 %v2446, %v2514
        %v2547 = vadd.f32 %v2447, %v2515
        %v2548 = vadd.f32 %v2448, %v2516
        %v2549 = vld [vmem:[%s1103 + $0x2] sm:$0xff]
        %v2550 = vld [vmem:[%s1103 + $0xa] sm:$0xff]
        %v2551 = vld [vmem:[%s1103 + $0x1a] sm:$0xff]
        %v2552 = vld [vmem:[%s1103 + $0x22] sm:$0xff]
        %v2553 = vld [vmem:[%s1103 + $0x32] sm:$0xff]
        %v2554 = vld [vmem:[%s1103 + $0x3a] sm:$0xff]
        %v2555 = vld [vmem:[%s1103 + $0x4a] sm:$0xff]
        %v2556 = vld [vmem:[%s1103 + $0x52] sm:$0xff]
        %v2557 = vld [vmem:[%s1103 + $0x62] sm:$0xff]
        %v2558 = vld [vmem:[%s1103 + $0x6a] sm:$0xff]
        %v2559 = vld [vmem:[%s1103 + $0x7a] sm:$0xff]
        %v2560 = vld [vmem:[%s1103 + $0x82] sm:$0xff]
        %v2561 = vld [vmem:[%s1103 + $0x92] sm:$0xff]
        %v2562 = vld [vmem:[%s1103 + $0x9a] sm:$0xff]
        %v2563 = vld [vmem:[%s1103 + $0xaa] sm:$0xff]
        %v2564 = vld [vmem:[%s1103 + $0xb2] sm:$0xff]
        %v2565 = vld [vmem:[%s1103 + $0xc2] sm:$0xff]
        %v2566 = vld [vmem:[%s1103 + $0xca] sm:$0xff]
        %v2567 = vld [vmem:[%s1103 + $0xda] sm:$0xff]
        %v2568 = vld [vmem:[%s1103 + $0xe2] sm:$0xff]
        %v2569 = vld [vmem:[%s1103 + $0xf2] sm:$0xff]
        %v2570 = vld [vmem:[%s1103 + $0xfa] sm:$0xff]
        %v2571 = vld [vmem:[%s1103 + $0x10a] sm:$0xff]
        %v2572 = vld [vmem:[%s1103 + $0x112] sm:$0xff]
        %v2573 = vld [vmem:[%s1103 + $0x122] sm:$0xff]
        %v2574 = vld [vmem:[%s1103 + $0x12a] sm:$0xff]
        %v2575 = vld [vmem:[%s1103 + $0x13a] sm:$0xff]
        %v2576 = vld [vmem:[%s1103 + $0x142] sm:$0xff]
        %v2577 = vld [vmem:[%s1103 + $0x152] sm:$0xff]
        %v2578 = vld [vmem:[%s1103 + $0x15a] sm:$0xff]
        %v2579 = vld [vmem:[%s1103 + $0x16a] sm:$0xff]
        %v2580 = vld [vmem:[%s1103 + $0x172] sm:$0xff]
        %v2581 = vlaneseq
        %v2582 = vshrl.u32 %v2581, 7
        %v2583 = vsub.s32 1, %v2582
        %v2584 = vrot.slane %v434, %v2583
        %v2585 = vmul.f32 %v2549, %v2584
        %v2586 = vmul.f32 %v2550, %v2584
        %v2587 = vmul.f32 %v2551, %v2584
        %v2588 = vmul.f32 %v2552, %v2584
        %v2589 = vmul.f32 %v2553, %v2584
        %v2590 = vmul.f32 %v2554, %v2584
        %v2591 = vmul.f32 %v2555, %v2584
        %v2592 = vmul.f32 %v2556, %v2584
        %v2593 = vmul.f32 %v2557, %v2584
        %v2594 = vmul.f32 %v2558, %v2584
        %v2595 = vmul.f32 %v2559, %v2584
        %v2596 = vmul.f32 %v2560, %v2584
        %v2597 = vmul.f32 %v2561, %v2584
        %v2598 = vmul.f32 %v2562, %v2584
        %v2599 = vmul.f32 %v2563, %v2584
        %v2600 = vmul.f32 %v2564, %v2584
        %v2601 = vmul.f32 %v2565, %v2584
        %v2602 = vmul.f32 %v2566, %v2584
        %v2603 = vmul.f32 %v2567, %v2584
        %v2604 = vmul.f32 %v2568, %v2584
        %v2605 = vmul.f32 %v2569, %v2584
        %v2606 = vmul.f32 %v2570, %v2584
        %v2607 = vmul.f32 %v2571, %v2584
        %v2608 = vmul.f32 %v2572, %v2584
        %v2609 = vmul.f32 %v2573, %v2584
        %v2610 = vmul.f32 %v2574, %v2584
        %v2611 = vmul.f32 %v2575, %v2584
        %v2612 = vmul.f32 %v2576, %v2584
        %v2613 = vmul.f32 %v2577, %v2584
        %v2614 = vmul.f32 %v2578, %v2584
        %v2615 = vmul.f32 %v2579, %v2584
        %v2616 = vmul.f32 %v2580, %v2584
        %v2617 = vadd.f32 %v2517, %v2585
        %v2618 = vadd.f32 %v2518, %v2586
        %v2619 = vadd.f32 %v2519, %v2587
        %v2620 = vadd.f32 %v2520, %v2588
        %v2621 = vadd.f32 %v2521, %v2589
        %v2622 = vadd.f32 %v2522, %v2590
        %v2623 = vadd.f32 %v2523, %v2591
        %v2624 = vadd.f32 %v2524, %v2592
        %v2625 = vadd.f32 %v2525, %v2593
        %v2626 = vadd.f32 %v2526, %v2594
        %v2627 = vadd.f32 %v2527, %v2595
        %v2628 = vadd.f32 %v2528, %v2596
        %v2629 = vadd.f32 %v2529, %v2597
        %v2630 = vadd.f32 %v2530, %v2598
        %v2631 = vadd.f32 %v2531, %v2599
        %v2632 = vadd.f32 %v2532, %v2600
        %v2633 = vadd.f32 %v2533, %v2601
        %v2634 = vadd.f32 %v2534, %v2602
        %v2635 = vadd.f32 %v2535, %v2603
        %v2636 = vadd.f32 %v2536, %v2604
        %v2637 = vadd.f32 %v2537, %v2605
        %v2638 = vadd.f32 %v2538, %v2606
        %v2639 = vadd.f32 %v2539, %v2607
        %v2640 = vadd.f32 %v2540, %v2608
        %v2641 = vadd.f32 %v2541, %v2609
        %v2642 = vadd.f32 %v2542, %v2610
        %v2643 = vadd.f32 %v2543, %v2611
        %v2644 = vadd.f32 %v2544, %v2612
        %v2645 = vadd.f32 %v2545, %v2613
        %v2646 = vadd.f32 %v2546, %v2614
        %v2647 = vadd.f32 %v2547, %v2615
        %v2648 = vadd.f32 %v2548, %v2616
        %v2649 = vpack.c.bf16 %v2618, %v2617
        %v2650 = vpack.c.bf16 %v2620, %v2619
        %v2651 = vpack.c.bf16 %v2622, %v2621
        %v2652 = vpack.c.bf16 %v2624, %v2623
        %v2653 = vpack.c.bf16 %v2626, %v2625
        %v2654 = vpack.c.bf16 %v2628, %v2627
        %v2655 = vpack.c.bf16 %v2630, %v2629
        %v2656 = vpack.c.bf16 %v2632, %v2631
        %v2657 = vpack.c.bf16 %v2634, %v2633
        %v2658 = vpack.c.bf16 %v2636, %v2635
        %v2659 = vpack.c.bf16 %v2638, %v2637
        %v2660 = vpack.c.bf16 %v2640, %v2639
        %v2661 = vpack.c.bf16 %v2642, %v2641
        %v2662 = vpack.c.bf16 %v2644, %v2643
        %v2663 = vpack.c.bf16 %v2646, %v2645
        %v2664 = vpack.c.bf16 %v2648, %v2647
        %s2665 = scalar_lea.vmem %s295, 64
        %v2666 = vld [vmem:[%s2665] sm:$0xf]
        %v2667 = vld [vmem:[%s2665 + $0x4] sm:$0xf]
        %v2668 = vld [vmem:[%s2665 + $0x8] sm:$0xf]
        %v2669 = vld [vmem:[%s2665 + $0xc] sm:$0xf]
        %v2670 = vld [vmem:[%s2665 + $0x10] sm:$0xf]
        %v2671 = vld [vmem:[%s2665 + $0x14] sm:$0xf]
        %v2672 = vld [vmem:[%s2665 + $0x18] sm:$0xf]
        %v2673 = vld [vmem:[%s2665 + $0x1c] sm:$0xf]
        %v2674 = vld [vmem:[%s2665 + $0x20] sm:$0xf]
        %v2675 = vld [vmem:[%s2665 + $0x24] sm:$0xf]
        %v2676 = vld [vmem:[%s2665 + $0x28] sm:$0xf]
        %v2677 = vld [vmem:[%s2665 + $0x2c] sm:$0xf]
        %v2678 = vld [vmem:[%s2665 + $0x30] sm:$0xf]
        %v2679 = vld [vmem:[%s2665 + $0x34] sm:$0xf]
        %v2680 = vld [vmem:[%s2665 + $0x38] sm:$0xf]
        %v2681 = vld [vmem:[%s2665 + $0x3c] sm:$0xf]
        %v2698 = vunpack.c.l.b16 %v2666
        %v2699 = vunpack.c.l.b16 %v2667
        %v2700 = vunpack.c.l.b16 %v2668
        %v2701 = vunpack.c.l.b16 %v2669
        %v2702 = vunpack.c.l.b16 %v2670
        %v2703 = vunpack.c.l.b16 %v2671
        %v2704 = vunpack.c.l.b16 %v2672
        %v2705 = vunpack.c.l.b16 %v2673
        %v2706 = vunpack.c.l.b16 %v2674
        %v2707 = vunpack.c.l.b16 %v2675
        %v2708 = vunpack.c.l.b16 %v2676
        %v2709 = vunpack.c.l.b16 %v2677
        %v2710 = vunpack.c.l.b16 %v2678
        %v2711 = vunpack.c.l.b16 %v2679
        %v2712 = vunpack.c.l.b16 %v2680
        %v2713 = vunpack.c.l.b16 %v2681
        %v2714 = vpack.c.b16 %v2699, %v2698
        %v2715 = vpack.c.b16 %v2701, %v2700
        %v2716 = vpack.c.b16 %v2703, %v2702
        %v2717 = vpack.c.b16 %v2705, %v2704
        %v2718 = vpack.c.b16 %v2707, %v2706
        %v2719 = vpack.c.b16 %v2709, %v2708
        %v2720 = vpack.c.b16 %v2711, %v2710
        %v2721 = vpack.c.b16 %v2713, %v2712
        %2730 = vmatprep.subr.bf16.mxu0 0
        %2731 = vmatpush1.bf16.msra.mxu0 %v2714
        %2732 = vmatprep.subr.bf16.mxu0 0
        %2733 = vmatpush1.bf16.msra.mxu0 %v2715
        %2734 = vmatprep.subr.bf16.mxu0 0
        %2735 = vmatpush1.bf16.msra.mxu0 %v2716
        %2736 = vmatprep.subr.bf16.mxu0 0
        %2737 = vmatpush1.bf16.msra.mxu0 %v2717
        %2738 = vmatprep.subr.bf16.mxu0 0
        %2739 = vmatpush1.bf16.msra.mxu0 %v2718
        %2740 = vmatprep.subr.bf16.mxu0 0
        %2741 = vmatpush1.bf16.msra.mxu0 %v2719
        %2742 = vmatprep.subr.bf16.mxu0 0
        %2743 = vmatpush1.bf16.msra.mxu0 %v2720
        %2744 = vmatprep.subr.bf16.mxu0 0
        %2745 = vmatpush1.bf16.msra.mxu0 %v2721
        %2746 = vmatprep.subr.bf16.mxu0 0
        %2747 = vmatpush1.bf16.msra.mxu0 0
        %2748 = vmatprep.subr.bf16.mxu0 0
        %2749 = vmatpush1.bf16.msra.mxu0 0
        %2750 = vmatprep.subr.bf16.mxu0 0
        %2751 = vmatpush1.bf16.msra.mxu0 0
        %2752 = vmatprep.subr.bf16.mxu0 0
        %2753 = vmatpush1.bf16.msra.mxu0 0
        %2754 = vmatprep.subr.bf16.mxu0 0
        %2755 = vmatpush1.bf16.msra.mxu0 0
        %2756 = vmatprep.subr.bf16.mxu0 0
        %2757 = vmatpush1.bf16.msra.mxu0 0
        %2758 = vmatprep.subr.bf16.mxu0 0
        %2759 = vmatpush1.bf16.msra.mxu0 0
        %2760 = vmatprep.subr.bf16.mxu0 0
        %2761 = vmatpush1.bf16.msra.mxu0 0
        %2762 = vmatprep.mubr.bf16.mxu0 0
        %2763 = vmatmul.mubr.bf16.gmra.mrb[0].mxu0 %v2649
        %v2764 = vpop.f32.mrb[0].mxu0
        %v2765 = vadd.f32 0.0, %v2764
        %v2766 = vpop.f32.mrb[0].mxu0
        %v2767 = vpop.f32.mrb[0].mxu0
        %v2768 = vadd.f32 0.0, %v2767
        %v2769 = vpop.f32.mrb[0].mxu0
        %2770 = vmatprep.mubr.bf16.mxu0 0
        %2771 = vmatmul.mubr.bf16.gmra.mrb[0].mxu0 %v2650
        %v2772 = vpop.f32.mrb[0].mxu0
        %v2773 = vadd.f32 0.0, %v2772
        %v2774 = vpop.f32.mrb[0].mxu0
        %v2775 = vpop.f32.mrb[0].mxu0
        %v2776 = vadd.f32 0.0, %v2775
        %v2777 = vpop.f32.mrb[0].mxu0
        %2778 = vmatprep.mubr.bf16.mxu0 0
        %2779 = vmatmul.mubr.bf16.gmra.mrb[0].mxu0 %v2651
        %v2780 = vpop.f32.mrb[0].mxu0
        %v2781 = vadd.f32 0.0, %v2780
        %v2782 = vpop.f32.mrb[0].mxu0
        %v2783 = vpop.f32.mrb[0].mxu0
        %v2784 = vadd.f32 0.0, %v2783
        %v2785 = vpop.f32.mrb[0].mxu0
        %2786 = vmatprep.mubr.bf16.mxu0 0
        %2787 = vmatmul.mubr.bf16.gmra.mrb[0].mxu0 %v2652
        %v2788 = vpop.f32.mrb[0].mxu0
        %v2789 = vadd.f32 0.0, %v2788
        %v2790 = vpop.f32.mrb[0].mxu0
        %v2791 = vpop.f32.mrb[0].mxu0
        %v2792 = vadd.f32 0.0, %v2791
        %v2793 = vpop.f32.mrb[0].mxu0
        %2794 = vmatprep.mubr.bf16.mxu0 0
        %2795 = vmatmul.mubr.bf16.gmra.mrb[0].mxu0 %v2653
        %v2796 = vpop.f32.mrb[0].mxu0
        %v2797 = vadd.f32 0.0, %v2796
        %v2798 = vpop.f32.mrb[0].mxu0
        %v2799 = vpop.f32.mrb[0].mxu0
        %v2800 = vadd.f32 0.0, %v2799
        %v2801 = vpop.f32.mrb[0].mxu0
        %2802 = vmatprep.mubr.bf16.mxu0 0
        %2803 = vmatmul.mubr.bf16.gmra.mrb[0].mxu0 %v2654
        %v2804 = vpop.f32.mrb[0].mxu0
        %v2805 = vadd.f32 0.0, %v2804
        %v2806 = vpop.f32.mrb[0].mxu0
        %v2807 = vpop.f32.mrb[0].mxu0
        %v2808 = vadd.f32 0.0, %v2807
        %v2809 = vpop.f32.mrb[0].mxu0
        %2810 = vmatprep.mubr.bf16.mxu0 0
        %2811 = vmatmul.mubr.bf16.gmra.mrb[0].mxu0 %v2655
        %v2812 = vpop.f32.mrb[0].mxu0
        %v2813 = vadd.f32 0.0, %v2812
        %v2814 = vpop.f32.mrb[0].mxu0
        %v2815 = vpop.f32.mrb[0].mxu0
        %v2816 = vadd.f32 0.0, %v2815
        %v2817 = vpop.f32.mrb[0].mxu0
        %2818 = vmatprep.mubr.bf16.mxu0 0
        %2819 = vmatmul.mubr.bf16.gmra.mrb[0].mxu0 %v2656
        %v2820 = vpop.f32.mrb[0].mxu0
        %v2821 = vadd.f32 0.0, %v2820
        %v2822 = vpop.f32.mrb[0].mxu0
        %v2823 = vpop.f32.mrb[0].mxu0
        %v2824 = vadd.f32 0.0, %v2823
        %v2825 = vpop.f32.mrb[0].mxu0
        %2826 = vmatprep.mubr.bf16.mxu0 0
        %2827 = vmatmul.mubr.bf16.gmra.mrb[0].mxu0 %v2657
        %v2828 = vpop.f32.mrb[0].mxu0
        %v2829 = vadd.f32 0.0, %v2828
        %v2830 = vpop.f32.mrb[0].mxu0
        %v2831 = vpop.f32.mrb[0].mxu0
        %v2832 = vadd.f32 0.0, %v2831
        %v2833 = vpop.f32.mrb[0].mxu0
        %2834 = vmatprep.mubr.bf16.mxu0 0
        %2835 = vmatmul.mubr.bf16.gmra.mrb[0].mxu0 %v2658
        %v2836 = vpop.f32.mrb[0].mxu0
        %v2837 = vadd.f32 0.0, %v2836
        %v2838 = vpop.f32.mrb[0].mxu0
        %v2839 = vpop.f32.mrb[0].mxu0
        %v2840 = vadd.f32 0.0, %v2839
        %v2841 = vpop.f32.mrb[0].mxu0
        %2842 = vmatprep.mubr.bf16.mxu0 0
        %2843 = vmatmul.mubr.bf16.gmra.mrb[0].mxu0 %v2659
        %v2844 = vpop.f32.mrb[0].mxu0
        %v2845 = vadd.f32 0.0, %v2844
        %v2846 = vpop.f32.mrb[0].mxu0
        %v2847 = vpop.f32.mrb[0].mxu0
        %v2848 = vadd.f32 0.0, %v2847
        %v2849 = vpop.f32.mrb[0].mxu0
        %2850 = vmatprep.mubr.bf16.mxu0 0
        %2851 = vmatmul.mubr.bf16.gmra.mrb[0].mxu0 %v2660
        %v2852 = vpop.f32.mrb[0].mxu0
        %v2853 = vadd.f32 0.0, %v2852
        %v2854 = vpop.f32.mrb[0].mxu0
        %v2855 = vpop.f32.mrb[0].mxu0
        %v2856 = vadd.f32 0.0, %v2855
        %v2857 = vpop.f32.mrb[0].mxu0
        %2858 = vmatprep.mubr.bf16.mxu0 0
        %2859 = vmatmul.mubr.bf16.gmra.mrb[0].mxu0 %v2661
        %v2860 = vpop.f32.mrb[0].mxu0
        %v2861 = vadd.f32 0.0, %v2860
        %v2862 = vpop.f32.mrb[0].mxu0
        %v2863 = vpop.f32.mrb[0].mxu0
        %v2864 = vadd.f32 0.0, %v2863
        %v2865 = vpop.f32.mrb[0].mxu0
        %2866 = vmatprep.mubr.bf16.mxu0 0
        %2867 = vmatmul.mubr.bf16.gmra.mrb[0].mxu0 %v2662
        %v2868 = vpop.f32.mrb[0].mxu0
        %v2869 = vadd.f32 0.0, %v2868
        %v2870 = vpop.f32.mrb[0].mxu0
        %v2871 = vpop.f32.mrb[0].mxu0
        %v2872 = vadd.f32 0.0, %v2871
        %v2873 = vpop.f32.mrb[0].mxu0
        %2874 = vmatprep.mubr.bf16.mxu0 0
        %2875 = vmatmul.mubr.bf16.gmra.mrb[0].mxu0 %v2663
        %v2876 = vpop.f32.mrb[0].mxu0
        %v2877 = vadd.f32 0.0, %v2876
        %v2878 = vpop.f32.mrb[0].mxu0
        %v2879 = vpop.f32.mrb[0].mxu0
        %v2880 = vadd.f32 0.0, %v2879
        %v2881 = vpop.f32.mrb[0].mxu0
        %2882 = vmatprep.mubr.bf16.mxu0 0
        %2883 = vmatmul.mubr.bf16.gmra.mrb[0].mxu0 %v2664
        %v2884 = vpop.f32.mrb[0].mxu0
        %v2885 = vadd.f32 0.0, %v2884
        %v2886 = vpop.f32.mrb[0].mxu0
        %v2887 = vpop.f32.mrb[0].mxu0
        %v2888 = vadd.f32 0.0, %v2887
        %v2889 = vpop.f32.mrb[0].mxu0
        %2890 = vdwg.mxu0
        %v2891 = vlaneseq
        %v2892 = vshrl.u32 %v2891, 7
        %v2893 = vsub.s32 1, %v2892
        %v2894 = vrot.slane %v436, %v2893
        %v2895 = vmul.f32 %v2765, %v2894
        %v2896 = vmul.f32 %v2768, %v2894
        %v2897 = vmul.f32 %v2773, %v2894
        %v2898 = vmul.f32 %v2776, %v2894
        %v2899 = vmul.f32 %v2781, %v2894
        %v2900 = vmul.f32 %v2784, %v2894
        %v2901 = vmul.f32 %v2789, %v2894
        %v2902 = vmul.f32 %v2792, %v2894
        %v2903 = vmul.f32 %v2797, %v2894
        %v2904 = vmul.f32 %v2800, %v2894
        %v2905 = vmul.f32 %v2805, %v2894
        %v2906 = vmul.f32 %v2808, %v2894
        %v2907 = vmul.f32 %v2813, %v2894
        %v2908 = vmul.f32 %v2816, %v2894
        %v2909 = vmul.f32 %v2821, %v2894
        %v2910 = vmul.f32 %v2824, %v2894
        %v2911 = vmul.f32 %v2829, %v2894
        %v2912 = vmul.f32 %v2832, %v2894
        %v2913 = vmul.f32 %v2837, %v2894
        %v2914 = vmul.f32 %v2840, %v2894
        %v2915 = vmul.f32 %v2845, %v2894
        %v2916 = vmul.f32 %v2848, %v2894
        %v2917 = vmul.f32 %v2853, %v2894
        %v2918 = vmul.f32 %v2856, %v2894
        %v2919 = vmul.f32 %v2861, %v2894
        %v2920 = vmul.f32 %v2864, %v2894
        %v2921 = vmul.f32 %v2869, %v2894
        %v2922 = vmul.f32 %v2872, %v2894
        %v2923 = vmul.f32 %v2877, %v2894
        %v2924 = vmul.f32 %v2880, %v2894
        %v2925 = vmul.f32 %v2885, %v2894
        %v2926 = vmul.f32 %v2888, %v2894
        %v2927 = vlaneseq
        %v2928 = vshrl.u32 %v2927, 7
        %v2929 = vsub.s32 1, %v2928
        %v2930 = vrot.slane %v437, %v2929
        %v2931 = vadd.f32 %v2895, %v2930
        %v2932 = vadd.f32 %v2896, %v2930
        %v2933 = vadd.f32 %v2897, %v2930
        %v2934 = vadd.f32 %v2898, %v2930
        %v2935 = vadd.f32 %v2899, %v2930
        %v2936 = vadd.f32 %v2900, %v2930
        %v2937 = vadd.f32 %v2901, %v2930
        %v2938 = vadd.f32 %v2902, %v2930
        %v2939 = vadd.f32 %v2903, %v2930
        %v2940 = vadd.f32 %v2904, %v2930
        %v2941 = vadd.f32 %v2905, %v2930
        %v2942 = vadd.f32 %v2906, %v2930
        %v2943 = vadd.f32 %v2907, %v2930
        %v2944 = vadd.f32 %v2908, %v2930
        %v2945 = vadd.f32 %v2909, %v2930
        %v2946 = vadd.f32 %v2910, %v2930
        %v2947 = vadd.f32 %v2911, %v2930
        %v2948 = vadd.f32 %v2912, %v2930
        %v2949 = vadd.f32 %v2913, %v2930
        %v2950 = vadd.f32 %v2914, %v2930
        %v2951 = vadd.f32 %v2915, %v2930
        %v2952 = vadd.f32 %v2916, %v2930
        %v2953 = vadd.f32 %v2917, %v2930
        %v2954 = vadd.f32 %v2918, %v2930
        %v2955 = vadd.f32 %v2919, %v2930
        %v2956 = vadd.f32 %v2920, %v2930
        %v2957 = vadd.f32 %v2921, %v2930
        %v2958 = vadd.f32 %v2922, %v2930
        %v2959 = vadd.f32 %v2923, %v2930
        %v2960 = vadd.f32 %v2924, %v2930
        %v2961 = vadd.f32 %v2925, %v2930
        %v2962 = vadd.f32 %v2926, %v2930
        %v2963 = vmax.f32 %v2931, 0.0
        %v2964 = vmax.f32 %v2932, 0.0
        %v2965 = vmax.f32 %v2933, 0.0
        %v2966 = vmax.f32 %v2934, 0.0
        %v2967 = vmax.f32 %v2935, 0.0
        %v2968 = vmax.f32 %v2936, 0.0
        %v2969 = vmax.f32 %v2937, 0.0
        %v2970 = vmax.f32 %v2938, 0.0
        %v2971 = vmax.f32 %v2939, 0.0
        %v2972 = vmax.f32 %v2940, 0.0
        %v2973 = vmax.f32 %v2941, 0.0
        %v2974 = vmax.f32 %v2942, 0.0
        %v2975 = vmax.f32 %v2943, 0.0
        %v2976 = vmax.f32 %v2944, 0.0
        %v2977 = vmax.f32 %v2945, 0.0
        %v2978 = vmax.f32 %v2946, 0.0
        %v2979 = vmax.f32 %v2947, 0.0
        %v2980 = vmax.f32 %v2948, 0.0
        %v2981 = vmax.f32 %v2949, 0.0
        %v2982 = vmax.f32 %v2950, 0.0
        %v2983 = vmax.f32 %v2951, 0.0
        %v2984 = vmax.f32 %v2952, 0.0
        %v2985 = vmax.f32 %v2953, 0.0
        %v2986 = vmax.f32 %v2954, 0.0
        %v2987 = vmax.f32 %v2955, 0.0
        %v2988 = vmax.f32 %v2956, 0.0
        %v2989 = vmax.f32 %v2957, 0.0
        %v2990 = vmax.f32 %v2958, 0.0
        %v2991 = vmax.f32 %v2959, 0.0
        %v2992 = vmax.f32 %v2960, 0.0
        %v2993 = vmax.f32 %v2961, 0.0
        %v2994 = vmax.f32 %v2962, 0.0
        %2995 = vst [vmem:[%s502 + $0x1] sm:$0xff] %v2963
        %2996 = vst [vmem:[%s502 + $0x9] sm:$0xff] %v2964
        %2997 = vst [vmem:[%s502 + $0x19] sm:$0xff] %v2965
        %2998 = vst [vmem:[%s502 + $0x21] sm:$0xff] %v2966
        %2999 = vst [vmem:[%s502 + $0x31] sm:$0xff] %v2967
        %3000 = vst [vmem:[%s502 + $0x39] sm:$0xff] %v2968
        %3001 = vst [vmem:[%s502 + $0x49] sm:$0xff] %v2969
        %3002 = vst [vmem:[%s502 + $0x51] sm:$0xff] %v2970
        %3003 = vst [vmem:[%s502 + $0x61] sm:$0xff] %v2971
        %3004 = vst [vmem:[%s502 + $0x69] sm:$0xff] %v2972
        %3005 = vst [vmem:[%s502 + $0x79] sm:$0xff] %v2973
        %3006 = vst [vmem:[%s502 + $0x81] sm:$0xff] %v2974
        %3007 = vst [vmem:[%s502 + $0x91] sm:$0xff] %v2975
        %3008 = vst [vmem:[%s502 + $0x99] sm:$0xff] %v2976
        %3009 = vst [vmem:[%s502 + $0xa9] sm:$0xff] %v2977
        %3010 = vst [vmem:[%s502 + $0xb1] sm:$0xff] %v2978
        %3011 = vst [vmem:[%s502 + $0xc1] sm:$0xff] %v2979
        %3012 = vst [vmem:[%s502 + $0xc9] sm:$0xff] %v2980
        %3013 = vst [vmem:[%s502 + $0xd9] sm:$0xff] %v2981
        %3014 = vst [vmem:[%s502 + $0xe1] sm:$0xff] %v2982
        %3015 = vst [vmem:[%s502 + $0xf1] sm:$0xff] %v2983
        %3016 = vst [vmem:[%s502 + $0xf9] sm:$0xff] %v2984
        %3017 = vst [vmem:[%s502 + $0x109] sm:$0xff] %v2985
        %3018 = vst [vmem:[%s502 + $0x111] sm:$0xff] %v2986
        %3019 = vst [vmem:[%s502 + $0x121] sm:$0xff] %v2987
        %3020 = vst [vmem:[%s502 + $0x129] sm:$0xff] %v2988
        %3021 = vst [vmem:[%s502 + $0x139] sm:$0xff] %v2989
        %3022 = vst [vmem:[%s502 + $0x141] sm:$0xff] %v2990
        %3023 = vst [vmem:[%s502 + $0x151] sm:$0xff] %v2991
        %3024 = vst [vmem:[%s502 + $0x159] sm:$0xff] %v2992
        %3025 = vst [vmem:[%s502 + $0x169] sm:$0xff] %v2993
        %3026 = vst [vmem:[%s502 + $0x171] sm:$0xff] %v2994
        %v3027 = vld [vmem:[#allocation3] sm:$0xff]
        %v3028 = vld [vmem:[#allocation3 + $0x8] sm:$0xff]
        %v3029 = vld [vmem:[#allocation3 + $0x18] sm:$0xff]
        %v3030 = vld [vmem:[#allocation3 + $0x20] sm:$0xff]
        %v3031 = vld [vmem:[#allocation3 + $0x30] sm:$0xff]
        %v3032 = vld [vmem:[#allocation3 + $0x38] sm:$0xff]
        %v3033 = vld [vmem:[#allocation3 + $0x48] sm:$0xff]
        %v3034 = vld [vmem:[#allocation3 + $0x50] sm:$0xff]
        %v3035 = vld [vmem:[#allocation3 + $0x60] sm:$0xff]
        %v3036 = vld [vmem:[#allocation3 + $0x68] sm:$0xff]
        %v3037 = vld [vmem:[#allocation3 + $0x78] sm:$0xff]
        %v3038 = vld [vmem:[#allocation3 + $0x80] sm:$0xff]
        %v3039 = vld [vmem:[#allocation3 + $0x90] sm:$0xff]
        %v3040 = vld [vmem:[#allocation3 + $0x98] sm:$0xff]
        %v3041 = vld [vmem:[#allocation3 + $0xa8] sm:$0xff]
        %v3042 = vld [vmem:[#allocation3 + $0xb0] sm:$0xff]
        %v3043 = vld [vmem:[#allocation3 + $0xc0] sm:$0xff]
        %v3044 = vld [vmem:[#allocation3 + $0xc8] sm:$0xff]
        %v3045 = vld [vmem:[#allocation3 + $0xd8] sm:$0xff]
        %v3046 = vld [vmem:[#allocation3 + $0xe0] sm:$0xff]
        %v3047 = vld [vmem:[#allocation3 + $0xf0] sm:$0xff]
        %v3048 = vld [vmem:[#allocation3 + $0xf8] sm:$0xff]
        %v3049 = vld [vmem:[#allocation3 + $0x108] sm:$0xff]
        %v3050 = vld [vmem:[#allocation3 + $0x110] sm:$0xff]
        %v3051 = vld [vmem:[#allocation3 + $0x120] sm:$0xff]
        %v3052 = vld [vmem:[#allocation3 + $0x128] sm:$0xff]
        %v3053 = vld [vmem:[#allocation3 + $0x138] sm:$0xff]
        %v3054 = vld [vmem:[#allocation3 + $0x140] sm:$0xff]
        %v3055 = vld [vmem:[#allocation3 + $0x150] sm:$0xff]
        %v3056 = vld [vmem:[#allocation3 + $0x158] sm:$0xff]
        %v3057 = vld [vmem:[#allocation3 + $0x168] sm:$0xff]
        %v3058 = vld [vmem:[#allocation3 + $0x170] sm:$0xff]
        %v3059 = vlaneseq
        %v3060 = vshrl.u32 %v3059, 7
        %v3061 = vsub.s32 2, %v3060
        %v3062 = vrot.slane %v434, %v3061
        %v3063 = vmul.f32 %v3027, %v3062
        %v3064 = vmul.f32 %v3028, %v3062
        %v3065 = vmul.f32 %v3029, %v3062
        %v3066 = vmul.f32 %v3030, %v3062
        %v3067 = vmul.f32 %v3031, %v3062
        %v3068 = vmul.f32 %v3032, %v3062
        %v3069 = vmul.f32 %v3033, %v3062
        %v3070 = vmul.f32 %v3034, %v3062
        %v3071 = vmul.f32 %v3035, %v3062
        %v3072 = vmul.f32 %v3036, %v3062
        %v3073 = vmul.f32 %v3037, %v3062
        %v3074 = vmul.f32 %v3038, %v3062
        %v3075 = vmul.f32 %v3039, %v3062
        %v3076 = vmul.f32 %v3040, %v3062
        %v3077 = vmul.f32 %v3041, %v3062
        %v3078 = vmul.f32 %v3042, %v3062
        %v3079 = vmul.f32 %v3043, %v3062
        %v3080 = vmul.f32 %v3044, %v3062
        %v3081 = vmul.f32 %v3045, %v3062
        %v3082 = vmul.f32 %v3046, %v3062
        %v3083 = vmul.f32 %v3047, %v3062
        %v3084 = vmul.f32 %v3048, %v3062
        %v3085 = vmul.f32 %v3049, %v3062
        %v3086 = vmul.f32 %v3050, %v3062
        %v3087 = vmul.f32 %v3051, %v3062
        %v3088 = vmul.f32 %v3052, %v3062
        %v3089 = vmul.f32 %v3053, %v3062
        %v3090 = vmul.f32 %v3054, %v3062
        %v3091 = vmul.f32 %v3055, %v3062
        %v3092 = vmul.f32 %v3056, %v3062
        %v3093 = vmul.f32 %v3057, %v3062
        %v3094 = vmul.f32 %v3058, %v3062
        %v3095 = vld [vmem:[#allocation3 + $0x1] sm:$0xff]
        %v3096 = vld [vmem:[#allocation3 + $0x9] sm:$0xff]
        %v3097 = vld [vmem:[#allocation3 + $0x19] sm:$0xff]
        %v3098 = vld [vmem:[#allocation3 + $0x21] sm:$0xff]
        %v3099 = vld [vmem:[#allocation3 + $0x31] sm:$0xff]
        %v3100 = vld [vmem:[#allocation3 + $0x39] sm:$0xff]
        %v3101 = vld [vmem:[#allocation3 + $0x49] sm:$0xff]
        %v3102 = vld [vmem:[#allocation3 + $0x51] sm:$0xff]
        %v3103 = vld [vmem:[#allocation3 + $0x61] sm:$0xff]
        %v3104 = vld [vmem:[#allocation3 + $0x69] sm:$0xff]
        %v3105 = vld [vmem:[#allocation3 + $0x79] sm:$0xff]
        %v3106 = vld [vmem:[#allocation3 + $0x81] sm:$0xff]
        %v3107 = vld [vmem:[#allocation3 + $0x91] sm:$0xff]
        %v3108 = vld [vmem:[#allocation3 + $0x99] sm:$0xff]
        %v3109 = vld [vmem:[#allocation3 + $0xa9] sm:$0xff]
        %v3110 = vld [vmem:[#allocation3 + $0xb1] sm:$0xff]
        %v3111 = vld [vmem:[#allocation3 + $0xc1] sm:$0xff]
        %v3112 = vld [vmem:[#allocation3 + $0xc9] sm:$0xff]
        %v3113 = vld [vmem:[#allocation3 + $0xd9] sm:$0xff]
        %v3114 = vld [vmem:[#allocation3 + $0xe1] sm:$0xff]
        %v3115 = vld [vmem:[#allocation3 + $0xf1] sm:$0xff]
        %v3116 = vld [vmem:[#allocation3 + $0xf9] sm:$0xff]
        %v3117 = vld [vmem:[#allocation3 + $0x109] sm:$0xff]
        %v3118 = vld [vmem:[#allocation3 + $0x111] sm:$0xff]
        %v3119 = vld [vmem:[#allocation3 + $0x121] sm:$0xff]
        %v3120 = vld [vmem:[#allocation3 + $0x129] sm:$0xff]
        %v3121 = vld [vmem:[#allocation3 + $0x139] sm:$0xff]
        %v3122 = vld [vmem:[#allocation3 + $0x141] sm:$0xff]
        %v3123 = vld [vmem:[#allocation3 + $0x151] sm:$0xff]
        %v3124 = vld [vmem:[#allocation3 + $0x159] sm:$0xff]
        %v3125 = vld [vmem:[#allocation3 + $0x169] sm:$0xff]
        %v3126 = vld [vmem:[#allocation3 + $0x171] sm:$0xff]
        %v3127 = vlaneseq
        %v3128 = vshrl.u32 %v3127, 7
        %v3129 = vsub.s32 3, %v3128
        %v3130 = vrot.slane %v434, %v3129
        %v3131 = vmul.f32 %v3095, %v3130
        %v3132 = vmul.f32 %v3096, %v3130
        %v3133 = vmul.f32 %v3097, %v3130
        %v3134 = vmul.f32 %v3098, %v3130
        %v3135 = vmul.f32 %v3099, %v3130
        %v3136 = vmul.f32 %v3100, %v3130
        %v3137 = vmul.f32 %v3101, %v3130
        %v3138 = vmul.f32 %v3102, %v3130
        %v3139 = vmul.f32 %v3103, %v3130
        %v3140 = vmul.f32 %v3104, %v3130
        %v3141 = vmul.f32 %v3105, %v3130
        %v3142 = vmul.f32 %v3106, %v3130
        %v3143 = vmul.f32 %v3107, %v3130
        %v3144 = vmul.f32 %v3108, %v3130
        %v3145 = vmul.f32 %v3109, %v3130
        %v3146 = vmul.f32 %v3110, %v3130
        %v3147 = vmul.f32 %v3111, %v3130
        %v3148 = vmul.f32 %v3112, %v3130
        %v3149 = vmul.f32 %v3113, %v3130
        %v3150 = vmul.f32 %v3114, %v3130
        %v3151 = vmul.f32 %v3115, %v3130
        %v3152 = vmul.f32 %v3116, %v3130
        %v3153 = vmul.f32 %v3117, %v3130
        %v3154 = vmul.f32 %v3118, %v3130
        %v3155 = vmul.f32 %v3119, %v3130
        %v3156 = vmul.f32 %v3120, %v3130
        %v3157 = vmul.f32 %v3121, %v3130
        %v3158 = vmul.f32 %v3122, %v3130
        %v3159 = vmul.f32 %v3123, %v3130
        %v3160 = vmul.f32 %v3124, %v3130
        %v3161 = vmul.f32 %v3125, %v3130
        %v3162 = vmul.f32 %v3126, %v3130
        %v3163 = vadd.f32 %v3063, %v3131
        %v3164 = vadd.f32 %v3064, %v3132
        %v3165 = vadd.f32 %v3065, %v3133
        %v3166 = vadd.f32 %v3066, %v3134
        %v3167 = vadd.f32 %v3067, %v3135
        %v3168 = vadd.f32 %v3068, %v3136
        %v3169 = vadd.f32 %v3069, %v3137
        %v3170 = vadd.f32 %v3070, %v3138
        %v3171 = vadd.f32 %v3071, %v3139
        %v3172 = vadd.f32 %v3072, %v3140
        %v3173 = vadd.f32 %v3073, %v3141
        %v3174 = vadd.f32 %v3074, %v3142
        %v3175 = vadd.f32 %v3075, %v3143
        %v3176 = vadd.f32 %v3076, %v3144
        %v3177 = vadd.f32 %v3077, %v3145
        %v3178 = vadd.f32 %v3078, %v3146
        %v3179 = vadd.f32 %v3079, %v3147
        %v3180 = vadd.f32 %v3080, %v3148
        %v3181 = vadd.f32 %v3081, %v3149
        %v3182 = vadd.f32 %v3082, %v3150
        %v3183 = vadd.f32 %v3083, %v3151
        %v3184 = vadd.f32 %v3084, %v3152
        %v3185 = vadd.f32 %v3085, %v3153
        %v3186 = vadd.f32 %v3086, %v3154
        %v3187 = vadd.f32 %v3087, %v3155
        %v3188 = vadd.f32 %v3088, %v3156
        %v3189 = vadd.f32 %v3089, %v3157
        %v3190 = vadd.f32 %v3090, %v3158
        %v3191 = vadd.f32 %v3091, %v3159
        %v3192 = vadd.f32 %v3092, %v3160
        %v3193 = vadd.f32 %v3093, %v3161
        %v3194 = vadd.f32 %v3094, %v3162
        %v3195 = vld [vmem:[#allocation3 + $0x2] sm:$0xff]
        %v3196 = vld [vmem:[#allocation3 + $0xa] sm:$0xff]
        %v3197 = vld [vmem:[#allocation3 + $0x1a] sm:$0xff]
        %v3198 = vld [vmem:[#allocation3 + $0x22] sm:$0xff]
        %v3199 = vld [vmem:[#allocation3 + $0x32] sm:$0xff]
        %v3200 = vld [vmem:[#allocation3 + $0x3a] sm:$0xff]
        %v3201 = vld [vmem:[#allocation3 + $0x4a] sm:$0xff]
        %v3202 = vld [vmem:[#allocation3 + $0x52] sm:$0xff]
        %v3203 = vld [vmem:[#allocation3 + $0x62] sm:$0xff]
        %v3204 = vld [vmem:[#allocation3 + $0x6a] sm:$0xff]
        %v3205 = vld [vmem:[#allocation3 + $0x7a] sm:$0xff]
        %v3206 = vld [vmem:[#allocation3 + $0x82] sm:$0xff]
        %v3207 = vld [vmem:[#allocation3 + $0x92] sm:$0xff]
        %v3208 = vld [vmem:[#allocation3 + $0x9a] sm:$0xff]
        %v3209 = vld [vmem:[#allocation3 + $0xaa] sm:$0xff]
        %v3210 = vld [vmem:[#allocation3 + $0xb2] sm:$0xff]
        %v3211 = vld [vmem:[#allocation3 + $0xc2] sm:$0xff]
        %v3212 = vld [vmem:[#allocation3 + $0xca] sm:$0xff]
        %v3213 = vld [vmem:[#allocation3 + $0xda] sm:$0xff]
        %v3214 = vld [vmem:[#allocation3 + $0xe2] sm:$0xff]
        %v3215 = vld [vmem:[#allocation3 + $0xf2] sm:$0xff]
        %v3216 = vld [vmem:[#allocation3 + $0xfa] sm:$0xff]
        %v3217 = vld [vmem:[#allocation3 + $0x10a] sm:$0xff]
        %v3218 = vld [vmem:[#allocation3 + $0x112] sm:$0xff]
        %v3219 = vld [vmem:[#allocation3 + $0x122] sm:$0xff]
        %v3220 = vld [vmem:[#allocation3 + $0x12a] sm:$0xff]
        %v3221 = vld [vmem:[#allocation3 + $0x13a] sm:$0xff]
        %v3222 = vld [vmem:[#allocation3 + $0x142] sm:$0xff]
        %v3223 = vld [vmem:[#allocation3 + $0x152] sm:$0xff]
        %v3224 = vld [vmem:[#allocation3 + $0x15a] sm:$0xff]
        %v3225 = vld [vmem:[#allocation3 + $0x16a] sm:$0xff]
        %v3226 = vld [vmem:[#allocation3 + $0x172] sm:$0xff]
        %v3227 = vlaneseq
        %v3228 = vshrl.u32 %v3227, 7
        %v3229 = vsub.s32 4, %v3228
        %v3230 = vrot.slane %v434, %v3229
        %v3231 = vmul.f32 %v3195, %v3230
        %v3232 = vmul.f32 %v3196, %v3230
        %v3233 = vmul.f32 %v3197, %v3230
        %v3234 = vmul.f32 %v3198, %v3230
        %v3235 = vmul.f32 %v3199, %v3230
        %v3236 = vmul.f32 %v3200, %v3230
        %v3237 = vmul.f32 %v3201, %v3230
        %v3238 = vmul.f32 %v3202, %v3230
        %v3239 = vmul.f32 %v3203, %v3230
        %v3240 = vmul.f32 %v3204, %v3230
        %v3241 = vmul.f32 %v3205, %v3230
        %v3242 = vmul.f32 %v3206, %v3230
        %v3243 = vmul.f32 %v3207, %v3230
        %v3244 = vmul.f32 %v3208, %v3230
        %v3245 = vmul.f32 %v3209, %v3230
        %v3246 = vmul.f32 %v3210, %v3230
        %v3247 = vmul.f32 %v3211, %v3230
        %v3248 = vmul.f32 %v3212, %v3230
        %v3249 = vmul.f32 %v3213, %v3230
        %v3250 = vmul.f32 %v3214, %v3230
        %v3251 = vmul.f32 %v3215, %v3230
        %v3252 = vmul.f32 %v3216, %v3230
        %v3253 = vmul.f32 %v3217, %v3230
        %v3254 = vmul.f32 %v3218, %v3230
        %v3255 = vmul.f32 %v3219, %v3230
        %v3256 = vmul.f32 %v3220, %v3230
        %v3257 = vmul.f32 %v3221, %v3230
        %v3258 = vmul.f32 %v3222, %v3230
        %v3259 = vmul.f32 %v3223, %v3230
        %v3260 = vmul.f32 %v3224, %v3230
        %v3261 = vmul.f32 %v3225, %v3230
        %v3262 = vmul.f32 %v3226, %v3230
        %v3263 = vadd.f32 %v3163, %v3231
        %v3264 = vadd.f32 %v3164, %v3232
        %v3265 = vadd.f32 %v3165, %v3233
        %v3266 = vadd.f32 %v3166, %v3234
        %v3267 = vadd.f32 %v3167, %v3235
        %v3268 = vadd.f32 %v3168, %v3236
        %v3269 = vadd.f32 %v3169, %v3237
        %v3270 = vadd.f32 %v3170, %v3238
        %v3271 = vadd.f32 %v3171, %v3239
        %v3272 = vadd.f32 %v3172, %v3240
        %v3273 = vadd.f32 %v3173, %v3241
        %v3274 = vadd.f32 %v3174, %v3242
        %v3275 = vadd.f32 %v3175, %v3243
        %v3276 = vadd.f32 %v3176, %v3244
        %v3277 = vadd.f32 %v3177, %v3245
        %v3278 = vadd.f32 %v3178, %v3246
        %v3279 = vadd.f32 %v3179, %v3247
        %v3280 = vadd.f32 %v3180, %v3248
        %v3281 = vadd.f32 %v3181, %v3249
        %v3282 = vadd.f32 %v3182, %v3250
        %v3283 = vadd.f32 %v3183, %v3251
        %v3284 = vadd.f32 %v3184, %v3252
        %v3285 = vadd.f32 %v3185, %v3253
        %v3286 = vadd.f32 %v3186, %v3254
        %v3287 = vadd.f32 %v3187, %v3255
        %v3288 = vadd.f32 %v3188, %v3256
        %v3289 = vadd.f32 %v3189, %v3257
        %v3290 = vadd.f32 %v3190, %v3258
        %v3291 = vadd.f32 %v3191, %v3259
        %v3292 = vadd.f32 %v3192, %v3260
        %v3293 = vadd.f32 %v3193, %v3261
        %v3294 = vadd.f32 %v3194, %v3262
        %v3295 = vld [vmem:[%s502] sm:$0xff]
        %v3296 = vld [vmem:[%s502 + $0x8] sm:$0xff]
        %v3297 = vld [vmem:[%s502 + $0x18] sm:$0xff]
        %v3298 = vld [vmem:[%s502 + $0x20] sm:$0xff]
        %v3299 = vld [vmem:[%s502 + $0x30] sm:$0xff]
        %v3300 = vld [vmem:[%s502 + $0x38] sm:$0xff]
        %v3301 = vld [vmem:[%s502 + $0x48] sm:$0xff]
        %v3302 = vld [vmem:[%s502 + $0x50] sm:$0xff]
        %v3303 = vld [vmem:[%s502 + $0x60] sm:$0xff]
        %v3304 = vld [vmem:[%s502 + $0x68] sm:$0xff]
        %v3305 = vld [vmem:[%s502 + $0x78] sm:$0xff]
        %v3306 = vld [vmem:[%s502 + $0x80] sm:$0xff]
        %v3307 = vld [vmem:[%s502 + $0x90] sm:$0xff]
        %v3308 = vld [vmem:[%s502 + $0x98] sm:$0xff]
        %v3309 = vld [vmem:[%s502 + $0xa8] sm:$0xff]
        %v3310 = vld [vmem:[%s502 + $0xb0] sm:$0xff]
        %v3311 = vld [vmem:[%s502 + $0xc0] sm:$0xff]
        %v3312 = vld [vmem:[%s502 + $0xc8] sm:$0xff]
        %v3313 = vld [vmem:[%s502 + $0xd8] sm:$0xff]
        %v3314 = vld [vmem:[%s502 + $0xe0] sm:$0xff]
        %v3315 = vld [vmem:[%s502 + $0xf0] sm:$0xff]
        %v3316 = vld [vmem:[%s502 + $0xf8] sm:$0xff]
        %v3317 = vld [vmem:[%s502 + $0x108] sm:$0xff]
        %v3318 = vld [vmem:[%s502 + $0x110] sm:$0xff]
        %v3319 = vld [vmem:[%s502 + $0x120] sm:$0xff]
        %v3320 = vld [vmem:[%s502 + $0x128] sm:$0xff]
        %v3321 = vld [vmem:[%s502 + $0x138] sm:$0xff]
        %v3322 = vld [vmem:[%s502 + $0x140] sm:$0xff]
        %v3323 = vld [vmem:[%s502 + $0x150] sm:$0xff]
        %v3324 = vld [vmem:[%s502 + $0x158] sm:$0xff]
        %v3325 = vld [vmem:[%s502 + $0x168] sm:$0xff]
        %v3326 = vld [vmem:[%s502 + $0x170] sm:$0xff]
        %v3327 = vlaneseq
        %v3328 = vshrl.u32 %v3327, 7
        %v3329 = vsub.s32 5, %v3328
        %v3330 = vrot.slane %v434, %v3329
        %v3331 = vmul.f32 %v3295, %v3330
        %v3332 = vmul.f32 %v3296, %v3330
        %v3333 = vmul.f32 %v3297, %v3330
        %v3334 = vmul.f32 %v3298, %v3330
        %v3335 = vmul.f32 %v3299, %v3330
        %v3336 = vmul.f32 %v3300, %v3330
        %v3337 = vmul.f32 %v3301, %v3330
        %v3338 = vmul.f32 %v3302, %v3330
        %v3339 = vmul.f32 %v3303, %v3330
        %v3340 = vmul.f32 %v3304, %v3330
        %v3341 = vmul.f32 %v3305, %v3330
        %v3342 = vmul.f32 %v3306, %v3330
        %v3343 = vmul.f32 %v3307, %v3330
        %v3344 = vmul.f32 %v3308, %v3330
        %v3345 = vmul.f32 %v3309, %v3330
        %v3346 = vmul.f32 %v3310, %v3330
        %v3347 = vmul.f32 %v3311, %v3330
        %v3348 = vmul.f32 %v3312, %v3330
        %v3349 = vmul.f32 %v3313, %v3330
        %v3350 = vmul.f32 %v3314, %v3330
        %v3351 = vmul.f32 %v3315, %v3330
        %v3352 = vmul.f32 %v3316, %v3330
        %v3353 = vmul.f32 %v3317, %v3330
        %v3354 = vmul.f32 %v3318, %v3330
        %v3355 = vmul.f32 %v3319, %v3330
        %v3356 = vmul.f32 %v3320, %v3330
        %v3357 = vmul.f32 %v3321, %v3330
        %v3358 = vmul.f32 %v3322, %v3330
        %v3359 = vmul.f32 %v3323, %v3330
        %v3360 = vmul.f32 %v3324, %v3330
        %v3361 = vmul.f32 %v3325, %v3330
        %v3362 = vmul.f32 %v3326, %v3330
        %v3363 = vadd.f32 %v3263, %v3331
        %v3364 = vadd.f32 %v3264, %v3332
        %v3365 = vadd.f32 %v3265, %v3333
        %v3366 = vadd.f32 %v3266, %v3334
        %v3367 = vadd.f32 %v3267, %v3335
        %v3368 = vadd.f32 %v3268, %v3336
        %v3369 = vadd.f32 %v3269, %v3337
        %v3370 = vadd.f32 %v3270, %v3338
        %v3371 = vadd.f32 %v3271, %v3339
        %v3372 = vadd.f32 %v3272, %v3340
        %v3373 = vadd.f32 %v3273, %v3341
        %v3374 = vadd.f32 %v3274, %v3342
        %v3375 = vadd.f32 %v3275, %v3343
        %v3376 = vadd.f32 %v3276, %v3344
        %v3377 = vadd.f32 %v3277, %v3345
        %v3378 = vadd.f32 %v3278, %v3346
        %v3379 = vadd.f32 %v3279, %v3347
        %v3380 = vadd.f32 %v3280, %v3348
        %v3381 = vadd.f32 %v3281, %v3349
        %v3382 = vadd.f32 %v3282, %v3350
        %v3383 = vadd.f32 %v3283, %v3351
        %v3384 = vadd.f32 %v3284, %v3352
        %v3385 = vadd.f32 %v3285, %v3353
        %v3386 = vadd.f32 %v3286, %v3354
        %v3387 = vadd.f32 %v3287, %v3355
        %v3388 = vadd.f32 %v3288, %v3356
        %v3389 = vadd.f32 %v3289, %v3357
        %v3390 = vadd.f32 %v3290, %v3358
        %v3391 = vadd.f32 %v3291, %v3359
        %v3392 = vadd.f32 %v3292, %v3360
        %v3393 = vadd.f32 %v3293, %v3361
        %v3394 = vadd.f32 %v3294, %v3362
        %v3395 = vld [vmem:[%s502 + $0x1] sm:$0xff]
        %v3396 = vld [vmem:[%s502 + $0x9] sm:$0xff]
        %v3397 = vld [vmem:[%s502 + $0x19] sm:$0xff]
        %v3398 = vld [vmem:[%s502 + $0x21] sm:$0xff]
        %v3399 = vld [vmem:[%s502 + $0x31] sm:$0xff]
        %v3400 = vld [vmem:[%s502 + $0x39] sm:$0xff]
        %v3401 = vld [vmem:[%s502 + $0x49] sm:$0xff]
        %v3402 = vld [vmem:[%s502 + $0x51] sm:$0xff]
        %v3403 = vld [vmem:[%s502 + $0x61] sm:$0xff]
        %v3404 = vld [vmem:[%s502 + $0x69] sm:$0xff]
        %v3405 = vld [vmem:[%s502 + $0x79] sm:$0xff]
        %v3406 = vld [vmem:[%s502 + $0x81] sm:$0xff]
        %v3407 = vld [vmem:[%s502 + $0x91] sm:$0xff]
        %v3408 = vld [vmem:[%s502 + $0x99] sm:$0xff]
        %v3409 = vld [vmem:[%s502 + $0xa9] sm:$0xff]
        %v3410 = vld [vmem:[%s502 + $0xb1] sm:$0xff]
        %v3411 = vld [vmem:[%s502 + $0xc1] sm:$0xff]
        %v3412 = vld [vmem:[%s502 + $0xc9] sm:$0xff]
        %v3413 = vld [vmem:[%s502 + $0xd9] sm:$0xff]
        %v3414 = vld [vmem:[%s502 + $0xe1] sm:$0xff]
        %v3415 = vld [vmem:[%s502 + $0xf1] sm:$0xff]
        %v3416 = vld [vmem:[%s502 + $0xf9] sm:$0xff]
        %v3417 = vld [vmem:[%s502 + $0x109] sm:$0xff]
        %v3418 = vld [vmem:[%s502 + $0x111] sm:$0xff]
        %v3419 = vld [vmem:[%s502 + $0x121] sm:$0xff]
        %v3420 = vld [vmem:[%s502 + $0x129] sm:$0xff]
        %v3421 = vld [vmem:[%s502 + $0x139] sm:$0xff]
        %v3422 = vld [vmem:[%s502 + $0x141] sm:$0xff]
        %v3423 = vld [vmem:[%s502 + $0x151] sm:$0xff]
        %v3424 = vld [vmem:[%s502 + $0x159] sm:$0xff]
        %v3425 = vld [vmem:[%s502 + $0x169] sm:$0xff]
        %v3426 = vld [vmem:[%s502 + $0x171] sm:$0xff]
        %v3427 = vlaneseq
        %v3428 = vshrl.u32 %v3427, 7
        %v3429 = vsub.s32 6, %v3428
        %v3430 = vrot.slane %v434, %v3429
        %v3431 = vmul.f32 %v3395, %v3430
        %v3432 = vmul.f32 %v3396, %v3430
        %v3433 = vmul.f32 %v3397, %v3430
        %v3434 = vmul.f32 %v3398, %v3430
        %v3435 = vmul.f32 %v3399, %v3430
        %v3436 = vmul.f32 %v3400, %v3430
        %v3437 = vmul.f32 %v3401, %v3430
        %v3438 = vmul.f32 %v3402, %v3430
        %v3439 = vmul.f32 %v3403, %v3430
        %v3440 = vmul.f32 %v3404, %v3430
        %v3441 = vmul.f32 %v3405, %v3430
        %v3442 = vmul.f32 %v3406, %v3430
        %v3443 = vmul.f32 %v3407, %v3430
        %v3444 = vmul.f32 %v3408, %v3430
        %v3445 = vmul.f32 %v3409, %v3430
        %v3446 = vmul.f32 %v3410, %v3430
        %v3447 = vmul.f32 %v3411, %v3430
        %v3448 = vmul.f32 %v3412, %v3430
        %v3449 = vmul.f32 %v3413, %v3430
        %v3450 = vmul.f32 %v3414, %v3430
        %v3451 = vmul.f32 %v3415, %v3430
        %v3452 = vmul.f32 %v3416, %v3430
        %v3453 = vmul.f32 %v3417, %v3430
        %v3454 = vmul.f32 %v3418, %v3430
        %v3455 = vmul.f32 %v3419, %v3430
        %v3456 = vmul.f32 %v3420, %v3430
        %v3457 = vmul.f32 %v3421, %v3430
        %v3458 = vmul.f32 %v3422, %v3430
        %v3459 = vmul.f32 %v3423, %v3430
        %v3460 = vmul.f32 %v3424, %v3430
        %v3461 = vmul.f32 %v3425, %v3430
        %v3462 = vmul.f32 %v3426, %v3430
        %v3463 = vadd.f32 %v3363, %v3431
        %v3464 = vadd.f32 %v3364, %v3432
        %v3465 = vadd.f32 %v3365, %v3433
        %v3466 = vadd.f32 %v3366, %v3434
        %v3467 = vadd.f32 %v3367, %v3435
        %v3468 = vadd.f32 %v3368, %v3436
        %v3469 = vadd.f32 %v3369, %v3437
        %v3470 = vadd.f32 %v3370, %v3438
        %v3471 = vadd.f32 %v3371, %v3439
        %v3472 = vadd.f32 %v3372, %v3440
        %v3473 = vadd.f32 %v3373, %v3441
        %v3474 = vadd.f32 %v3374, %v3442
        %v3475 = vadd.f32 %v3375, %v3443
        %v3476 = vadd.f32 %v3376, %v3444
        %v3477 = vadd.f32 %v3377, %v3445
        %v3478 = vadd.f32 %v3378, %v3446
        %v3479 = vadd.f32 %v3379, %v3447
        %v3480 = vadd.f32 %v3380, %v3448
        %v3481 = vadd.f32 %v3381, %v3449
        %v3482 = vadd.f32 %v3382, %v3450
        %v3483 = vadd.f32 %v3383, %v3451
        %v3484 = vadd.f32 %v3384, %v3452
        %v3485 = vadd.f32 %v3385, %v3453
        %v3486 = vadd.f32 %v3386, %v3454
        %v3487 = vadd.f32 %v3387, %v3455
        %v3488 = vadd.f32 %v3388, %v3456
        %v3489 = vadd.f32 %v3389, %v3457
        %v3490 = vadd.f32 %v3390, %v3458
        %v3491 = vadd.f32 %v3391, %v3459
        %v3492 = vadd.f32 %v3392, %v3460
        %v3493 = vadd.f32 %v3393, %v3461
        %v3494 = vadd.f32 %v3394, %v3462
        %v3495 = vld [vmem:[%s502 + $0x2] sm:$0xff]
        %v3496 = vld [vmem:[%s502 + $0xa] sm:$0xff]
        %v3497 = vld [vmem:[%s502 + $0x1a] sm:$0xff]
        %v3498 = vld [vmem:[%s502 + $0x22] sm:$0xff]
        %v3499 = vld [vmem:[%s502 + $0x32] sm:$0xff]
        %v3500 = vld [vmem:[%s502 + $0x3a] sm:$0xff]
        %v3501 = vld [vmem:[%s502 + $0x4a] sm:$0xff]
        %v3502 = vld [vmem:[%s502 + $0x52] sm:$0xff]
        %v3503 = vld [vmem:[%s502 + $0x62] sm:$0xff]
        %v3504 = vld [vmem:[%s502 + $0x6a] sm:$0xff]
        %v3505 = vld [vmem:[%s502 + $0x7a] sm:$0xff]
        %v3506 = vld [vmem:[%s502 + $0x82] sm:$0xff]
        %v3507 = vld [vmem:[%s502 + $0x92] sm:$0xff]
        %v3508 = vld [vmem:[%s502 + $0x9a] sm:$0xff]
        %v3509 = vld [vmem:[%s502 + $0xaa] sm:$0xff]
        %v3510 = vld [vmem:[%s502 + $0xb2] sm:$0xff]
        %v3511 = vld [vmem:[%s502 + $0xc2] sm:$0xff]
        %v3512 = vld [vmem:[%s502 + $0xca] sm:$0xff]
        %v3513 = vld [vmem:[%s502 + $0xda] sm:$0xff]
        %v3514 = vld [vmem:[%s502 + $0xe2] sm:$0xff]
        %v3515 = vld [vmem:[%s502 + $0xf2] sm:$0xff]
        %v3516 = vld [vmem:[%s502 + $0xfa] sm:$0xff]
        %v3517 = vld [vmem:[%s502 + $0x10a] sm:$0xff]
        %v3518 = vld [vmem:[%s502 + $0x112] sm:$0xff]
        %v3519 = vld [vmem:[%s502 + $0x122] sm:$0xff]
        %v3520 = vld [vmem:[%s502 + $0x12a] sm:$0xff]
        %v3521 = vld [vmem:[%s502 + $0x13a] sm:$0xff]
        %v3522 = vld [vmem:[%s502 + $0x142] sm:$0xff]
        %v3523 = vld [vmem:[%s502 + $0x152] sm:$0xff]
        %v3524 = vld [vmem:[%s502 + $0x15a] sm:$0xff]
        %v3525 = vld [vmem:[%s502 + $0x16a] sm:$0xff]
        %v3526 = vld [vmem:[%s502 + $0x172] sm:$0xff]
        %v3527 = vlaneseq
        %v3528 = vshrl.u32 %v3527, 7
        %v3529 = vsub.s32 7, %v3528
        %v3530 = vrot.slane %v434, %v3529
        %v3531 = vmul.f32 %v3495, %v3530
        %v3532 = vmul.f32 %v3496, %v3530
        %v3533 = vmul.f32 %v3497, %v3530
        %v3534 = vmul.f32 %v3498, %v3530
        %v3535 = vmul.f32 %v3499, %v3530
        %v3536 = vmul.f32 %v3500, %v3530
        %v3537 = vmul.f32 %v3501, %v3530
        %v3538 = vmul.f32 %v3502, %v3530
        %v3539 = vmul.f32 %v3503, %v3530
        %v3540 = vmul.f32 %v3504, %v3530
        %v3541 = vmul.f32 %v3505, %v3530
        %v3542 = vmul.f32 %v3506, %v3530
        %v3543 = vmul.f32 %v3507, %v3530
        %v3544 = vmul.f32 %v3508, %v3530
        %v3545 = vmul.f32 %v3509, %v3530
        %v3546 = vmul.f32 %v3510, %v3530
        %v3547 = vmul.f32 %v3511, %v3530
        %v3548 = vmul.f32 %v3512, %v3530
        %v3549 = vmul.f32 %v3513, %v3530
        %v3550 = vmul.f32 %v3514, %v3530
        %v3551 = vmul.f32 %v3515, %v3530
        %v3552 = vmul.f32 %v3516, %v3530
        %v3553 = vmul.f32 %v3517, %v3530
        %v3554 = vmul.f32 %v3518, %v3530
        %v3555 = vmul.f32 %v3519, %v3530
        %v3556 = vmul.f32 %v3520, %v3530
        %v3557 = vmul.f32 %v3521, %v3530
        %v3558 = vmul.f32 %v3522, %v3530
        %v3559 = vmul.f32 %v3523, %v3530
        %v3560 = vmul.f32 %v3524, %v3530
        %v3561 = vmul.f32 %v3525, %v3530
        %v3562 = vmul.f32 %v3526, %v3530
        %v3563 = vadd.f32 %v3463, %v3531
        %v3564 = vadd.f32 %v3464, %v3532
        %v3565 = vadd.f32 %v3465, %v3533
        %v3566 = vadd.f32 %v3466, %v3534
        %v3567 = vadd.f32 %v3467, %v3535
        %v3568 = vadd.f32 %v3468, %v3536
        %v3569 = vadd.f32 %v3469, %v3537
        %v3570 = vadd.f32 %v3470, %v3538
        %v3571 = vadd.f32 %v3471, %v3539
        %v3572 = vadd.f32 %v3472, %v3540
        %v3573 = vadd.f32 %v3473, %v3541
        %v3574 = vadd.f32 %v3474, %v3542
        %v3575 = vadd.f32 %v3475, %v3543
        %v3576 = vadd.f32 %v3476, %v3544
        %v3577 = vadd.f32 %v3477, %v3545
        %v3578 = vadd.f32 %v3478, %v3546
        %v3579 = vadd.f32 %v3479, %v3547
        %v3580 = vadd.f32 %v3480, %v3548
        %v3581 = vadd.f32 %v3481, %v3549
        %v3582 = vadd.f32 %v3482, %v3550
        %v3583 = vadd.f32 %v3483, %v3551
        %v3584 = vadd.f32 %v3484, %v3552
        %v3585 = vadd.f32 %v3485, %v3553
        %v3586 = vadd.f32 %v3486, %v3554
        %v3587 = vadd.f32 %v3487, %v3555
        %v3588 = vadd.f32 %v3488, %v3556
        %v3589 = vadd.f32 %v3489, %v3557
        %v3590 = vadd.f32 %v3490, %v3558
        %v3591 = vadd.f32 %v3491, %v3559
        %v3592 = vadd.f32 %v3492, %v3560
        %v3593 = vadd.f32 %v3493, %v3561
        %v3594 = vadd.f32 %v3494, %v3562
        %v3595 = vld [vmem:[%s1103] sm:$0xff]
        %v3596 = vld [vmem:[%s1103 + $0x8] sm:$0xff]
        %v3597 = vld [vmem:[%s1103 + $0x18] sm:$0xff]
        %v3598 = vld [vmem:[%s1103 + $0x20] sm:$0xff]
        %v3599 = vld [vmem:[%s1103 + $0x30] sm:$0xff]
        %v3600 = vld [vmem:[%s1103 + $0x38] sm:$0xff]
        %v3601 = vld [vmem:[%s1103 + $0x48] sm:$0xff]
        %v3602 = vld [vmem:[%s1103 + $0x50] sm:$0xff]
        %v3603 = vld [vmem:[%s1103 + $0x60] sm:$0xff]
        %v3604 = vld [vmem:[%s1103 + $0x68] sm:$0xff]
        %v3605 = vld [vmem:[%s1103 + $0x78] sm:$0xff]
        %v3606 = vld [vmem:[%s1103 + $0x80] sm:$0xff]
        %v3607 = vld [vmem:[%s1103 + $0x90] sm:$0xff]
        %v3608 = vld [vmem:[%s1103 + $0x98] sm:$0xff]
        %v3609 = vld [vmem:[%s1103 + $0xa8] sm:$0xff]
        %v3610 = vld [vmem:[%s1103 + $0xb0] sm:$0xff]
        %v3611 = vld [vmem:[%s1103 + $0xc0] sm:$0xff]
        %v3612 = vld [vmem:[%s1103 + $0xc8] sm:$0xff]
        %v3613 = vld [vmem:[%s1103 + $0xd8] sm:$0xff]
        %v3614 = vld [vmem:[%s1103 + $0xe0] sm:$0xff]
        %v3615 = vld [vmem:[%s1103 + $0xf0] sm:$0xff]
        %v3616 = vld [vmem:[%s1103 + $0xf8] sm:$0xff]
        %v3617 = vld [vmem:[%s1103 + $0x108] sm:$0xff]
        %v3618 = vld [vmem:[%s1103 + $0x110] sm:$0xff]
        %v3619 = vld [vmem:[%s1103 + $0x120] sm:$0xff]
        %v3620 = vld [vmem:[%s1103 + $0x128] sm:$0xff]
        %v3621 = vld [vmem:[%s1103 + $0x138] sm:$0xff]
        %v3622 = vld [vmem:[%s1103 + $0x140] sm:$0xff]
        %v3623 = vld [vmem:[%s1103 + $0x150] sm:$0xff]
        %v3624 = vld [vmem:[%s1103 + $0x158] sm:$0xff]
        %v3625 = vld [vmem:[%s1103 + $0x168] sm:$0xff]
        %v3626 = vld [vmem:[%s1103 + $0x170] sm:$0xff]
        %v3627 = vlaneseq
        %v3628 = vshrl.u32 %v3627, 7
        %v3629 = vsub.s32 0, %v3628
        %v3630 = vrot.slane %v435, %v3629
        %v3631 = vmul.f32 %v3595, %v3630
        %v3632 = vmul.f32 %v3596, %v3630
        %v3633 = vmul.f32 %v3597, %v3630
        %v3634 = vmul.f32 %v3598, %v3630
        %v3635 = vmul.f32 %v3599, %v3630
        %v3636 = vmul.f32 %v3600, %v3630
        %v3637 = vmul.f32 %v3601, %v3630
        %v3638 = vmul.f32 %v3602, %v3630
        %v3639 = vmul.f32 %v3603, %v3630
        %v3640 = vmul.f32 %v3604, %v3630
        %v3641 = vmul.f32 %v3605, %v3630
        %v3642 = vmul.f32 %v3606, %v3630
        %v3643 = vmul.f32 %v3607, %v3630
        %v3644 = vmul.f32 %v3608, %v3630
        %v3645 = vmul.f32 %v3609, %v3630
        %v3646 = vmul.f32 %v3610, %v3630
        %v3647 = vmul.f32 %v3611, %v3630
        %v3648 = vmul.f32 %v3612, %v3630
        %v3649 = vmul.f32 %v3613, %v3630
        %v3650 = vmul.f32 %v3614, %v3630
        %v3651 = vmul.f32 %v3615, %v3630
        %v3652 = vmul.f32 %v3616, %v3630
        %v3653 = vmul.f32 %v3617, %v3630
        %v3654 = vmul.f32 %v3618, %v3630
        %v3655 = vmul.f32 %v3619, %v3630
        %v3656 = vmul.f32 %v3620, %v3630
        %v3657 = vmul.f32 %v3621, %v3630
        %v3658 = vmul.f32 %v3622, %v3630
        %v3659 = vmul.f32 %v3623, %v3630
        %v3660 = vmul.f32 %v3624, %v3630
        %v3661 = vmul.f32 %v3625, %v3630
        %v3662 = vmul.f32 %v3626, %v3630
        %v3663 = vadd.f32 %v3563, %v3631
        %v3664 = vadd.f32 %v3564, %v3632
        %v3665 = vadd.f32 %v3565, %v3633
        %v3666 = vadd.f32 %v3566, %v3634
        %v3667 = vadd.f32 %v3567, %v3635
        %v3668 = vadd.f32 %v3568, %v3636
        %v3669 = vadd.f32 %v3569, %v3637
        %v3670 = vadd.f32 %v3570, %v3638
        %v3671 = vadd.f32 %v3571, %v3639
        %v3672 = vadd.f32 %v3572, %v3640
        %v3673 = vadd.f32 %v3573, %v3641
        %v3674 = vadd.f32 %v3574, %v3642
        %v3675 = vadd.f32 %v3575, %v3643
        %v3676 = vadd.f32 %v3576, %v3644
        %v3677 = vadd.f32 %v3577, %v3645
        %v3678 = vadd.f32 %v3578, %v3646
        %v3679 = vadd.f32 %v3579, %v3647
        %v3680 = vadd.f32 %v3580, %v3648
        %v3681 = vadd.f32 %v3581, %v3649
        %v3682 = vadd.f32 %v3582, %v3650
        %v3683 = vadd.f32 %v3583, %v3651
        %v3684 = vadd.f32 %v3584, %v3652
        %v3685 = vadd.f32 %v3585, %v3653
        %v3686 = vadd.f32 %v3586, %v3654
        %v3687 = vadd.f32 %v3587, %v3655
        %v3688 = vadd.f32 %v3588, %v3656
        %v3689 = vadd.f32 %v3589, %v3657
        %v3690 = vadd.f32 %v3590, %v3658
        %v3691 = vadd.f32 %v3591, %v3659
        %v3692 = vadd.f32 %v3592, %v3660
        %v3693 = vadd.f32 %v3593, %v3661
        %v3694 = vadd.f32 %v3594, %v3662
        %v3695 = vld [vmem:[%s1103 + $0x1] sm:$0xff]
        %v3696 = vld [vmem:[%s1103 + $0x9] sm:$0xff]
        %v3697 = vld [vmem:[%s1103 + $0x19] sm:$0xff]
        %v3698 = vld [vmem:[%s1103 + $0x21] sm:$0xff]
        %v3699 = vld [vmem:[%s1103 + $0x31] sm:$0xff]
        %v3700 = vld [vmem:[%s1103 + $0x39] sm:$0xff]
        %v3701 = vld [vmem:[%s1103 + $0x49] sm:$0xff]
        %v3702 = vld [vmem:[%s1103 + $0x51] sm:$0xff]
        %v3703 = vld [vmem:[%s1103 + $0x61] sm:$0xff]
        %v3704 = vld [vmem:[%s1103 + $0x69] sm:$0xff]
        %v3705 = vld [vmem:[%s1103 + $0x79] sm:$0xff]
        %v3706 = vld [vmem:[%s1103 + $0x81] sm:$0xff]
        %v3707 = vld [vmem:[%s1103 + $0x91] sm:$0xff]
        %v3708 = vld [vmem:[%s1103 + $0x99] sm:$0xff]
        %v3709 = vld [vmem:[%s1103 + $0xa9] sm:$0xff]
        %v3710 = vld [vmem:[%s1103 + $0xb1] sm:$0xff]
        %v3711 = vld [vmem:[%s1103 + $0xc1] sm:$0xff]
        %v3712 = vld [vmem:[%s1103 + $0xc9] sm:$0xff]
        %v3713 = vld [vmem:[%s1103 + $0xd9] sm:$0xff]
        %v3714 = vld [vmem:[%s1103 + $0xe1] sm:$0xff]
        %v3715 = vld [vmem:[%s1103 + $0xf1] sm:$0xff]
        %v3716 = vld [vmem:[%s1103 + $0xf9] sm:$0xff]
        %v3717 = vld [vmem:[%s1103 + $0x109] sm:$0xff]
        %v3718 = vld [vmem:[%s1103 + $0x111] sm:$0xff]
        %v3719 = vld [vmem:[%s1103 + $0x121] sm:$0xff]
        %v3720 = vld [vmem:[%s1103 + $0x129] sm:$0xff]
        %v3721 = vld [vmem:[%s1103 + $0x139] sm:$0xff]
        %v3722 = vld [vmem:[%s1103 + $0x141] sm:$0xff]
        %v3723 = vld [vmem:[%s1103 + $0x151] sm:$0xff]
        %v3724 = vld [vmem:[%s1103 + $0x159] sm:$0xff]
        %v3725 = vld [vmem:[%s1103 + $0x169] sm:$0xff]
        %v3726 = vld [vmem:[%s1103 + $0x171] sm:$0xff]
        %v3727 = vlaneseq
        %v3728 = vshrl.u32 %v3727, 7
        %v3729 = vsub.s32 1, %v3728
        %v3730 = vrot.slane %v435, %v3729
        %v3731 = vmul.f32 %v3695, %v3730
        %v3732 = vmul.f32 %v3696, %v3730
        %v3733 = vmul.f32 %v3697, %v3730
        %v3734 = vmul.f32 %v3698, %v3730
        %v3735 = vmul.f32 %v3699, %v3730
        %v3736 = vmul.f32 %v3700, %v3730
        %v3737 = vmul.f32 %v3701, %v3730
        %v3738 = vmul.f32 %v3702, %v3730
        %v3739 = vmul.f32 %v3703, %v3730
        %v3740 = vmul.f32 %v3704, %v3730
        %v3741 = vmul.f32 %v3705, %v3730
        %v3742 = vmul.f32 %v3706, %v3730
        %v3743 = vmul.f32 %v3707, %v3730
        %v3744 = vmul.f32 %v3708, %v3730
        %v3745 = vmul.f32 %v3709, %v3730
        %v3746 = vmul.f32 %v3710, %v3730
        %v3747 = vmul.f32 %v3711, %v3730
        %v3748 = vmul.f32 %v3712, %v3730
        %v3749 = vmul.f32 %v3713, %v3730
        %v3750 = vmul.f32 %v3714, %v3730
        %v3751 = vmul.f32 %v3715, %v3730
        %v3752 = vmul.f32 %v3716, %v3730
        %v3753 = vmul.f32 %v3717, %v3730
        %v3754 = vmul.f32 %v3718, %v3730
        %v3755 = vmul.f32 %v3719, %v3730
        %v3756 = vmul.f32 %v3720, %v3730
        %v3757 = vmul.f32 %v3721, %v3730
        %v3758 = vmul.f32 %v3722, %v3730
        %v3759 = vmul.f32 %v3723, %v3730
        %v3760 = vmul.f32 %v3724, %v3730
        %v3761 = vmul.f32 %v3725, %v3730
        %v3762 = vmul.f32 %v3726, %v3730
        %v3763 = vadd.f32 %v3663, %v3731
        %v3764 = vadd.f32 %v3664, %v3732
        %v3765 = vadd.f32 %v3665, %v3733
        %v3766 = vadd.f32 %v3666, %v3734
        %v3767 = vadd.f32 %v3667, %v3735
        %v3768 = vadd.f32 %v3668, %v3736
        %v3769 = vadd.f32 %v3669, %v3737
        %v3770 = vadd.f32 %v3670, %v3738
        %v3771 = vadd.f32 %v3671, %v3739
        %v3772 = vadd.f32 %v3672, %v3740
        %v3773 = vadd.f32 %v3673, %v3741
        %v3774 = vadd.f32 %v3674, %v3742
        %v3775 = vadd.f32 %v3675, %v3743
        %v3776 = vadd.f32 %v3676, %v3744
        %v3777 = vadd.f32 %v3677, %v3745
        %v3778 = vadd.f32 %v3678, %v3746
        %v3779 = vadd.f32 %v3679, %v3747
        %v3780 = vadd.f32 %v3680, %v3748
        %v3781 = vadd.f32 %v3681, %v3749
        %v3782 = vadd.f32 %v3682, %v3750
        %v3783 = vadd.f32 %v3683, %v3751
        %v3784 = vadd.f32 %v3684, %v3752
        %v3785 = vadd.f32 %v3685, %v3753
        %v3786 = vadd.f32 %v3686, %v3754
        %v3787 = vadd.f32 %v3687, %v3755
        %v3788 = vadd.f32 %v3688, %v3756
        %v3789 = vadd.f32 %v3689, %v3757
        %v3790 = vadd.f32 %v3690, %v3758
        %v3791 = vadd.f32 %v3691, %v3759
        %v3792 = vadd.f32 %v3692, %v3760
        %v3793 = vadd.f32 %v3693, %v3761
        %v3794 = vadd.f32 %v3694, %v3762
        %v3795 = vld [vmem:[%s1103 + $0x2] sm:$0xff]
        %v3796 = vld [vmem:[%s1103 + $0xa] sm:$0xff]
        %v3797 = vld [vmem:[%s1103 + $0x1a] sm:$0xff]
        %v3798 = vld [vmem:[%s1103 + $0x22] sm:$0xff]
        %v3799 = vld [vmem:[%s1103 + $0x32] sm:$0xff]
        %v3800 = vld [vmem:[%s1103 + $0x3a] sm:$0xff]
        %v3801 = vld [vmem:[%s1103 + $0x4a] sm:$0xff]
        %v3802 = vld [vmem:[%s1103 + $0x52] sm:$0xff]
        %v3803 = vld [vmem:[%s1103 + $0x62] sm:$0xff]
        %v3804 = vld [vmem:[%s1103 + $0x6a] sm:$0xff]
        %v3805 = vld [vmem:[%s1103 + $0x7a] sm:$0xff]
        %v3806 = vld [vmem:[%s1103 + $0x82] sm:$0xff]
        %v3807 = vld [vmem:[%s1103 + $0x92] sm:$0xff]
        %v3808 = vld [vmem:[%s1103 + $0x9a] sm:$0xff]
        %v3809 = vld [vmem:[%s1103 + $0xaa] sm:$0xff]
        %v3810 = vld [vmem:[%s1103 + $0xb2] sm:$0xff]
        %v3811 = vld [vmem:[%s1103 + $0xc2] sm:$0xff]
        %v3812 = vld [vmem:[%s1103 + $0xca] sm:$0xff]
        %v3813 = vld [vmem:[%s1103 + $0xda] sm:$0xff]
        %v3814 = vld [vmem:[%s1103 + $0xe2] sm:$0xff]
        %v3815 = vld [vmem:[%s1103 + $0xf2] sm:$0xff]
        %v3816 = vld [vmem:[%s1103 + $0xfa] sm:$0xff]
        %v3817 = vld [vmem:[%s1103 + $0x10a] sm:$0xff]
        %v3818 = vld [vmem:[%s1103 + $0x112] sm:$0xff]
        %v3819 = vld [vmem:[%s1103 + $0x122] sm:$0xff]
        %v3820 = vld [vmem:[%s1103 + $0x12a] sm:$0xff]
        %v3821 = vld [vmem:[%s1103 + $0x13a] sm:$0xff]
        %v3822 = vld [vmem:[%s1103 + $0x142] sm:$0xff]
        %v3823 = vld [vmem:[%s1103 + $0x152] sm:$0xff]
        %v3824 = vld [vmem:[%s1103 + $0x15a] sm:$0xff]
        %v3825 = vld [vmem:[%s1103 + $0x16a] sm:$0xff]
        %v3826 = vld [vmem:[%s1103 + $0x172] sm:$0xff]
        %v3827 = vlaneseq
        %v3828 = vshrl.u32 %v3827, 7
        %v3829 = vsub.s32 2, %v3828
        %v3830 = vrot.slane %v435, %v3829
        %v3831 = vmul.f32 %v3795, %v3830
        %v3832 = vmul.f32 %v3796, %v3830
        %v3833 = vmul.f32 %v3797, %v3830
        %v3834 = vmul.f32 %v3798, %v3830
        %v3835 = vmul.f32 %v3799, %v3830
        %v3836 = vmul.f32 %v3800, %v3830
        %v3837 = vmul.f32 %v3801, %v3830
        %v3838 = vmul.f32 %v3802, %v3830
        %v3839 = vmul.f32 %v3803, %v3830
        %v3840 = vmul.f32 %v3804, %v3830
        %v3841 = vmul.f32 %v3805, %v3830
        %v3842 = vmul.f32 %v3806, %v3830
        %v3843 = vmul.f32 %v3807, %v3830
        %v3844 = vmul.f32 %v3808, %v3830
        %v3845 = vmul.f32 %v3809, %v3830
        %v3846 = vmul.f32 %v3810, %v3830
        %v3847 = vmul.f32 %v3811, %v3830
        %v3848 = vmul.f32 %v3812, %v3830
        %v3849 = vmul.f32 %v3813, %v3830
        %v3850 = vmul.f32 %v3814, %v3830
        %v3851 = vmul.f32 %v3815, %v3830
        %v3852 = vmul.f32 %v3816, %v3830
        %v3853 = vmul.f32 %v3817, %v3830
        %v3854 = vmul.f32 %v3818, %v3830
        %v3855 = vmul.f32 %v3819, %v3830
        %v3856 = vmul.f32 %v3820, %v3830
        %v3857 = vmul.f32 %v3821, %v3830
        %v3858 = vmul.f32 %v3822, %v3830
        %v3859 = vmul.f32 %v3823, %v3830
        %v3860 = vmul.f32 %v3824, %v3830
        %v3861 = vmul.f32 %v3825, %v3830
        %v3862 = vmul.f32 %v3826, %v3830
        %v3863 = vadd.f32 %v3763, %v3831
        %v3864 = vadd.f32 %v3764, %v3832
        %v3865 = vadd.f32 %v3765, %v3833
        %v3866 = vadd.f32 %v3766, %v3834
        %v3867 = vadd.f32 %v3767, %v3835
        %v3868 = vadd.f32 %v3768, %v3836
        %v3869 = vadd.f32 %v3769, %v3837
        %v3870 = vadd.f32 %v3770, %v3838
        %v3871 = vadd.f32 %v3771, %v3839
        %v3872 = vadd.f32 %v3772, %v3840
        %v3873 = vadd.f32 %v3773, %v3841
        %v3874 = vadd.f32 %v3774, %v3842
        %v3875 = vadd.f32 %v3775, %v3843
        %v3876 = vadd.f32 %v3776, %v3844
        %v3877 = vadd.f32 %v3777, %v3845
        %v3878 = vadd.f32 %v3778, %v3846
        %v3879 = vadd.f32 %v3779, %v3847
        %v3880 = vadd.f32 %v3780, %v3848
        %v3881 = vadd.f32 %v3781, %v3849
        %v3882 = vadd.f32 %v3782, %v3850
        %v3883 = vadd.f32 %v3783, %v3851
        %v3884 = vadd.f32 %v3784, %v3852
        %v3885 = vadd.f32 %v3785, %v3853
        %v3886 = vadd.f32 %v3786, %v3854
        %v3887 = vadd.f32 %v3787, %v3855
        %v3888 = vadd.f32 %v3788, %v3856
        %v3889 = vadd.f32 %v3789, %v3857
        %v3890 = vadd.f32 %v3790, %v3858
        %v3891 = vadd.f32 %v3791, %v3859
        %v3892 = vadd.f32 %v3792, %v3860
        %v3893 = vadd.f32 %v3793, %v3861
        %v3894 = vadd.f32 %v3794, %v3862
        %v3895 = vpack.c.bf16 %v3864, %v3863
        %v3896 = vpack.c.bf16 %v3866, %v3865
        %v3897 = vpack.c.bf16 %v3868, %v3867
        %v3898 = vpack.c.bf16 %v3870, %v3869
        %v3899 = vpack.c.bf16 %v3872, %v3871
        %v3900 = vpack.c.bf16 %v3874, %v3873
        %v3901 = vpack.c.bf16 %v3876, %v3875
        %v3902 = vpack.c.bf16 %v3878, %v3877
        %v3903 = vpack.c.bf16 %v3880, %v3879
        %v3904 = vpack.c.bf16 %v3882, %v3881
        %v3905 = vpack.c.bf16 %v3884, %v3883
        %v3906 = vpack.c.bf16 %v3886, %v3885
        %v3907 = vpack.c.bf16 %v3888, %v3887
        %v3908 = vpack.c.bf16 %v3890, %v3889
        %v3909 = vpack.c.bf16 %v3892, %v3891
        %v3910 = vpack.c.bf16 %v3894, %v3893
        %s3911 = scalar_lea.vmem %s295, 128
        %v3912 = vld [vmem:[%s3911] sm:$0xf]
        %v3913 = vld [vmem:[%s3911 + $0x4] sm:$0xf]
        %v3914 = vld [vmem:[%s3911 + $0x8] sm:$0xf]
        %v3915 = vld [vmem:[%s3911 + $0xc] sm:$0xf]
        %v3916 = vld [vmem:[%s3911 + $0x10] sm:$0xf]
        %v3917 = vld [vmem:[%s3911 + $0x14] sm:$0xf]
        %v3918 = vld [vmem:[%s3911 + $0x18] sm:$0xf]
        %v3919 = vld [vmem:[%s3911 + $0x1c] sm:$0xf]
        %v3920 = vld [vmem:[%s3911 + $0x20] sm:$0xf]
        %v3921 = vld [vmem:[%s3911 + $0x24] sm:$0xf]
        %v3922 = vld [vmem:[%s3911 + $0x28] sm:$0xf]
        %v3923 = vld [vmem:[%s3911 + $0x2c] sm:$0xf]
        %v3924 = vld [vmem:[%s3911 + $0x30] sm:$0xf]
        %v3925 = vld [vmem:[%s3911 + $0x34] sm:$0xf]
        %v3926 = vld [vmem:[%s3911 + $0x38] sm:$0xf]
        %v3927 = vld [vmem:[%s3911 + $0x3c] sm:$0xf]
        %v3944 = vunpack.c.l.b16 %v3912
        %v3945 = vunpack.c.l.b16 %v3913
        %v3946 = vunpack.c.l.b16 %v3914
        %v3947 = vunpack.c.l.b16 %v3915
        %v3948 = vunpack.c.l.b16 %v3916
        %v3949 = vunpack.c.l.b16 %v3917
        %v3950 = vunpack.c.l.b16 %v3918
        %v3951 = vunpack.c.l.b16 %v3919
        %v3952 = vunpack.c.l.b16 %v3920
        %v3953 = vunpack.c.l.b16 %v3921
        %v3954 = vunpack.c.l.b16 %v3922
        %v3955 = vunpack.c.l.b16 %v3923
        %v3956 = vunpack.c.l.b16 %v3924
        %v3957 = vunpack.c.l.b16 %v3925
        %v3958 = vunpack.c.l.b16 %v3926
        %v3959 = vunpack.c.l.b16 %v3927
        %v3960 = vpack.c.b16 %v3945, %v3944
        %v3961 = vpack.c.b16 %v3947, %v3946
        %v3962 = vpack.c.b16 %v3949, %v3948
        %v3963 = vpack.c.b16 %v3951, %v3950
        %v3964 = vpack.c.b16 %v3953, %v3952
        %v3965 = vpack.c.b16 %v3955, %v3954
        %v3966 = vpack.c.b16 %v3957, %v3956
        %v3967 = vpack.c.b16 %v3959, %v3958
        %3976 = vmatprep.subr.bf16.mxu0 0
        %3977 = vmatpush1.bf16.msra.mxu0 %v3960
        %3978 = vmatprep.subr.bf16.mxu0 0
        %3979 = vmatpush1.bf16.msra.mxu0 %v3961
        %3980 = vmatprep.subr.bf16.mxu0 0
        %3981 = vmatpush1.bf16.msra.mxu0 %v3962
        %3982 = vmatprep.subr.bf16.mxu0 0
        %3983 = vmatpush1.bf16.msra.mxu0 %v3963
        %3984 = vmatprep.subr.bf16.mxu0 0
        %3985 = vmatpush1.bf16.msra.mxu0 %v3964
        %3986 = vmatprep.subr.bf16.mxu0 0
        %3987 = vmatpush1.bf16.msra.mxu0 %v3965
        %3988 = vmatprep.subr.bf16.mxu0 0
        %3989 = vmatpush1.bf16.msra.mxu0 %v3966
        %3990 = vmatprep.subr.bf16.mxu0 0
        %3991 = vmatpush1.bf16.msra.mxu0 %v3967
        %3992 = vmatprep.subr.bf16.mxu0 0
        %3993 = vmatpush1.bf16.msra.mxu0 0
        %3994 = vmatprep.subr.bf16.mxu0 0
        %3995 = vmatpush1.bf16.msra.mxu0 0
        %3996 = vmatprep.subr.bf16.mxu0 0
        %3997 = vmatpush1.bf16.msra.mxu0 0
        %3998 = vmatprep.subr.bf16.mxu0 0
        %3999 = vmatpush1.bf16.msra.mxu0 0
        %4000 = vmatprep.subr.bf16.mxu0 0
        %4001 = vmatpush1.bf16.msra.mxu0 0
        %4002 = vmatprep.subr.bf16.mxu0 0
        %4003 = vmatpush1.bf16.msra.mxu0 0
        %4004 = vmatprep.subr.bf16.mxu0 0
        %4005 = vmatpush1.bf16.msra.mxu0 0
        %4006 = vmatprep.subr.bf16.mxu0 0
        %4007 = vmatpush1.bf16.msra.mxu0 0
        %4008 = vmatprep.mubr.bf16.mxu0 0
        %4009 = vmatmul.mubr.bf16.gmra.mrb[0].mxu0 %v3895
        %v4010 = vpop.f32.mrb[0].mxu0
        %v4011 = vadd.f32 0.0, %v4010
        %v4012 = vpop.f32.mrb[0].mxu0
        %v4013 = vpop.f32.mrb[0].mxu0
        %v4014 = vadd.f32 0.0, %v4013
        %v4015 = vpop.f32.mrb[0].mxu0
        %4016 = vmatprep.mubr.bf16.mxu0 0
        %4017 = vmatmul.mubr.bf16.gmra.mrb[0].mxu0 %v3896
        %v4018 = vpop.f32.mrb[0].mxu0
        %v4019 = vadd.f32 0.0, %v4018
        %v4020 = vpop.f32.mrb[0].mxu0
        %v4021 = vpop.f32.mrb[0].mxu0
        %v4022 = vadd.f32 0.0, %v4021
        %v4023 = vpop.f32.mrb[0].mxu0
        %4024 = vmatprep.mubr.bf16.mxu0 0
        %4025 = vmatmul.mubr.bf16.gmra.mrb[0].mxu0 %v3897
        %v4026 = vpop.f32.mrb[0].mxu0
        %v4027 = vadd.f32 0.0, %v4026
        %v4028 = vpop.f32.mrb[0].mxu0
        %v4029 = vpop.f32.mrb[0].mxu0
        %v4030 = vadd.f32 0.0, %v4029
        %v4031 = vpop.f32.mrb[0].mxu0
        %4032 = vmatprep.mubr.bf16.mxu0 0
        %4033 = vmatmul.mubr.bf16.gmra.mrb[0].mxu0 %v3898
        %v4034 = vpop.f32.mrb[0].mxu0
        %v4035 = vadd.f32 0.0, %v4034
        %v4036 = vpop.f32.mrb[0].mxu0
        %v4037 = vpop.f32.mrb[0].mxu0
        %v4038 = vadd.f32 0.0, %v4037
        %v4039 = vpop.f32.mrb[0].mxu0
        %4040 = vmatprep.mubr.bf16.mxu0 0
        %4041 = vmatmul.mubr.bf16.gmra.mrb[0].mxu0 %v3899
        %v4042 = vpop.f32.mrb[0].mxu0
        %v4043 = vadd.f32 0.0, %v4042
        %v4044 = vpop.f32.mrb[0].mxu0
        %v4045 = vpop.f32.mrb[0].mxu0
        %v4046 = vadd.f32 0.0, %v4045
        %v4047 = vpop.f32.mrb[0].mxu0
        %4048 = vmatprep.mubr.bf16.mxu0 0
        %4049 = vmatmul.mubr.bf16.gmra.mrb[0].mxu0 %v3900
        %v4050 = vpop.f32.mrb[0].mxu0
        %v4051 = vadd.f32 0.0, %v4050
        %v4052 = vpop.f32.mrb[0].mxu0
        %v4053 = vpop.f32.mrb[0].mxu0
        %v4054 = vadd.f32 0.0, %v4053
        %v4055 = vpop.f32.mrb[0].mxu0
        %4056 = vmatprep.mubr.bf16.mxu0 0
        %4057 = vmatmul.mubr.bf16.gmra.mrb[0].mxu0 %v3901
        %v4058 = vpop.f32.mrb[0].mxu0
        %v4059 = vadd.f32 0.0, %v4058
        %v4060 = vpop.f32.mrb[0].mxu0
        %v4061 = vpop.f32.mrb[0].mxu0
        %v4062 = vadd.f32 0.0, %v4061
        %v4063 = vpop.f32.mrb[0].mxu0
        %4064 = vmatprep.mubr.bf16.mxu0 0
        %4065 = vmatmul.mubr.bf16.gmra.mrb[0].mxu0 %v3902
        %v4066 = vpop.f32.mrb[0].mxu0
        %v4067 = vadd.f32 0.0, %v4066
        %v4068 = vpop.f32.mrb[0].mxu0
        %v4069 = vpop.f32.mrb[0].mxu0
        %v4070 = vadd.f32 0.0, %v4069
        %v4071 = vpop.f32.mrb[0].mxu0
        %4072 = vmatprep.mubr.bf16.mxu0 0
        %4073 = vmatmul.mubr.bf16.gmra.mrb[0].mxu0 %v3903
        %v4074 = vpop.f32.mrb[0].mxu0
        %v4075 = vadd.f32 0.0, %v4074
        %v4076 = vpop.f32.mrb[0].mxu0
        %v4077 = vpop.f32.mrb[0].mxu0
        %v4078 = vadd.f32 0.0, %v4077
        %v4079 = vpop.f32.mrb[0].mxu0
        %4080 = vmatprep.mubr.bf16.mxu0 0
        %4081 = vmatmul.mubr.bf16.gmra.mrb[0].mxu0 %v3904
        %v4082 = vpop.f32.mrb[0].mxu0
        %v4083 = vadd.f32 0.0, %v4082
        %v4084 = vpop.f32.mrb[0].mxu0
        %v4085 = vpop.f32.mrb[0].mxu0
        %v4086 = vadd.f32 0.0, %v4085
        %v4087 = vpop.f32.mrb[0].mxu0
        %4088 = vmatprep.mubr.bf16.mxu0 0
        %4089 = vmatmul.mubr.bf16.gmra.mrb[0].mxu0 %v3905
        %v4090 = vpop.f32.mrb[0].mxu0
        %v4091 = vadd.f32 0.0, %v4090
        %v4092 = vpop.f32.mrb[0].mxu0
        %v4093 = vpop.f32.mrb[0].mxu0
        %v4094 = vadd.f32 0.0, %v4093
        %v4095 = vpop.f32.mrb[0].mxu0
        %4096 = vmatprep.mubr.bf16.mxu0 0
        %4097 = vmatmul.mubr.bf16.gmra.mrb[0].mxu0 %v3906
        %v4098 = vpop.f32.mrb[0].mxu0
        %v4099 = vadd.f32 0.0, %v4098
        %v4100 = vpop.f32.mrb[0].mxu0
        %v4101 = vpop.f32.mrb[0].mxu0
        %v4102 = vadd.f32 0.0, %v4101
        %v4103 = vpop.f32.mrb[0].mxu0
        %4104 = vmatprep.mubr.bf16.mxu0 0
        %4105 = vmatmul.mubr.bf16.gmra.mrb[0].mxu0 %v3907
        %v4106 = vpop.f32.mrb[0].mxu0
        %v4107 = vadd.f32 0.0, %v4106
        %v4108 = vpop.f32.mrb[0].mxu0
        %v4109 = vpop.f32.mrb[0].mxu0
        %v4110 = vadd.f32 0.0, %v4109
        %v4111 = vpop.f32.mrb[0].mxu0
        %4112 = vmatprep.mubr.bf16.mxu0 0
        %4113 = vmatmul.mubr.bf16.gmra.mrb[0].mxu0 %v3908
        %v4114 = vpop.f32.mrb[0].mxu0
        %v4115 = vadd.f32 0.0, %v4114
        %v4116 = vpop.f32.mrb[0].mxu0
        %v4117 = vpop.f32.mrb[0].mxu0
        %v4118 = vadd.f32 0.0, %v4117
        %v4119 = vpop.f32.mrb[0].mxu0
        %4120 = vmatprep.mubr.bf16.mxu0 0
        %4121 = vmatmul.mubr.bf16.gmra.mrb[0].mxu0 %v3909
        %v4122 = vpop.f32.mrb[0].mxu0
        %v4123 = vadd.f32 0.0, %v4122
        %v4124 = vpop.f32.mrb[0].mxu0
        %v4125 = vpop.f32.mrb[0].mxu0
        %v4126 = vadd.f32 0.0, %v4125
        %v4127 = vpop.f32.mrb[0].mxu0
        %4128 = vmatprep.mubr.bf16.mxu0 0
        %4129 = vmatmul.mubr.bf16.gmra.mrb[0].mxu0 %v3910
        %v4130 = vpop.f32.mrb[0].mxu0
        %v4131 = vadd.f32 0.0, %v4130
        %v4132 = vpop.f32.mrb[0].mxu0
        %v4133 = vpop.f32.mrb[0].mxu0
        %v4134 = vadd.f32 0.0, %v4133
        %v4135 = vpop.f32.mrb[0].mxu0
        %4136 = vdwg.mxu0
        %v4137 = vlaneseq
        %v4138 = vshrl.u32 %v4137, 7
        %v4139 = vsub.s32 2, %v4138
        %v4140 = vrot.slane %v436, %v4139
        %v4141 = vmul.f32 %v4011, %v4140
        %v4142 = vmul.f32 %v4014, %v4140
        %v4143 = vmul.f32 %v4019, %v4140
        %v4144 = vmul.f32 %v4022, %v4140
        %v4145 = vmul.f32 %v4027, %v4140
        %v4146 = vmul.f32 %v4030, %v4140
        %v4147 = vmul.f32 %v4035, %v4140
        %v4148 = vmul.f32 %v4038, %v4140
        %v4149 = vmul.f32 %v4043, %v4140
        %v4150 = vmul.f32 %v4046, %v4140
        %v4151 = vmul.f32 %v4051, %v4140
        %v4152 = vmul.f32 %v4054, %v4140
        %v4153 = vmul.f32 %v4059, %v4140
        %v4154 = vmul.f32 %v4062, %v4140
        %v4155 = vmul.f32 %v4067, %v4140
        %v4156 = vmul.f32 %v4070, %v4140
        %v4157 = vmul.f32 %v4075, %v4140
        %v4158 = vmul.f32 %v4078, %v4140
        %v4159 = vmul.f32 %v4083, %v4140
        %v4160 = vmul.f32 %v4086, %v4140
        %v4161 = vmul.f32 %v4091, %v4140
        %v4162 = vmul.f32 %v4094, %v4140
        %v4163 = vmul.f32 %v4099, %v4140
        %v4164 = vmul.f32 %v4102, %v4140
        %v4165 = vmul.f32 %v4107, %v4140
        %v4166 = vmul.f32 %v4110, %v4140
        %v4167 = vmul.f32 %v4115, %v4140
        %v4168 = vmul.f32 %v4118, %v4140
        %v4169 = vmul.f32 %v4123, %v4140
        %v4170 = vmul.f32 %v4126, %v4140
        %v4171 = vmul.f32 %v4131, %v4140
        %v4172 = vmul.f32 %v4134, %v4140
        %v4173 = vlaneseq
        %v4174 = vshrl.u32 %v4173, 7
        %v4175 = vsub.s32 2, %v4174
        %v4176 = vrot.slane %v437, %v4175
        %v4177 = vadd.f32 %v4141, %v4176
        %v4178 = vadd.f32 %v4142, %v4176
        %v4179 = vadd.f32 %v4143, %v4176
        %v4180 = vadd.f32 %v4144, %v4176
        %v4181 = vadd.f32 %v4145, %v4176
        %v4182 = vadd.f32 %v4146, %v4176
        %v4183 = vadd.f32 %v4147, %v4176
        %v4184 = vadd.f32 %v4148, %v4176
        %v4185 = vadd.f32 %v4149, %v4176
        %v4186 = vadd.f32 %v4150, %v4176
        %v4187 = vadd.f32 %v4151, %v4176
        %v4188 = vadd.f32 %v4152, %v4176
        %v4189 = vadd.f32 %v4153, %v4176
        %v4190 = vadd.f32 %v4154, %v4176
        %v4191 = vadd.f32 %v4155, %v4176
        %v4192 = vadd.f32 %v4156, %v4176
        %v4193 = vadd.f32 %v4157, %v4176
        %v4194 = vadd.f32 %v4158, %v4176
        %v4195 = vadd.f32 %v4159, %v4176
        %v4196 = vadd.f32 %v4160, %v4176
        %v4197 = vadd.f32 %v4161, %v4176
        %v4198 = vadd.f32 %v4162, %v4176
        %v4199 = vadd.f32 %v4163, %v4176
        %v4200 = vadd.f32 %v4164, %v4176
        %v4201 = vadd.f32 %v4165, %v4176
        %v4202 = vadd.f32 %v4166, %v4176
        %v4203 = vadd.f32 %v4167, %v4176
        %v4204 = vadd.f32 %v4168, %v4176
        %v4205 = vadd.f32 %v4169, %v4176
        %v4206 = vadd.f32 %v4170, %v4176
        %v4207 = vadd.f32 %v4171, %v4176
        %v4208 = vadd.f32 %v4172, %v4176
        %v4209 = vadd.f32 %v4177, %v438
        %v4210 = vadd.f32 %v4178, %v439
        %v4211 = vadd.f32 %v4179, %v440
        %v4212 = vadd.f32 %v4180, %v441
        %v4213 = vadd.f32 %v4181, %v442
        %v4214 = vadd.f32 %v4182, %v443
        %v4215 = vadd.f32 %v4183, %v444
        %v4216 = vadd.f32 %v4184, %v445
        %v4217 = vadd.f32 %v4185, %v446
        %v4218 = vadd.f32 %v4186, %v447
        %v4219 = vadd.f32 %v4187, %v448
        %v4220 = vadd.f32 %v4188, %v449
        %v4221 = vadd.f32 %v4189, %v450
        %v4222 = vadd.f32 %v4190, %v451
        %v4223 = vadd.f32 %v4191, %v452
        %v4224 = vadd.f32 %v4192, %v453
        %v4225 = vadd.f32 %v4193, %v454
        %v4226 = vadd.f32 %v4194, %v455
        %v4227 = vadd.f32 %v4195, %v456
        %v4228 = vadd.f32 %v4196, %v457
        %v4229 = vadd.f32 %v4197, %v458
        %v4230 = vadd.f32 %v4198, %v459
        %v4231 = vadd.f32 %v4199, %v460
        %v4232 = vadd.f32 %v4200, %v461
        %v4233 = vadd.f32 %v4201, %v462
        %v4234 = vadd.f32 %v4202, %v463
        %v4235 = vadd.f32 %v4203, %v464
        %v4236 = vadd.f32 %v4204, %v465
        %v4237 = vadd.f32 %v4205, %v466
        %v4238 = vadd.f32 %v4206, %v467
        %v4239 = vadd.f32 %v4207, %v468
        %v4240 = vadd.f32 %v4208, %v469
        %4241 = vst [vmem:[#allocation2] sm:$0xff] %v4209
        %4242 = vst [vmem:[#allocation2 + $0x8] sm:$0xff] %v4210
        %4243 = vst [vmem:[#allocation2 + $0x10] sm:$0xff] %v4211
        %4244 = vst [vmem:[#allocation2 + $0x18] sm:$0xff] %v4212
        %4245 = vst [vmem:[#allocation2 + $0x20] sm:$0xff] %v4213
        %4246 = vst [vmem:[#allocation2 + $0x28] sm:$0xff] %v4214
        %4247 = vst [vmem:[#allocation2 + $0x30] sm:$0xff] %v4215
        %4248 = vst [vmem:[#allocation2 + $0x38] sm:$0xff] %v4216
        %4249 = vst [vmem:[#allocation2 + $0x40] sm:$0xff] %v4217
        %4250 = vst [vmem:[#allocation2 + $0x48] sm:$0xff] %v4218
        %4251 = vst [vmem:[#allocation2 + $0x50] sm:$0xff] %v4219
        %4252 = vst [vmem:[#allocation2 + $0x58] sm:$0xff] %v4220
        %4253 = vst [vmem:[#allocation2 + $0x60] sm:$0xff] %v4221
        %4254 = vst [vmem:[#allocation2 + $0x68] sm:$0xff] %v4222
        %4255 = vst [vmem:[#allocation2 + $0x70] sm:$0xff] %v4223
        %4256 = vst [vmem:[#allocation2 + $0x78] sm:$0xff] %v4224
        %4257 = vst [vmem:[#allocation2 + $0x80] sm:$0xff] %v4225
        %4258 = vst [vmem:[#allocation2 + $0x88] sm:$0xff] %v4226
        %4259 = vst [vmem:[#allocation2 + $0x90] sm:$0xff] %v4227
        %4260 = vst [vmem:[#allocation2 + $0x98] sm:$0xff] %v4228
        %4261 = vst [vmem:[#allocation2 + $0xa0] sm:$0xff] %v4229
        %4262 = vst [vmem:[#allocation2 + $0xa8] sm:$0xff] %v4230
        %4263 = vst [vmem:[#allocation2 + $0xb0] sm:$0xff] %v4231
        %4264 = vst [vmem:[#allocation2 + $0xb8] sm:$0xff] %v4232
        %4265 = vst [vmem:[#allocation2 + $0xc0] sm:$0xff] %v4233
        %4266 = vst [vmem:[#allocation2 + $0xc8] sm:$0xff] %v4234
        %4267 = vst [vmem:[#allocation2 + $0xd0] sm:$0xff] %v4235
        %4268 = vst [vmem:[#allocation2 + $0xd8] sm:$0xff] %v4236
        %4269 = vst [vmem:[#allocation2 + $0xe0] sm:$0xff] %v4237
        %4270 = vst [vmem:[#allocation2 + $0xe8] sm:$0xff] %v4238
        %4271 = vst [vmem:[#allocation2 + $0xf0] sm:$0xff] %v4239
        %4272 = vst [vmem:[#allocation2 + $0xf8] sm:$0xff] %v4240
        %p4273 = scmp.eq.s32.totalorder %s24, 15
        // Predicated region
        $region45: #{middle_block.1} parent=39 // pred_check
          %p4274 = pneg %p4273
        $region46: #{middle_block.1} parent=39 // pred_check_branch
          %4276 = sbr.rel (%p4274) target = $region48
        $region47: #{middle_block.1} parent=39 // pred_region
          %v4277 = vld [vmem:[#allocation2] sm:$0xff]
          %v4278 = vld [vmem:[#allocation2 + $0x8] sm:$0xff]
          %v4279 = vld [vmem:[#allocation2 + $0x10] sm:$0xff]
          %v4280 = vld [vmem:[#allocation2 + $0x18] sm:$0xff]
          %v4281 = vld [vmem:[#allocation2 + $0x20] sm:$0xff]
          %v4282 = vld [vmem:[#allocation2 + $0x28] sm:$0xff]
          %v4283 = vld [vmem:[#allocation2 + $0x30] sm:$0xff]
          %v4284 = vld [vmem:[#allocation2 + $0x38] sm:$0xff]
          %v4285 = vld [vmem:[#allocation2 + $0x40] sm:$0xff]
          %v4286 = vld [vmem:[#allocation2 + $0x48] sm:$0xff]
          %v4287 = vld [vmem:[#allocation2 + $0x50] sm:$0xff]
          %v4288 = vld [vmem:[#allocation2 + $0x58] sm:$0xff]
          %v4289 = vld [vmem:[#allocation2 + $0x60] sm:$0xff]
          %v4290 = vld [vmem:[#allocation2 + $0x68] sm:$0xff]
          %v4291 = vld [vmem:[#allocation2 + $0x70] sm:$0xff]
          %v4292 = vld [vmem:[#allocation2 + $0x78] sm:$0xff]
          %v4293 = vld [vmem:[#allocation2 + $0x80] sm:$0xff]
          %v4294 = vld [vmem:[#allocation2 + $0x88] sm:$0xff]
          %v4295 = vld [vmem:[#allocation2 + $0x90] sm:$0xff]
          %v4296 = vld [vmem:[#allocation2 + $0x98] sm:$0xff]
          %v4297 = vld [vmem:[#allocation2 + $0xa0] sm:$0xff]
          %v4298 = vld [vmem:[#allocation2 + $0xa8] sm:$0xff]
          %v4299 = vld [vmem:[#allocation2 + $0xb0] sm:$0xff]
          %v4300 = vld [vmem:[#allocation2 + $0xb8] sm:$0xff]
          %v4301 = vld [vmem:[#allocation2 + $0xc0] sm:$0xff]
          %v4302 = vld [vmem:[#allocation2 + $0xc8] sm:$0xff]
          %v4303 = vld [vmem:[#allocation2 + $0xd0] sm:$0xff]
          %v4304 = vld [vmem:[#allocation2 + $0xd8] sm:$0xff]
          %v4305 = vld [vmem:[#allocation2 + $0xe0] sm:$0xff]
          %v4306 = vld [vmem:[#allocation2 + $0xe8] sm:$0xff]
          %v4307 = vld [vmem:[#allocation2 + $0xf0] sm:$0xff]
          %v4308 = vld [vmem:[#allocation2 + $0xf8] sm:$0xff]
          %4309 = vst [vmem:[%s285] sm:$0xff] %v4277
          %4310 = vst [vmem:[%s285 + $0x8] sm:$0xff] %v4278
          %4311 = vst [vmem:[%s285 + $0x10] sm:$0xff] %v4279
          %4312 = vst [vmem:[%s285 + $0x18] sm:$0xff] %v4280
          %4313 = vst [vmem:[%s285 + $0x20] sm:$0xff] %v4281
          %4314 = vst [vmem:[%s285 + $0x28] sm:$0xff] %v4282
          %4315 = vst [vmem:[%s285 + $0x30] sm:$0xff] %v4283
          %4316 = vst [vmem:[%s285 + $0x38] sm:$0xff] %v4284
          %4317 = vst [vmem:[%s285 + $0x40] sm:$0xff] %v4285
          %4318 = vst [vmem:[%s285 + $0x48] sm:$0xff] %v4286
          %4319 = vst [vmem:[%s285 + $0x50] sm:$0xff] %v4287
          %4320 = vst [vmem:[%s285 + $0x58] sm:$0xff] %v4288
          %4321 = vst [vmem:[%s285 + $0x60] sm:$0xff] %v4289
          %4322 = vst [vmem:[%s285 + $0x68] sm:$0xff] %v4290
          %4323 = vst [vmem:[%s285 + $0x70] sm:$0xff] %v4291
          %4324 = vst [vmem:[%s285 + $0x78] sm:$0xff] %v4292
          %4325 = vst [vmem:[%s285 + $0x80] sm:$0xff] %v4293
          %4326 = vst [vmem:[%s285 + $0x88] sm:$0xff] %v4294
          %4327 = vst [vmem:[%s285 + $0x90] sm:$0xff] %v4295
          %4328 = vst [vmem:[%s285 + $0x98] sm:$0xff] %v4296
          %4329 = vst [vmem:[%s285 + $0xa0] sm:$0xff] %v4297
          %4330 = vst [vmem:[%s285 + $0xa8] sm:$0xff] %v4298
          %4331 = vst [vmem:[%s285 + $0xb0] sm:$0xff] %v4299
          %4332 = vst [vmem:[%s285 + $0xb8] sm:$0xff] %v4300
          %4333 = vst [vmem:[%s285 + $0xc0] sm:$0xff] %v4301
          %4334 = vst [vmem:[%s285 + $0xc8] sm:$0xff] %v4302
          %4335 = vst [vmem:[%s285 + $0xd0] sm:$0xff] %v4303
          %4336 = vst [vmem:[%s285 + $0xd8] sm:$0xff] %v4304
          %4337 = vst [vmem:[%s285 + $0xe0] sm:$0xff] %v4305
          %4338 = vst [vmem:[%s285 + $0xe8] sm:$0xff] %v4306
          %4339 = vst [vmem:[%s285 + $0xf0] sm:$0xff] %v4307
          %4340 = vst [vmem:[%s285 + $0xf8] sm:$0xff] %v4308
        $region48: #{middle_block.1} parent=39 // pred_fallthru
          _
        %s4341 = sand.u32 %s169, 1
        %s4342 = scalar_lea.sflag [#allocation5], %s4341
        %s4343 = sand.u32 %s169, 1
        %s4344 = smul.addr %s4343, 256
        %s4345 = scalar_lea.vmem [#allocation4], %s4344
        // Predicated region
        $region49: #{middle_block.1} parent=39 // pred_check
          %p4346 = pneg %p179
        $region50: #{middle_block.1} parent=39 // pred_check_branch
          %4348 = sbr.rel (%p4346) target = $region52
        $region51: #{middle_block.1} parent=39 // pred_region
          %s4350 = ssub.s32 4096, 4096
          %4351 = vsyncadd %s4342, %s4350
          %s4352 = smul.addr %s23, 32
          %s4353 = smul.addr %s4352, 128
          %s4354 = scalar_lea.hbm %s5, %s4353
          %s4355 = sshll.u32 %s4345, 4
          %s4356 = int_to_ptr.vmem [resolvable:$true] %s4355
          %4361 = dma.vmem_to_hbm [thread:$0]  %s4356, 4096, %s4354, %s4342, 128, 128, 8
        $region52: #{middle_block.1} parent=39 // pred_fallthru
          _
      $region40: #{middle_block.1} parent=5 // pred_fallthru
        _
      %p4362 = scmp.le.s32.totalorder 2, %s14
      // Predicated region
      $region53: #{middle_block.1} parent=5 // pred_check
        %p4363 = pneg %p4362
      $region54: #{middle_block.1} parent=5 // pred_check_branch
        %4365 = sbr.rel (%p4363) target = $region56
      $region55: #{middle_block.1} parent=5 // pred_region
        %s4366 = ssub.s32 %s14, 2
        // Predicated region
        $region57: #{middle_block.1} parent=55 // pred_check
          %p4367 = pneg %p185
        $region58: #{middle_block.1} parent=55 // pred_check_branch
          %4369 = sbr.rel (%p4367) target = $region60
        $region59: #{middle_block.1} parent=55 // pred_region
          %s4370 = sand.u32 %s170, 1
          %s4371 = scalar_lea.sflag [#allocation5], %s4370
          %s4372 = sand.u32 %s170, 1
          %s4373 = smul.addr %s4372, 256
          %s4374 = scalar_lea.vmem [#allocation4], %s4373
          %4375 = dma.done %s4371, 4096
        $region60: #{middle_block.1} parent=55 // pred_fallthru
          _
      $region56: #{middle_block.1} parent=5 // pred_fallthru
        _
    $region6: #{middle_block.1} parent=1 // loop_footer
      %s18 = sadd.s32 1, %s14
    $region7: #{middle_block.1} parent=1 // loop_footer_branch
      %13 = sbr.rel target = $region3
    $region8: #{middle_block.1} parent=1 // loop_exit
      _
    %4376 = vsyncpa [#allocation5], 1
    %s4377 = scalar_lea.sflag [#allocation5], 1
    %4378 = vsyncpa %s4377, 1

</llo_original>
